<compile_context>
chip_gen: v7x
topology: tpu7x:2x2x1
jax: 0.10.0
libtpu: 0.0.40
codegen_flags: <defaults>
</compile_context>

<pallas_src>
import math
import functools

import jax
import jax.numpy as jnp
from jax.experimental import pallas as pl
from jax.experimental.pallas import tpu as pltpu

_LANE = 128  # classifier output padded to one full lane group


# ----------------------------- kernel helpers -----------------------------

def _layernorm(x, gamma, beta, eps=1e-5):
    # x: (L, E) f32; gamma/beta: (1, E) f32.  Matches nn.LayerNorm (biased var, eps=1e-5).
    mean = jnp.mean(x, axis=-1, keepdims=True)
    var = jnp.mean(jnp.square(x - mean), axis=-1, keepdims=True)
    return (x - mean) * jax.lax.rsqrt(var + eps) * gamma + beta


# ------------------------------- fused kernel ------------------------------

def transformer_kernel(x_ref, embw_ref, embb_ref, pe_ref,
                       wq_ref, bq_ref, wk_ref, bk_ref, wv_ref, bv_ref,
                       wo_ref, bo_ref, g1_ref, be1_ref,
                       w1_ref, b1_ref, w2_ref, b2_ref, g2_ref, be2_ref,
                       clsw_ref, clsb_ref,
                       o_ref, h_ref,
                       *, num_heads, seq_len):
    f32 = jnp.float32
    bf16 = jnp.bfloat16
    layer = pl.program_id(1)
    num_layers = pl.num_programs(1)
    E = embw_ref.shape[1]
    H = num_heads
    D = E // H
    L = seq_len

    def mm(a, b):
        # bf16 MXU operands, f32 accumulation.
        return jnp.dot(a.astype(bf16), b.astype(bf16), preferred_element_type=f32)

    # ---- linear embedding + positional encoding (first layer step only) ----
    @pl.when(layer == 0)
    def _():
        # The torch module adds pe[:x.size(0)] (shape (B,1,E)) to a (B,L,E) tensor, i.e.
        # PE is indexed by BATCH and broadcast over the sequence axis -- reproduced here.
        h_ref[...] = mm(x_ref[...], embw_ref[...]) + embb_ref[...] + pe_ref[...]

    h = h_ref[...]                                            # (L, E) f32

    # ---- multi-head self-attention ----
    q = mm(h, wq_ref[...]) + bq_ref[...]                      # (L, E); 1/sqrt(D) pre-folded
    k = mm(h, wk_ref[...]) + bk_ref[...]
    v = mm(h, wv_ref[...]) + bv_ref[...]

    def split_heads(t):                                       # (L, E) -> (H, L, D)
        return jnp.transpose(t.reshape(L, H, D), (1, 0, 2))

    q, k, v = split_heads(q), split_heads(k), split_heads(v)

    s = jnp.einsum('hqd,hkd->hqk', q.astype(bf16), k.astype(bf16),
                   preferred_element_type=f32)                # (H, L, L)
    s = s - jnp.max(s, axis=-1, keepdims=True)
    p = jnp.exp(s)
    o = jnp.einsum('hqk,hkd->hqd', p.astype(bf16), v.astype(bf16),
                   preferred_element_type=f32)                # (H, L, D)
    # normalize AFTER the PV matmul: (H,L,D) scale instead of (H,L,L)
    o = o * pl.reciprocal(jnp.sum(p, axis=-1, keepdims=True), approx=True)

    attn = jnp.transpose(o, (1, 0, 2)).reshape(L, E)          # merge heads -> (L, E)
    attn = mm(attn, wo_ref[...]) + bo_ref[...]                # out_proj
    # TODO(synk): nn.Dropout(0.1) is identity in eval mode; training dropout not modeled.
    h = _layernorm(h + attn, g1_ref[...], be1_ref[...])

    # ---- feed-forward (E -> exp*E -> E) ----
    ff = jnp.maximum(mm(h, w1_ref[...]) + b1_ref[...], 0.0)
    ff = mm(ff, w2_ref[...]) + b2_ref[...]
    h = _layernorm(h + ff, g2_ref[...], be2_ref[...])
    h_ref[...] = h

    # ---- mean-pool over sequence + classifier (last layer step only) ----
    @pl.when(layer == num_layers - 1)
    def _():
        pooled = jnp.mean(h, axis=0, keepdims=True)           # (1, E)
        o_ref[...] = mm(pooled, clsw_ref[...]) + clsb_ref[...]  # (1, 128) lane-dense


# ------------------------------- wrapper -----------------------------------

def transformer_forward(x, params, *, num_heads):
    B, C, L = x.shape
    E = params['emb_w'].shape[0]
    NC = params['cls_w'].shape[0]
    NL = len(params['layers'])
    H = num_heads
    D = E // H
    scale = 1.0 / math.sqrt(D)
    mxu = jnp.bfloat16

    # ---- trace-time layout / weight packing (plain JAX, outside the kernel) ----
    x_blc = jnp.transpose(x, (0, 2, 1)).astype(jnp.float32)           # (B, L, C)
    pe_b = params['pe'][:B].astype(jnp.float32)                       # (B, 1, E) batch-indexed PE

    emb_w_t = params['emb_w'].T.astype(mxu)                           # (C, E)
    emb_b = params['emb_b'].reshape(1, E).astype(jnp.float32)

    cls_w_pad = jnp.zeros((E, _LANE), jnp.float32)
    cls_w_pad = cls_w_pad.at[:, :NC].set(params['cls_w'].T).astype(mxu)   # (E, 128)
    cls_b_pad = jnp.zeros((1, _LANE), jnp.float32).at[:, :NC].set(
        params['cls_b'].reshape(1, NC))

    layers = params['layers']
    stk = lambda fn: jnp.stack([fn(lyr) for lyr in layers])
    wq = stk(lambda lyr: (lyr['wqkv'][:E] * scale).T).astype(mxu)     # (NL, E, E)
    wk = stk(lambda lyr: lyr['wqkv'][E:2 * E].T).astype(mxu)
    wv = stk(lambda lyr: lyr['wqkv'][2 * E:].T).astype(mxu)
    bq = stk(lambda lyr: lyr['bqkv'][:, :E] * scale)                  # (NL, 1, E) f32
    bk = stk(lambda lyr: lyr['bqkv'][:, E:2 * E])
    bv = stk(lambda lyr: lyr['bqkv'][:, 2 * E:])
    wo = stk(lambda lyr: lyr['wo'].T).astype(mxu)                     # (NL, E, E)
    bo = stk(lambda lyr: lyr['bo'])
    g1, be1 = stk(lambda lyr: lyr['g1']), stk(lambda lyr: lyr['be1'])
    w1 = stk(lambda lyr: lyr['w1'].T).astype(mxu)                     # (NL, E, hid)
    b1 = stk(lambda lyr: lyr['b1'])
    w2 = stk(lambda lyr: lyr['w2'].T).astype(mxu)                     # (NL, hid, E)
    b2 = stk(lambda lyr: lyr['b2'])
    g2, be2 = stk(lambda lyr: lyr['g2']), stk(lambda lyr: lyr['be2'])
    hid = w1.shape[-1]

    # ---- grid & BlockSpecs: batch is "parallel", layer is "arbitrary" ----
    const = lambda b, l: (0, 0)
    per_b = lambda b, l: (b, 0, 0)
    per_l = lambda b, l: (l, 0, 0)

    in_specs = [
        pl.BlockSpec((None, L, C), per_b),       # x        (B, L, C)
        pl.BlockSpec((C, E), const),             # emb_w
        pl.BlockSpec((1, E), const),             # emb_b
        pl.BlockSpec((None, 1, E), per_b),       # pe       (B, 1, E)
        pl.BlockSpec((None, E, E), per_l),       # wq
        pl.BlockSpec((None, 1, E), per_l),       # bq
        pl.BlockSpec((None, E, E), per_l),       # wk
        pl.BlockSpec((None, 1, E), per_l),       # bk
        pl.BlockSpec((None, E, E), per_l),       # wv
        pl.BlockSpec((None, 1, E), per_l),       # bv
        pl.BlockSpec((None, E, E), per_l),       # wo
        pl.BlockSpec((None, 1, E), per_l),       # bo
        pl.BlockSpec((None, 1, E), per_l),       # g1
        pl.BlockSpec((None, 1, E), per_l),       # be1
        pl.BlockSpec((None, E, hid), per_l),     # w1
        pl.BlockSpec((None, 1, hid), per_l),     # b1
        pl.BlockSpec((None, hid, E), per_l),     # w2
        pl.BlockSpec((None, 1, E), per_l),       # b2
        pl.BlockSpec((None, 1, E), per_l),       # g2
        pl.BlockSpec((None, 1, E), per_l),       # be2
        pl.BlockSpec((E, _LANE), const),         # cls_w (lane-padded)
        pl.BlockSpec((1, _LANE), const),         # cls_b (lane-padded)
    ]
    out_spec = pl.BlockSpec((None, 1, _LANE), per_b)

    # Explicit VMEM budget: double-buffered per-layer weights + resident activations,
    # rounded up generously; capped so it is valid on v7x (64 MiB physical VMEM).
    per_layer_bytes = (4 * E * E + 2 * E * hid) * 2 + (8 * E + 2 * hid) * 4
    resident_bytes = (L * C + L * E + H * L * L + (E + 2) * _LANE + 4 * E) * 4
    vmem_limit = int(min(max(8 * (2 * per_layer_bytes + resident_bytes),
                             32 * 1024 * 1024), 64 * 1024 * 1024))

    kernel = functools.partial(transformer_kernel, num_heads=H, seq_len=L)

    out = pl.pallas_call(
        kernel,
        out_shape=jax.ShapeDtypeStruct((B, 1, _LANE), jnp.float32),
        grid=(B, NL),
        in_specs=in_specs,
        out_specs=out_spec,
        scratch_shapes=[pltpu.VMEM((L, E), jnp.float32)],   # persistent activation
        compiler_params=pltpu.CompilerParams(
            dimension_semantics=("parallel", "arbitrary"),
            vmem_limit_bytes=vmem_limit),
    )(x_blc, emb_w_t, emb_b, pe_b,
      wq, bq, wk, bk, wv, bv, wo, bo, g1, be1,
      w1, b1, w2, b2, g2, be2, cls_w_pad, cls_b_pad)

    return out.reshape(B, _LANE)[:, :NC]


# ------------------------------- params ------------------------------------

def init_params(key, *, num_layers, signal_length, num_classes,
                input_channels, embed_size, expansion):
    def uni(k, shape, fan_in):
        bound = 1.0 / math.sqrt(fan_in)
        return jax.random.uniform(k, shape, jnp.float32, -bound, bound)

    keys = jax.random.split(key, 2 + num_layers)
    params = {}

    ks = jax.random.split(keys[0], 2)
    params['emb_w'] = uni(ks[0], (embed_size, input_channels), input_channels)
    params['emb_b'] = uni(ks[1], (1, embed_size), input_channels)

    ks = jax.random.split(keys[1], 2)
    params['cls_w'] = uni(ks[0], (num_classes, embed_size), embed_size)
    params['cls_b'] = uni(ks[1], (1, num_classes), embed_size)

    # sinusoidal positional-encoding buffer, shape (max_len, 1, E) as in the module
    position = jnp.arange(signal_length, dtype=jnp.float32)[:, None]
    div_term = jnp.exp(jnp.arange(0, embed_size, 2, dtype=jnp.float32)
                       * (-math.log(10000.0) / embed_size))
    pe = jnp.zeros((signal_length, embed_size), jnp.float32)
    pe = pe.at[:, 0::2].set(jnp.sin(position * div_term))
    pe = pe.at[:, 1::2].set(jnp.cos(position * div_term))
    params['pe'] = pe[:, None, :]

    hidden = expansion * embed_size
    layers = []
    for i in range(num_layers):
        lk = jax.random.split(keys[2 + i], 6)
        layers.append({
            'wqkv': uni(lk[0], (3 * embed_size, embed_size), embed_size),
            'bqkv': jnp.zeros((1, 3 * embed_size), jnp.float32),
            'wo':   uni(lk[1], (embed_size, embed_size), embed_size),
            'bo':   jnp.zeros((1, embed_size), jnp.float32),
            'g1':   jnp.ones((1, embed_size), jnp.float32),
            'be1':  jnp.zeros((1, embed_size), jnp.float32),
            'w1':   uni(lk[2], (hidden, embed_size), embed_size),
            'b1':   uni(lk[3], (1, hidden), embed_size),
            'w2':   uni(lk[4], (embed_size, hidden), hidden),
            'b2':   uni(lk[5], (1, embed_size), hidden),
            'g2':   jnp.ones((1, embed_size), jnp.float32),
            'be2':  jnp.zeros((1, embed_size), jnp.float32),
        })
    params['layers'] = layers
    return params


if __name__ == "__main__":
    key = jax.random.PRNGKey(0)
    B, C, L = 2, 4, 16                   # batch, input_channels, signal_length
    E, NH, EXP, NL, NC = 32, 4, 2, 2, 3  # embed, heads, expansion, layers, classes

    pkey, xkey = jax.random.split(key)
    params = init_params(pkey, num_layers=NL, signal_length=L, num_classes=NC,
                         input_channels=C, embed_size=E, expansion=EXP)
    x = jax.random.normal(xkey, (B, C, L), jnp.float32)

    fwd = jax.jit(functools.partial(transformer_forward, num_heads=NH))
    out = fwd(x, params)
    jax.block_until_ready(out)
    assert out.shape == (B, NC) and out.dtype == jnp.float32
    assert bool(jnp.all(jnp.isfinite(out)))
    print("KERNEL_OK")
</pallas_src>

<mosaic_0001>
module attributes {stable_mosaic.version = 11 : i64} {
  func.func @transformer_kernel(%arg0: i32, %arg1: i32, %arg2: memref<1x16x4xf32, #tpu.memory_space<vmem>>, %arg3: memref<4x32xbf16, #tpu.memory_space<vmem>>, %arg4: memref<1x32xf32, #tpu.memory_space<vmem>>, %arg5: memref<1x1x32xf32, #tpu.memory_space<vmem>>, %arg6: memref<1x32x32xbf16, #tpu.memory_space<vmem>>, %arg7: memref<1x1x32xf32, #tpu.memory_space<vmem>>, %arg8: memref<1x32x32xbf16, #tpu.memory_space<vmem>>, %arg9: memref<1x1x32xf32, #tpu.memory_space<vmem>>, %arg10: memref<1x32x32xbf16, #tpu.memory_space<vmem>>, %arg11: memref<1x1x32xf32, #tpu.memory_space<vmem>>, %arg12: memref<1x32x32xbf16, #tpu.memory_space<vmem>>, %arg13: memref<1x1x32xf32, #tpu.memory_space<vmem>>, %arg14: memref<1x1x32xf32, #tpu.memory_space<vmem>>, %arg15: memref<1x1x32xf32, #tpu.memory_space<vmem>>, %arg16: memref<1x32x64xbf16, #tpu.memory_space<vmem>>, %arg17: memref<1x1x64xf32, #tpu.memory_space<vmem>>, %arg18: memref<1x64x32xbf16, #tpu.memory_space<vmem>>, %arg19: memref<1x1x32xf32, #tpu.memory_space<vmem>>, %arg20: memref<1x1x32xf32, #tpu.memory_space<vmem>>, %arg21: memref<1x1x32xf32, #tpu.memory_space<vmem>>, %arg22: memref<32x128xbf16, #tpu.memory_space<vmem>>, %arg23: memref<1x128xf32, #tpu.memory_space<vmem>>, %arg24: memref<1x1x128xf32, #tpu.memory_space<vmem>>, %arg25: memref<16x32xf32, #tpu.memory_space<vmem>>) attributes {dimension_semantics = [#tpu.dimension_semantics<parallel>, #tpu.dimension_semantics<arbitrary>], iteration_bounds = array<i64: 2, 2>, scalar_prefetch = 0 : i64, scratch_operands = 1 : i64, tpu.core_type = #tpu.core_type<tc>, window_params = [{transform_indices = @transform_0, window_bounds = array<i64: 1, 16, 4>}, {pipeline_mode = #tpu.pipeline_mode<synchronous>, transform_indices = @transform_1, window_bounds = array<i64: 4, 32>}, {pipeline_mode = #tpu.pipeline_mode<synchronous>, transform_indices = @transform_2, window_bounds = array<i64: 1, 32>}, {transform_indices = @transform_3, window_bounds = array<i64: 1, 1, 32>}, {transform_indices = @transform_4, window_bounds = array<i64: 1, 32, 32>}, {transform_indices = @transform_5, window_bounds = array<i64: 1, 1, 32>}, {transform_indices = @transform_6, window_bounds = array<i64: 1, 32, 32>}, {transform_indices = @transform_7, window_bounds = array<i64: 1, 1, 32>}, {transform_indices = @transform_8, window_bounds = array<i64: 1, 32, 32>}, {transform_indices = @transform_9, window_bounds = array<i64: 1, 1, 32>}, {transform_indices = @transform_10, window_bounds = array<i64: 1, 32, 32>}, {transform_indices = @transform_11, window_bounds = array<i64: 1, 1, 32>}, {transform_indices = @transform_12, window_bounds = array<i64: 1, 1, 32>}, {transform_indices = @transform_13, window_bounds = array<i64: 1, 1, 32>}, {transform_indices = @transform_14, window_bounds = array<i64: 1, 32, 64>}, {transform_indices = @transform_15, window_bounds = array<i64: 1, 1, 64>}, {transform_indices = @transform_16, window_bounds = array<i64: 1, 64, 32>}, {transform_indices = @transform_17, window_bounds = array<i64: 1, 1, 32>}, {transform_indices = @transform_18, window_bounds = array<i64: 1, 1, 32>}, {transform_indices = @transform_19, window_bounds = array<i64: 1, 1, 32>}, {pipeline_mode = #tpu.pipeline_mode<synchronous>, transform_indices = @transform_20, window_bounds = array<i64: 32, 128>}, {pipeline_mode = #tpu.pipeline_mode<synchronous>, transform_indices = @transform_21, window_bounds = array<i64: 1, 128>}, {transform_indices = @transform_22, window_bounds = array<i64: 1, 1, 128>}]} {
    %c0_i32 = arith.constant 0 : i32
    %0 = arith.cmpi eq, %arg1, %c0_i32 : i32
    %1 = arith.extui %0 : i1 to i32
    %c0_i32_0 = arith.constant 0 : i32
    %2 = arith.cmpi ne, %1, %c0_i32_0 : i32
    scf.if %2 {
      %c0_73 = arith.constant 0 : index
      %c0_74 = arith.constant 0 : index
      %c0_75 = arith.constant 0 : index
      %136 = vector.load %arg2[%c0_73, %c0_74, %c0_75] : memref<1x16x4xf32, #tpu.memory_space<vmem>>, vector<1x16x4xf32>
      %137 = vector.shape_cast %136 : vector<1x16x4xf32> to vector<16x4xf32>
      %c0_76 = arith.constant 0 : index
      %c0_77 = arith.constant 0 : index
      %138 = vector.load %arg3[%c0_76, %c0_77] : memref<4x32xbf16, #tpu.memory_space<vmem>>, vector<4x32xbf16>
      %139 = arith.truncf %137 : vector<16x4xf32> to vector<16x4xbf16>
      %cst_78 = arith.constant dense<0.000000e+00> : vector<16x32xf32>
      %140 = tpu.matmul %139, %138, %cst_78 {dimension_numbers = #tpu.dot_dimension_numbers<[1], [0], [0], [1], [0, 0, 1, 1], [], []>} : vector<16x4xbf16>, vector<4x32xbf16>, vector<16x32xf32> -> vector<16x32xf32>
      %c0_79 = arith.constant 0 : index
      %c0_80 = arith.constant 0 : index
      %141 = vector.load %arg4[%c0_79, %c0_80] : memref<1x32xf32, #tpu.memory_space<vmem>>, vector<1x32xf32>
      %142 = vector.broadcast %141 : vector<1x32xf32> to vector<16x32xf32>
      %143 = arith.addf %140, %142 : vector<16x32xf32>
      %c0_81 = arith.constant 0 : index
      %c0_82 = arith.constant 0 : index
      %c0_83 = arith.constant 0 : index
      %144 = vector.load %arg5[%c0_81, %c0_82, %c0_83] : memref<1x1x32xf32, #tpu.memory_space<vmem>>, vector<1x1x32xf32>
      %145 = vector.shape_cast %144 : vector<1x1x32xf32> to vector<1x32xf32>
      %146 = vector.broadcast %145 : vector<1x32xf32> to vector<16x32xf32>
      %147 = arith.addf %143, %146 : vector<16x32xf32>
      %c0_84 = arith.constant 0 : index
      %c0_85 = arith.constant 0 : index
      %148 = vector.load %arg25[%c0_84, %c0_85] : memref<16x32xf32, #tpu.memory_space<vmem>>, vector<16x32xf32>
      tpu.vector_store %arg25[%c0_84, %c0_85], %147 {strides = array<i32>} : memref<16x32xf32, #tpu.memory_space<vmem>>, vector<16x32xf32>,
    } else {
    }
    %c0 = arith.constant 0 : index
    %c0_1 = arith.constant 0 : index
    %3 = vector.load %arg25[%c0, %c0_1] : memref<16x32xf32, #tpu.memory_space<vmem>>, vector<16x32xf32>
    %c0_2 = arith.constant 0 : index
    %c0_3 = arith.constant 0 : index
    %c0_4 = arith.constant 0 : index
    %4 = vector.load %arg6[%c0_2, %c0_3, %c0_4] : memref<1x32x32xbf16, #tpu.memory_space<vmem>>, vector<1x32x32xbf16>
    %5 = vector.shape_cast %4 : vector<1x32x32xbf16> to vector<32x32xbf16>
    %6 = arith.truncf %3 : vector<16x32xf32> to vector<16x32xbf16>
    %cst = arith.constant dense<0.000000e+00> : vector<16x32xf32>
    %7 = tpu.matmul %6, %5, %cst {dimension_numbers = #tpu.dot_dimension_numbers<[1], [0], [0], [1], [0, 0, 1, 1], [], []>} : vector<16x32xbf16>, vector<32x32xbf16>, vector<16x32xf32> -> vector<16x32xf32>
    %c0_5 = arith.constant 0 : index
    %c0_6 = arith.constant 0 : index
    %c0_7 = arith.constant 0 : index
    %8 = vector.load %arg7[%c0_5, %c0_6, %c0_7] : memref<1x1x32xf32, #tpu.memory_space<vmem>>, vector<1x1x32xf32>
    %9 = vector.shape_cast %8 : vector<1x1x32xf32> to vector<1x32xf32>
    %10 = vector.broadcast %9 : vector<1x32xf32> to vector<16x32xf32>
    %11 = arith.addf %7, %10 : vector<16x32xf32>
    %c0_8 = arith.constant 0 : index
    %c0_9 = arith.constant 0 : index
    %c0_10 = arith.constant 0 : index
    %12 = vector.load %arg8[%c0_8, %c0_9, %c0_10] : memref<1x32x32xbf16, #tpu.memory_space<vmem>>, vector<1x32x32xbf16>
    %13 = vector.shape_cast %12 : vector<1x32x32xbf16> to vector<32x32xbf16>
    %14 = arith.truncf %3 : vector<16x32xf32> to vector<16x32xbf16>
    %cst_11 = arith.constant dense<0.000000e+00> : vector<16x32xf32>
    %15 = tpu.matmul %14, %13, %cst_11 {dimension_numbers = #tpu.dot_dimension_numbers<[1], [0], [0], [1], [0, 0, 1, 1], [], []>} : vector<16x32xbf16>, vector<32x32xbf16>, vector<16x32xf32> -> vector<16x32xf32>
    %c0_12 = arith.constant 0 : index
    %c0_13 = arith.constant 0 : index
    %c0_14 = arith.constant 0 : index
    %16 = vector.load %arg9[%c0_12, %c0_13, %c0_14] : memref<1x1x32xf32, #tpu.memory_space<vmem>>, vector<1x1x32xf32>
    %17 = vector.shape_cast %16 : vector<1x1x32xf32> to vector<1x32xf32>
    %18 = vector.broadcast %17 : vector<1x32xf32> to vector<16x32xf32>
    %19 = arith.addf %15, %18 : vector<16x32xf32>
    %c0_15 = arith.constant 0 : index
    %c0_16 = arith.constant 0 : index
    %c0_17 = arith.constant 0 : index
    %20 = vector.load %arg10[%c0_15, %c0_16, %c0_17] : memref<1x32x32xbf16, #tpu.memory_space<vmem>>, vector<1x32x32xbf16>
    %21 = vector.shape_cast %20 : vector<1x32x32xbf16> to vector<32x32xbf16>
    %22 = arith.truncf %3 : vector<16x32xf32> to vector<16x32xbf16>
    %cst_18 = arith.constant dense<0.000000e+00> : vector<16x32xf32>
    %23 = tpu.matmul %22, %21, %cst_18 {dimension_numbers = #tpu.dot_dimension_numbers<[1], [0], [0], [1], [0, 0, 1, 1], [], []>} : vector<16x32xbf16>, vector<32x32xbf16>, vector<16x32xf32> -> vector<16x32xf32>
    %c0_19 = arith.constant 0 : index
    %c0_20 = arith.constant 0 : index
    %c0_21 = arith.constant 0 : index
    %24 = vector.load %arg11[%c0_19, %c0_20, %c0_21] : memref<1x1x32xf32, #tpu.memory_space<vmem>>, vector<1x1x32xf32>
    %25 = vector.shape_cast %24 : vector<1x1x32xf32> to vector<1x32xf32>
    %26 = vector.broadcast %25 : vector<1x32xf32> to vector<16x32xf32>
    %27 = arith.addf %23, %26 : vector<16x32xf32>
    %28 = vector.shape_cast %11 : vector<16x32xf32> to vector<16x4x8xf32>
    %29 = tpu.transpose %28, [1, 0, 2] : vector<16x4x8xf32> -> vector<4x16x8xf32>
    %30 = vector.shape_cast %19 : vector<16x32xf32> to vector<16x4x8xf32>
    %31 = tpu.transpose %30, [1, 0, 2] : vector<16x4x8xf32> -> vector<4x16x8xf32>
    %32 = vector.shape_cast %27 : vector<16x32xf32> to vector<16x4x8xf32>
    %33 = tpu.transpose %32, [1, 0, 2] : vector<16x4x8xf32> -> vector<4x16x8xf32>
    %34 = arith.truncf %29 : vector<4x16x8xf32> to vector<4x16x8xbf16>
    %35 = arith.truncf %31 : vector<4x16x8xf32> to vector<4x16x8xbf16>
    "tpu.trace_start"() <{level = 10 : i32, message = "hqd,hkd->hqk"}> : () -> ()
    %cst_22 = arith.constant dense<0.000000e+00> : vector<4x16x16xf32>
    %36 = tpu.matmul %34, %35, %cst_22 {dimension_numbers = #tpu.dot_dimension_numbers<[2], [2], [1], [1], [0, 0, 0, 1, 1, 1], [0], [0]>} : vector<4x16x8xbf16>, vector<4x16x8xbf16>, vector<4x16x16xf32> -> vector<4x16x16xf32>
    "tpu.trace_stop"() : () -> ()
    %cst_23 = arith.constant dense<0xFF800000> : vector<4x16xf32>
    %37 = vector.multi_reduction <maximumf>, %36, %cst_23 [2] : vector<4x16x16xf32> to vector<4x16xf32>
    %38 = vector.shape_cast %37 : vector<4x16xf32> to vector<4x16x1xf32>
    %39 = vector.broadcast %38 : vector<4x16x1xf32> to vector<4x16x16xf32>
    %40 = arith.subf %36, %39 : vector<4x16x16xf32>
    %41 = math.exp %40 : vector<4x16x16xf32>
    %42 = arith.truncf %41 : vector<4x16x16xf32> to vector<4x16x16xbf16>
    %43 = arith.truncf %33 : vector<4x16x8xf32> to vector<4x16x8xbf16>
    "tpu.trace_start"() <{level = 10 : i32, message = "hqk,hkd->hqd"}> : () -> ()
    %cst_24 = arith.constant dense<0.000000e+00> : vector<4x16x8xf32>
    %44 = tpu.matmul %42, %43, %cst_24 {dimension_numbers = #tpu.dot_dimension_numbers<[2], [1], [1], [2], [0, 0, 0, 1, 1, 2], [0], [0]>} : vector<4x16x16xbf16>, vector<4x16x8xbf16>, vector<4x16x8xf32> -> vector<4x16x8xf32>
    "tpu.trace_stop"() : () -> ()
    %cst_25 = arith.constant dense<0.000000e+00> : vector<4x16xf32>
    %45 = vector.multi_reduction <add>, %41, %cst_25 [2] : vector<4x16x16xf32> to vector<4x16xf32>
    %46 = vector.shape_cast %45 : vector<4x16xf32> to vector<4x16x1xf32>
    %47 = tpu.reciprocal %46 {approx = true} : vector<4x16x1xf32> -> vector<4x16x1xf32>
    %48 = vector.broadcast %47 : vector<4x16x1xf32> to vector<4x16x8xf32>
    %49 = arith.mulf %44, %48 : vector<4x16x8xf32>
    %50 = tpu.transpose %49, [1, 0, 2] : vector<4x16x8xf32> -> vector<16x4x8xf32>
    %51 = vector.shape_cast %50 : vector<16x4x8xf32> to vector<16x32xf32>
    %c0_26 = arith.constant 0 : index
    %c0_27 = arith.constant 0 : index
    %c0_28 = arith.constant 0 : index
    %52 = vector.load %arg12[%c0_26, %c0_27, %c0_28] : memref<1x32x32xbf16, #tpu.memory_space<vmem>>, vector<1x32x32xbf16>
    %53 = vector.shape_cast %52 : vector<1x32x32xbf16> to vector<32x32xbf16>
    %54 = arith.truncf %51 : vector<16x32xf32> to vector<16x32xbf16>
    %cst_29 = arith.constant dense<0.000000e+00> : vector<16x32xf32>
    %55 = tpu.matmul %54, %53, %cst_29 {dimension_numbers = #tpu.dot_dimension_numbers<[1], [0], [0], [1], [0, 0, 1, 1], [], []>} : vector<16x32xbf16>, vector<32x32xbf16>, vector<16x32xf32> -> vector<16x32xf32>
    %c0_30 = arith.constant 0 : index
    %c0_31 = arith.constant 0 : index
    %c0_32 = arith.constant 0 : index
    %56 = vector.load %arg13[%c0_30, %c0_31, %c0_32] : memref<1x1x32xf32, #tpu.memory_space<vmem>>, vector<1x1x32xf32>
    %57 = vector.shape_cast %56 : vector<1x1x32xf32> to vector<1x32xf32>
    %58 = vector.broadcast %57 : vector<1x32xf32> to vector<16x32xf32>
    %59 = arith.addf %55, %58 : vector<16x32xf32>
    %60 = arith.addf %3, %59 : vector<16x32xf32>
    %c0_33 = arith.constant 0 : index
    %c0_34 = arith.constant 0 : index
    %c0_35 = arith.constant 0 : index
    %61 = vector.load %arg14[%c0_33, %c0_34, %c0_35] : memref<1x1x32xf32, #tpu.memory_space<vmem>>, vector<1x1x32xf32>
    %62 = vector.shape_cast %61 : vector<1x1x32xf32> to vector<1x32xf32>
    %c0_36 = arith.constant 0 : index
    %c0_37 = arith.constant 0 : index
    %c0_38 = arith.constant 0 : index
    %63 = vector.load %arg15[%c0_36, %c0_37, %c0_38] : memref<1x1x32xf32, #tpu.memory_space<vmem>>, vector<1x1x32xf32>
    %64 = vector.shape_cast %63 : vector<1x1x32xf32> to vector<1x32xf32>
    %cst_39 = arith.constant dense<0.000000e+00> : vector<16xf32>
    %65 = vector.multi_reduction <add>, %60, %cst_39 [1] : vector<16x32xf32> to vector<16xf32>
    %66 = vector.shape_cast %65 : vector<16xf32> to vector<16x1xf32>
    %cst_40 = arith.constant 3.200000e+01 : f32
    %67 = vector.broadcast %cst_40 : f32 to vector<16x1xf32>
    %68 = arith.divf %66, %67 : vector<16x1xf32>
    %69 = vector.broadcast %68 : vector<16x1xf32> to vector<16x32xf32>
    %70 = arith.subf %60, %69 : vector<16x32xf32>
    %71 = arith.mulf %70, %70 : vector<16x32xf32>
    %cst_41 = arith.constant dense<0.000000e+00> : vector<16xf32>
    %72 = vector.multi_reduction <add>, %71, %cst_41 [1] : vector<16x32xf32> to vector<16xf32>
    %73 = vector.shape_cast %72 : vector<16xf32> to vector<16x1xf32>
    %cst_42 = arith.constant 3.200000e+01 : f32
    %74 = vector.broadcast %cst_42 : f32 to vector<16x1xf32>
    %75 = arith.divf %73, %74 : vector<16x1xf32>
    %76 = vector.broadcast %68 : vector<16x1xf32> to vector<16x32xf32>
    %77 = arith.subf %60, %76 : vector<16x32xf32>
    %cst_43 = arith.constant 9.99999974E-6 : f32
    %78 = vector.broadcast %cst_43 : f32 to vector<16x1xf32>
    %79 = arith.addf %75, %78 : vector<16x1xf32>
    %80 = math.rsqrt %79 : vector<16x1xf32>
    %81 = vector.broadcast %80 : vector<16x1xf32> to vector<16x32xf32>
    %82 = arith.mulf %77, %81 : vector<16x32xf32>
    %83 = vector.broadcast %62 : vector<1x32xf32> to vector<16x32xf32>
    %84 = arith.mulf %82, %83 : vector<16x32xf32>
    %85 = vector.broadcast %64 : vector<1x32xf32> to vector<16x32xf32>
    %86 = arith.addf %84, %85 : vector<16x32xf32>
    %c0_44 = arith.constant 0 : index
    %c0_45 = arith.constant 0 : index
    %c0_46 = arith.constant 0 : index
    %87 = vector.load %arg16[%c0_44, %c0_45, %c0_46] : memref<1x32x64xbf16, #tpu.memory_space<vmem>>, vector<1x32x64xbf16>
    %88 = vector.shape_cast %87 : vector<1x32x64xbf16> to vector<32x64xbf16>
    %89 = arith.truncf %86 : vector<16x32xf32> to vector<16x32xbf16>
    %cst_47 = arith.constant dense<0.000000e+00> : vector<16x64xf32>
    %90 = tpu.matmul %89, %88, %cst_47 {dimension_numbers = #tpu.dot_dimension_numbers<[1], [0], [0], [1], [0, 0, 1, 1], [], []>} : vector<16x32xbf16>, vector<32x64xbf16>, vector<16x64xf32> -> vector<16x64xf32>
    %c0_48 = arith.constant 0 : index
    %c0_49 = arith.constant 0 : index
    %c0_50 = arith.constant 0 : index
    %91 = vector.load %arg17[%c0_48, %c0_49, %c0_50] : memref<1x1x64xf32, #tpu.memory_space<vmem>>, vector<1x1x64xf32>
    %92 = vector.shape_cast %91 : vector<1x1x64xf32> to vector<1x64xf32>
    %93 = vector.broadcast %92 : vector<1x64xf32> to vector<16x64xf32>
    %94 = arith.addf %90, %93 : vector<16x64xf32>
    %cst_51 = arith.constant 0.000000e+00 : f32
    %95 = vector.broadcast %cst_51 : f32 to vector<16x64xf32>
    %96 = arith.maximumf %94, %95 : vector<16x64xf32>
    %c0_52 = arith.constant 0 : index
    %c0_53 = arith.constant 0 : index
    %c0_54 = arith.constant 0 : index
    %97 = vector.load %arg18[%c0_52, %c0_53, %c0_54] : memref<1x64x32xbf16, #tpu.memory_space<vmem>>, vector<1x64x32xbf16>
    %98 = vector.shape_cast %97 : vector<1x64x32xbf16> to vector<64x32xbf16>
    %99 = arith.truncf %96 : vector<16x64xf32> to vector<16x64xbf16>
    %cst_55 = arith.constant dense<0.000000e+00> : vector<16x32xf32>
    %100 = tpu.matmul %99, %98, %cst_55 {dimension_numbers = #tpu.dot_dimension_numbers<[1], [0], [0], [1], [0, 0, 1, 1], [], []>} : vector<16x64xbf16>, vector<64x32xbf16>, vector<16x32xf32> -> vector<16x32xf32>
    %c0_56 = arith.constant 0 : index
    %c0_57 = arith.constant 0 : index
    %c0_58 = arith.constant 0 : index
    %101 = vector.load %arg19[%c0_56, %c0_57, %c0_58] : memref<1x1x32xf32, #tpu.memory_space<vmem>>, vector<1x1x32xf32>
    %102 = vector.shape_cast %101 : vector<1x1x32xf32> to vector<1x32xf32>
    %103 = vector.broadcast %102 : vector<1x32xf32> to vector<16x32xf32>
    %104 = arith.addf %100, %103 : vector<16x32xf32>
    %105 = arith.addf %86, %104 : vector<16x32xf32>
    %c0_59 = arith.constant 0 : index
    %c0_60 = arith.constant 0 : index
    %c0_61 = arith.constant 0 : index
    %106 = vector.load %arg20[%c0_59, %c0_60, %c0_61] : memref<1x1x32xf32, #tpu.memory_space<vmem>>, vector<1x1x32xf32>
    %107 = vector.shape_cast %106 : vector<1x1x32xf32> to vector<1x32xf32>
    %c0_62 = arith.constant 0 : index
    %c0_63 = arith.constant 0 : index
    %c0_64 = arith.constant 0 : index
    %108 = vector.load %arg21[%c0_62, %c0_63, %c0_64] : memref<1x1x32xf32, #tpu.memory_space<vmem>>, vector<1x1x32xf32>
    %109 = vector.shape_cast %108 : vector<1x1x32xf32> to vector<1x32xf32>
    %cst_65 = arith.constant dense<0.000000e+00> : vector<16xf32>
    %110 = vector.multi_reduction <add>, %105, %cst_65 [1] : vector<16x32xf32> to vector<16xf32>
    %111 = vector.shape_cast %110 : vector<16xf32> to vector<16x1xf32>
    %cst_66 = arith.constant 3.200000e+01 : f32
    %112 = vector.broadcast %cst_66 : f32 to vector<16x1xf32>
    %113 = arith.divf %111, %112 : vector<16x1xf32>
    %114 = vector.broadcast %113 : vector<16x1xf32> to vector<16x32xf32>
    %115 = arith.subf %105, %114 : vector<16x32xf32>
    %116 = arith.mulf %115, %115 : vector<16x32xf32>
    %cst_67 = arith.constant dense<0.000000e+00> : vector<16xf32>
    %117 = vector.multi_reduction <add>, %116, %cst_67 [1] : vector<16x32xf32> to vector<16xf32>
    %118 = vector.shape_cast %117 : vector<16xf32> to vector<16x1xf32>
    %cst_68 = arith.constant 3.200000e+01 : f32
    %119 = vector.broadcast %cst_68 : f32 to vector<16x1xf32>
    %120 = arith.divf %118, %119 : vector<16x1xf32>
    %121 = vector.broadcast %113 : vector<16x1xf32> to vector<16x32xf32>
    %122 = arith.subf %105, %121 : vector<16x32xf32>
    %cst_69 = arith.constant 9.99999974E-6 : f32
    %123 = vector.broadcast %cst_69 : f32 to vector<16x1xf32>
    %124 = arith.addf %120, %123 : vector<16x1xf32>
    %125 = math.rsqrt %124 : vector<16x1xf32>
    %126 = vector.broadcast %125 : vector<16x1xf32> to vector<16x32xf32>
    %127 = arith.mulf %122, %126 : vector<16x32xf32>
    %128 = vector.broadcast %107 : vector<1x32xf32> to vector<16x32xf32>
    %129 = arith.mulf %127, %128 : vector<16x32xf32>
    %130 = vector.broadcast %109 : vector<1x32xf32> to vector<16x32xf32>
    %131 = arith.addf %129, %130 : vector<16x32xf32>
    %c0_70 = arith.constant 0 : index
    %c0_71 = arith.constant 0 : index
    %132 = vector.load %arg25[%c0_70, %c0_71] : memref<16x32xf32, #tpu.memory_space<vmem>>, vector<16x32xf32>
    tpu.vector_store %arg25[%c0_70, %c0_71], %131 {strides = array<i32>} : memref<16x32xf32, #tpu.memory_space<vmem>>, vector<16x32xf32>,
    %c1_i32 = arith.constant 1 : i32
    %133 = arith.cmpi eq, %arg1, %c1_i32 : i32
    %134 = arith.extui %133 : i1 to i32
    %c0_i32_72 = arith.constant 0 : i32
    %135 = arith.cmpi ne, %134, %c0_i32_72 : i32
    scf.if %135 {
      %cst_73 = arith.constant dense<0.000000e+00> : vector<32xf32>
      %136 = vector.multi_reduction <add>, %131, %cst_73 [0] : vector<16x32xf32> to vector<32xf32>
      %137 = vector.shape_cast %136 : vector<32xf32> to vector<1x32xf32>
      %cst_74 = arith.constant 1.600000e+01 : f32
      %138 = vector.broadcast %cst_74 : f32 to vector<1x32xf32>
      %139 = arith.divf %137, %138 : vector<1x32xf32>
      %c0_75 = arith.constant 0 : index
      %c0_76 = arith.constant 0 : index
      %140 = vector.load %arg22[%c0_75, %c0_76] : memref<32x128xbf16, #tpu.memory_space<vmem>>, vector<32x128xbf16>
      %141 = arith.truncf %139 : vector<1x32xf32> to vector<1x32xbf16>
      %cst_77 = arith.constant dense<0.000000e+00> : vector<1x128xf32>
      %142 = tpu.matmul %141, %140, %cst_77 {dimension_numbers = #tpu.dot_dimension_numbers<[1], [0], [0], [1], [0, 0, 1, 1], [], []>} : vector<1x32xbf16>, vector<32x128xbf16>, vector<1x128xf32> -> vector<1x128xf32>
      %c0_78 = arith.constant 0 : index
      %c0_79 = arith.constant 0 : index
      %143 = vector.load %arg23[%c0_78, %c0_79] : memref<1x128xf32, #tpu.memory_space<vmem>>, vector<1x128xf32>
      %144 = arith.addf %142, %143 : vector<1x128xf32>
      %c0_80 = arith.constant 0 : index
      %c0_81 = arith.constant 0 : index
      %c0_82 = arith.constant 0 : index
      %145 = vector.load %arg24[%c0_80, %c0_81, %c0_82] : memref<1x1x128xf32, #tpu.memory_space<vmem>>, vector<1x1x128xf32>
      %146 = vector.shape_cast %145 : vector<1x1x128xf32> to vector<1x128xf32>
      %147 = vector.shape_cast %144 : vector<1x128xf32> to vector<1x1x128xf32>
      tpu.vector_store %arg24[%c0_80, %c0_81, %c0_82], %147 {strides = array<i32>} : memref<1x1x128xf32, #tpu.memory_space<vmem>>, vector<1x1x128xf32>,
    } else {
    }
    return
  }
  func.func @transform_0(%arg0: i32, %arg1: i32) -> (i32, i32, i32) {
    %c0_i32 = arith.constant 0 : i32
    %c0_i32_0 = arith.constant 0 : i32
    %c0_i32_1 = arith.constant 0 : i32
    return %arg0, %c0_i32, %c0_i32_0 : i32, i32, i32
  }
  func.func @transform_1(%arg0: i32, %arg1: i32) -> (i32, i32) {
    %c0_i32 = arith.constant 0 : i32
    %c0_i32_0 = arith.constant 0 : i32
    %c0_i32_1 = arith.constant 0 : i32
    return %c0_i32, %c0_i32_0 : i32, i32
  }
  func.func @transform_2(%arg0: i32, %arg1: i32) -> (i32, i32) {
    %c0_i32 = arith.constant 0 : i32
    %c0_i32_0 = arith.constant 0 : i32
    %c0_i32_1 = arith.constant 0 : i32
    return %c0_i32, %c0_i32_0 : i32, i32
  }
  func.func @transform_3(%arg0: i32, %arg1: i32) -> (i32, i32, i32) {
    %c0_i32 = arith.constant 0 : i32
    %c0_i32_0 = arith.constant 0 : i32
    %c0_i32_1 = arith.constant 0 : i32
    return %arg0, %c0_i32, %c0_i32_0 : i32, i32, i32
  }
  func.func @transform_4(%arg0: i32, %arg1: i32) -> (i32, i32, i32) {
    %c0_i32 = arith.constant 0 : i32
    %c0_i32_0 = arith.constant 0 : i32
    %c0_i32_1 = arith.constant 0 : i32
    return %arg1, %c0_i32, %c0_i32_0 : i32, i32, i32
  }
  func.func @transform_5(%arg0: i32, %arg1: i32) -> (i32, i32, i32) {
    %c0_i32 = arith.constant 0 : i32
    %c0_i32_0 = arith.constant 0 : i32
    %c0_i32_1 = arith.constant 0 : i32
    return %arg1, %c0_i32, %c0_i32_0 : i32, i32, i32
  }
  func.func @transform_6(%arg0: i32, %arg1: i32) -> (i32, i32, i32) {
    %c0_i32 = arith.constant 0 : i32
    %c0_i32_0 = arith.constant 0 : i32
    %c0_i32_1 = arith.constant 0 : i32
    return %arg1, %c0_i32, %c0_i32_0 : i32, i32, i32
  }
  func.func @transform_7(%arg0: i32, %arg1: i32) -> (i32, i32, i32) {
    %c0_i32 = arith.constant 0 : i32
    %c0_i32_0 = arith.constant 0 : i32
    %c0_i32_1 = arith.constant 0 : i32
    return %arg1, %c0_i32, %c0_i32_0 : i32, i32, i32
  }
  func.func @transform_8(%arg0: i32, %arg1: i32) -> (i32, i32, i32) {
    %c0_i32 = arith.constant 0 : i32
    %c0_i32_0 = arith.constant 0 : i32
    %c0_i32_1 = arith.constant 0 : i32
    return %arg1, %c0_i32, %c0_i32_0 : i32, i32, i32
  }
  func.func @transform_9(%arg0: i32, %arg1: i32) -> (i32, i32, i32) {
    %c0_i32 = arith.constant 0 : i32
    %c0_i32_0 = arith.constant 0 : i32
    %c0_i32_1 = arith.constant 0 : i32
    return %arg1, %c0_i32, %c0_i32_0 : i32, i32, i32
  }
  func.func @transform_10(%arg0: i32, %arg1: i32) -> (i32, i32, i32) {
    %c0_i32 = arith.constant 0 : i32
    %c0_i32_0 = arith.constant 0 : i32
    %c0_i32_1 = arith.constant 0 : i32
    return %arg1, %c0_i32, %c0_i32_0 : i32, i32, i32
  }
  func.func @transform_11(%arg0: i32, %arg1: i32) -> (i32, i32, i32) {
    %c0_i32 = arith.constant 0 : i32
    %c0_i32_0 = arith.constant 0 : i32
    %c0_i32_1 = arith.constant 0 : i32
    return %arg1, %c0_i32, %c0_i32_0 : i32, i32, i32
  }
  func.func @transform_12(%arg0: i32, %arg1: i32) -> (i32, i32, i32) {
    %c0_i32 = arith.constant 0 : i32
    %c0_i32_0 = arith.constant 0 : i32
    %c0_i32_1 = arith.constant 0 : i32
    return %arg1, %c0_i32, %c0_i32_0 : i32, i32, i32
  }
  func.func @transform_13(%arg0: i32, %arg1: i32) -> (i32, i32, i32) {
    %c0_i32 = arith.constant 0 : i32
    %c0_i32_0 = arith.constant 0 : i32
    %c0_i32_1 = arith.constant 0 : i32
    return %arg1, %c0_i32, %c0_i32_0 : i32, i32, i32
  }
  func.func @transform_14(%arg0: i32, %arg1: i32) -> (i32, i32, i32) {
    %c0_i32 = arith.constant 0 : i32
    %c0_i32_0 = arith.constant 0 : i32
    %c0_i32_1 = arith.constant 0 : i32
    return %arg1, %c0_i32, %c0_i32_0 : i32, i32, i32
  }
  func.func @transform_15(%arg0: i32, %arg1: i32) -> (i32, i32, i32) {
    %c0_i32 = arith.constant 0 : i32
    %c0_i32_0 = arith.constant 0 : i32
    %c0_i32_1 = arith.constant 0 : i32
    return %arg1, %c0_i32, %c0_i32_0 : i32, i32, i32
  }
  func.func @transform_16(%arg0: i32, %arg1: i32) -> (i32, i32, i32) {
    %c0_i32 = arith.constant 0 : i32
    %c0_i32_0 = arith.constant 0 : i32
    %c0_i32_1 = arith.constant 0 : i32
    return %arg1, %c0_i32, %c0_i32_0 : i32, i32, i32
  }
  func.func @transform_17(%arg0: i32, %arg1: i32) -> (i32, i32, i32) {
    %c0_i32 = arith.constant 0 : i32
    %c0_i32_0 = arith.constant 0 : i32
    %c0_i32_1 = arith.constant 0 : i32
    return %arg1, %c0_i32, %c0_i32_0 : i32, i32, i32
  }
  func.func @transform_18(%arg0: i32, %arg1: i32) -> (i32, i32, i32) {
    %c0_i32 = arith.constant 0 : i32
    %c0_i32_0 = arith.constant 0 : i32
    %c0_i32_1 = arith.constant 0 : i32
    return %arg1, %c0_i32, %c0_i32_0 : i32, i32, i32
  }
  func.func @transform_19(%arg0: i32, %arg1: i32) -> (i32, i32, i32) {
    %c0_i32 = arith.constant 0 : i32
    %c0_i32_0 = arith.constant 0 : i32
    %c0_i32_1 = arith.constant 0 : i32
    return %arg1, %c0_i32, %c0_i32_0 : i32, i32, i32
  }
  func.func @transform_20(%arg0: i32, %arg1: i32) -> (i32, i32) {
    %c0_i32 = arith.constant 0 : i32
    %c0_i32_0 = arith.constant 0 : i32
    %c0_i32_1 = arith.constant 0 : i32
    return %c0_i32, %c0_i32_0 : i32, i32
  }
  func.func @transform_21(%arg0: i32, %arg1: i32) -> (i32, i32) {
    %c0_i32 = arith.constant 0 : i32
    %c0_i32_0 = arith.constant 0 : i32
    %c0_i32_1 = arith.constant 0 : i32
    return %c0_i32, %c0_i32_0 : i32, i32
  }
  func.func @transform_22(%arg0: i32, %arg1: i32) -> (i32, i32, i32) {
    %c0_i32 = arith.constant 0 : i32
    %c0_i32_0 = arith.constant 0 : i32
    %c0_i32_1 = arith.constant 0 : i32
    return %arg0, %c0_i32, %c0_i32_0 : i32, i32, i32
  }
}

</mosaic_0001>

<llo_original>
// kernel: transformer_forward.1
$region0: #{transformer_forward.1}
  #allocation0 [shape = 'u32[]', space=smem, size = 0x4, offset = 0x4, fixed_abs, tag = 'smem constant byte address 0x4 - core index']
  #allocation1 [shape = 'u32[144,128]{1,0:T(1,128)}', space=vmem, size = 0x12000, scoped, tag = 'internal scratch']
  #allocation2 [shape = 'f32[16,32]{1,0:T(8,128)}', space=vmem, size = 0x2000, scoped, tag = 'scratch operand']
  %s0 = inlined_call_operand.vmem [shape: f32[2,16,4], index: 0, kind: input, shape index: {}]
  %s1 = inlined_call_operand.vmem [shape: bf16[4,32], index: 1, kind: input, shape index: {}]
  %s2 = inlined_call_operand.vmem [shape: f32[1,32], index: 2, kind: input, shape index: {}]
  %s3 = inlined_call_operand.vmem [shape: f32[2,1,32], index: 3, kind: input, shape index: {}]
  %s4 = inlined_call_operand.vmem [shape: bf16[2,32,32], index: 4, kind: input, shape index: {}]
  %s5 = inlined_call_operand.vmem [shape: f32[2,1,32], index: 5, kind: input, shape index: {}]
  %s6 = inlined_call_operand.vmem [shape: bf16[2,32,32], index: 6, kind: input, shape index: {}]
  %s7 = inlined_call_operand.vmem [shape: f32[2,1,32], index: 7, kind: input, shape index: {}]
  %s8 = inlined_call_operand.vmem [shape: bf16[2,32,32], index: 8, kind: input, shape index: {}]
  %s9 = inlined_call_operand.vmem [shape: f32[2,1,32], index: 9, kind: input, shape index: {}]
  %s10 = inlined_call_operand.vmem [shape: bf16[2,32,32], index: 10, kind: input, shape index: {}]
  %s11 = inlined_call_operand.vmem [shape: f32[2,1,32], index: 11, kind: input, shape index: {}]
  %s12 = inlined_call_operand.vmem [shape: f32[2,1,32], index: 12, kind: input, shape index: {}]
  %s13 = inlined_call_operand.vmem [shape: f32[2,1,32], index: 13, kind: input, shape index: {}]
  %s14 = inlined_call_operand.vmem [shape: bf16[2,32,64], index: 14, kind: input, shape index: {}]
  %s15 = inlined_call_operand.vmem [shape: f32[2,1,64], index: 15, kind: input, shape index: {}]
  %s16 = inlined_call_operand.vmem [shape: bf16[2,64,32], index: 16, kind: input, shape index: {}]
  %s17 = inlined_call_operand.vmem [shape: f32[2,1,32], index: 17, kind: input, shape index: {}]
  %s18 = inlined_call_operand.vmem [shape: f32[2,1,32], index: 18, kind: input, shape index: {}]
  %s19 = inlined_call_operand.vmem [shape: f32[2,1,32], index: 19, kind: input, shape index: {}]
  %s20 = inlined_call_operand.vmem [shape: bf16[32,128], index: 20, kind: input, shape index: {}]
  %s21 = inlined_call_operand.vmem [shape: f32[1,128], index: 21, kind: input, shape index: {}]
  %s22 = inlined_call_operand.hbm [shape: f32[2,1,128], index: 22, kind: output, shape index: {}]
  %s23 = sld [smem:[#allocation0]]
  $region129: #{transformer_forward.1} parent=0
    _
  %s25 = ssub.s32 1, %s23
  %s26 = scalar_select 0, %s25, %s23
  $region1: #{transformer_forward.1} parent=0
    #allocation3 [shape = 'u8[1024]{0}', space=vmem, size = 0x400, scoped, tag = 'output window, operand 0']
    #allocation4 [shape = 's32[2]{0}', space=sflag, size = 0x8, scoped, tag = 'scoped memory for transformer_forward.1']
    %27 = vsyncpa [#allocation4], 0
    %s28 = scalar_lea.sflag [#allocation4], 1
    %29 = vsyncpa %s28, 0
    loop: start=0, step=1, limit=6
    $region2: #{transformer_forward.1} parent=1 // loop_pre_header
      _
    $region3: #{transformer_forward.1} parent=1 // loop_header
      %s31 = sphi 0, %s35
      %p32 = scmp.ge.s32.totalorder %s31, 6
      %s38 = sphi 0, %s50
      %s39 = sphi 0, %s46
      %s40 = sphi 0, %s38
      %s41 = sphi 0, %s39
      %s42 = sphi 0, %s40
      %s43 = sphi 0, %s41
      %s53 = sphi 0, %s55
      %s56 = sphi 0, %s53
      %s57 = sphi 0, %s56
      %s73 = sphi 0, %s57
      %s77 = sphi 0, %s77
      %s79 = sphi 0, %s77
      %s80 = sphi 0, %s79
      %s94 = sphi 0, %s80
      %s98 = sphi 0, %s98
      %s100 = sphi 0, %s98
      %s101 = sphi 0, %s100
      %s115 = sphi 0, %s101
      %s121 = sphi 0, %s123
      %s124 = sphi 0, %s121
      %s125 = sphi 0, %s124
      %s141 = sphi 0, %s125
      %s147 = sphi 0, %s149
      %s150 = sphi 0, %s147
      %s151 = sphi 0, %s150
      %s167 = sphi 0, %s151
      %s173 = sphi 0, %s175
      %s176 = sphi 0, %s173
      %s177 = sphi 0, %s176
      %s193 = sphi 0, %s177
      %s199 = sphi 0, %s201
      %s202 = sphi 0, %s199
      %s203 = sphi 0, %s202
      %s219 = sphi 0, %s203
      %s225 = sphi 0, %s227
      %s228 = sphi 0, %s225
      %s229 = sphi 0, %s228
      %s245 = sphi 0, %s229
      %s251 = sphi 0, %s253
      %s254 = sphi 0, %s251
      %s255 = sphi 0, %s254
      %s271 = sphi 0, %s255
      %s277 = sphi 0, %s279
      %s280 = sphi 0, %s277
      %s281 = sphi 0, %s280
      %s297 = sphi 0, %s281
      %s303 = sphi 0, %s305
      %s306 = sphi 0, %s303
      %s307 = sphi 0, %s306
      %s323 = sphi 0, %s307
      %s329 = sphi 0, %s331
      %s332 = sphi 0, %s329
      %s333 = sphi 0, %s332
      %s349 = sphi 0, %s333
      %s355 = sphi 0, %s357
      %s358 = sphi 0, %s355
      %s359 = sphi 0, %s358
      %s375 = sphi 0, %s359
      %s381 = sphi 0, %s383
      %s384 = sphi 0, %s381
      %s385 = sphi 0, %s384
      %s401 = sphi 0, %s385
      %s407 = sphi 0, %s409
      %s410 = sphi 0, %s407
      %s411 = sphi 0, %s410
      %s427 = sphi 0, %s411
      %s433 = sphi 0, %s435
      %s436 = sphi 0, %s433
      %s437 = sphi 0, %s436
      %s453 = sphi 0, %s437
      %s459 = sphi 0, %s461
      %s462 = sphi 0, %s459
      %s463 = sphi 0, %s462
      %s479 = sphi 0, %s463
      %s485 = sphi 0, %s487
      %s488 = sphi 0, %s485
      %s489 = sphi 0, %s488
      %s505 = sphi 0, %s489
      %s511 = sphi 0, %s513
      %s514 = sphi 0, %s511
      %s515 = sphi 0, %s514
      %s531 = sphi 0, %s515
      %s537 = sphi 0, %s539
      %s540 = sphi 0, %s537
      %s541 = sphi 0, %s540
      %s557 = sphi 0, %s541
      %s561 = sphi 0, %s561
      %s563 = sphi 0, %s561
      %s564 = sphi 0, %s563
      %s578 = sphi 0, %s564
      %s582 = sphi 0, %s582
      %s584 = sphi 0, %s582
      %s585 = sphi 0, %s584
      %s599 = sphi 0, %s585
      %s605 = sphi 0, %s607
      %s608 = sphi 0, %s605
      %s609 = sphi 0, %s608
      %s625 = sphi 0, %s609
    $region4: #{transformer_forward.1} parent=1 // loop_header_branch
      %34 = sbr.rel (%p32) target = $region8
    $region5: #{transformer_forward.1} parent=1 // loop_body
      %s36 = ssub.s32 %s31, 1
      %s37 = ssub.s32 %s31, 2
      %s44 = sadd.s32 1, %s39
      %p45 = scmp.ge.s32.totalorder %s44, 2
      %s46 = scalar_select %p45, 0, %s44
      %s47 = sadd.s32 1, %s38
      %s48 = scalar_select %p45, %s47, %s38
      %p49 = scmp.ge.s32.totalorder %s48, 2
      %s50 = scalar_select %p49, 0, %s48
      %s51 = ssub.s32 %s38, %s50
      %p52 = scmp.eq.s32.totalorder %s51, 0
      %s54 = sadd.s32 %s53, 1
      %s55 = scalar_select %p52, %s53, %s54
      %p58 = pneg %p52
      %p59 = scmp.eq.s32.totalorder %s31, 3
      %p60 = por %p58, %p59
      %p61 = scmp.ne.s32.totalorder %s53, %s56
      %p62 = scmp.eq.s32.totalorder %s31, 0
      %p63 = por %p61, %p62
      %p64 = scmp.ne.s32.totalorder %s53, %s56
      %p65 = scmp.eq.s32.totalorder %s36, 3
      %p66 = por %p64, %p65
      %p67 = scmp.ne.s32.totalorder %s56, %s57
      %p68 = scmp.eq.s32.totalorder %s36, 0
      %p69 = por %p67, %p68
      %p70 = scmp.ne.s32.totalorder %s56, %s57
      %p71 = scmp.eq.s32.totalorder %s37, 3
      %p72 = por %p70, %p71
      %p74 = scmp.ne.s32.totalorder %s57, %s73
      %p75 = scmp.eq.s32.totalorder %s37, 0
      %p76 = por %p74, %p75
      %s78 = sadd.s32 %s77, 1
      %p81 = scmp.eq.s32.totalorder %s31, 3
      %p82 = scmp.ne.s32.totalorder %s77, %s79
      %p83 = scmp.eq.s32.totalorder %s31, 0
      %p84 = por %p82, %p83
      %p85 = scmp.ne.s32.totalorder %s77, %s79
      %p86 = scmp.eq.s32.totalorder %s36, 3
      %p87 = por %p85, %p86
      %p88 = scmp.ne.s32.totalorder %s79, %s80
      %p89 = scmp.eq.s32.totalorder %s36, 0
      %p90 = por %p88, %p89
      %p91 = scmp.ne.s32.totalorder %s79, %s80
      %p92 = scmp.eq.s32.totalorder %s37, 3
      %p93 = por %p91, %p92
      %p95 = scmp.ne.s32.totalorder %s80, %s94
      %p96 = scmp.eq.s32.totalorder %s37, 0
      %p97 = por %p95, %p96
      %s99 = sadd.s32 %s98, 1
      %p102 = scmp.eq.s32.totalorder %s31, 3
      %p103 = scmp.ne.s32.totalorder %s98, %s100
      %p104 = scmp.eq.s32.totalorder %s31, 0
      %p105 = por %p103, %p104
      %p106 = scmp.ne.s32.totalorder %s98, %s100
      %p107 = scmp.eq.s32.totalorder %s36, 3
      %p108 = por %p106, %p107
      %p109 = scmp.ne.s32.totalorder %s100, %s101
      %p110 = scmp.eq.s32.totalorder %s36, 0
      %p111 = por %p109, %p110
      %p112 = scmp.ne.s32.totalorder %s100, %s101
      %p113 = scmp.eq.s32.totalorder %s37, 3
      %p114 = por %p112, %p113
      %p116 = scmp.ne.s32.totalorder %s101, %s115
      %p117 = scmp.eq.s32.totalorder %s37, 0
      %p118 = por %p116, %p117
      %s119 = ssub.s32 %s38, %s50
      %p120 = scmp.eq.s32.totalorder %s119, 0
      %s122 = sadd.s32 %s121, 1
      %s123 = scalar_select %p120, %s121, %s122
      %p126 = pneg %p120
      %p127 = scmp.eq.s32.totalorder %s31, 3
      %p128 = por %p126, %p127
      %p129 = scmp.ne.s32.totalorder %s121, %s124
      %p130 = scmp.eq.s32.totalorder %s31, 0
      %p131 = por %p129, %p130
      %p132 = scmp.ne.s32.totalorder %s121, %s124
      %p133 = scmp.eq.s32.totalorder %s36, 3
      %p134 = por %p132, %p133
      %p135 = scmp.ne.s32.totalorder %s124, %s125
      %p136 = scmp.eq.s32.totalorder %s36, 0
      %p137 = por %p135, %p136
      %p138 = scmp.ne.s32.totalorder %s124, %s125
      %p139 = scmp.eq.s32.totalorder %s37, 3
      %p140 = por %p138, %p139
      %p142 = scmp.ne.s32.totalorder %s125, %s141
      %p143 = scmp.eq.s32.totalorder %s37, 0
      %p144 = por %p142, %p143
      %s145 = ssub.s32 %s39, %s46
      %p146 = scmp.eq.s32.totalorder %s145, 0
      %s148 = sadd.s32 %s147, 1
      %s149 = scalar_select %p146, %s147, %s148
      %p152 = pneg %p146
      %p153 = scmp.eq.s32.totalorder %s31, 3
      %p154 = por %p152, %p153
      %p155 = scmp.ne.s32.totalorder %s147, %s150
      %p156 = scmp.eq.s32.totalorder %s31, 0
      %p157 = por %p155, %p156
      %p158 = scmp.ne.s32.totalorder %s147, %s150
      %p159 = scmp.eq.s32.totalorder %s36, 3
      %p160 = por %p158, %p159
      %p161 = scmp.ne.s32.totalorder %s150, %s151
      %p162 = scmp.eq.s32.totalorder %s36, 0
      %p163 = por %p161, %p162
      %p164 = scmp.ne.s32.totalorder %s150, %s151
      %p165 = scmp.eq.s32.totalorder %s37, 3
      %p166 = por %p164, %p165
      %p168 = scmp.ne.s32.totalorder %s151, %s167
      %p169 = scmp.eq.s32.totalorder %s37, 0
      %p170 = por %p168, %p169
      %s171 = ssub.s32 %s39, %s46
      %p172 = scmp.eq.s32.totalorder %s171, 0
      %s174 = sadd.s32 %s173, 1
      %s175 = scalar_select %p172, %s173, %s174
      %p178 = pneg %p172
      %p179 = scmp.eq.s32.totalorder %s31, 3
      %p180 = por %p178, %p179
      %p181 = scmp.ne.s32.totalorder %s173, %s176
      %p182 = scmp.eq.s32.totalorder %s31, 0
      %p183 = por %p181, %p182
      %p184 = scmp.ne.s32.totalorder %s173, %s176
      %p185 = scmp.eq.s32.totalorder %s36, 3
      %p186 = por %p184, %p185
      %p187 = scmp.ne.s32.totalorder %s176, %s177
      %p188 = scmp.eq.s32.totalorder %s36, 0
      %p189 = por %p187, %p188
      %p190 = scmp.ne.s32.totalorder %s176, %s177
      %p191 = scmp.eq.s32.totalorder %s37, 3
      %p192 = por %p190, %p191
      %p194 = scmp.ne.s32.totalorder %s177, %s193
      %p195 = scmp.eq.s32.totalorder %s37, 0
      %p196 = por %p194, %p195
      %s197 = ssub.s32 %s39, %s46
      %p198 = scmp.eq.s32.totalorder %s197, 0
      %s200 = sadd.s32 %s199, 1
      %s201 = scalar_select %p198, %s199, %s200
      %p204 = pneg %p198
      %p205 = scmp.eq.s32.totalorder %s31, 3
      %p206 = por %p204, %p205
      %p207 = scmp.ne.s32.totalorder %s199, %s202
      %p208 = scmp.eq.s32.totalorder %s31, 0
      %p209 = por %p207, %p208
      %p210 = scmp.ne.s32.totalorder %s199, %s202
      %p211 = scmp.eq.s32.totalorder %s36, 3
      %p212 = por %p210, %p211
      %p213 = scmp.ne.s32.totalorder %s202, %s203
      %p214 = scmp.eq.s32.totalorder %s36, 0
      %p215 = por %p213, %p214
      %p216 = scmp.ne.s32.totalorder %s202, %s203
      %p217 = scmp.eq.s32.totalorder %s37, 3
      %p218 = por %p216, %p217
      %p220 = scmp.ne.s32.totalorder %s203, %s219
      %p221 = scmp.eq.s32.totalorder %s37, 0
      %p222 = por %p220, %p221
      %s223 = ssub.s32 %s39, %s46
      %p224 = scmp.eq.s32.totalorder %s223, 0
      %s226 = sadd.s32 %s225, 1
      %s227 = scalar_select %p224, %s225, %s226
      %p230 = pneg %p224
      %p231 = scmp.eq.s32.totalorder %s31, 3
      %p232 = por %p230, %p231
      %p233 = scmp.ne.s32.totalorder %s225, %s228
      %p234 = scmp.eq.s32.totalorder %s31, 0
      %p235 = por %p233, %p234
      %p236 = scmp.ne.s32.totalorder %s225, %s228
      %p237 = scmp.eq.s32.totalorder %s36, 3
      %p238 = por %p236, %p237
      %p239 = scmp.ne.s32.totalorder %s228, %s229
      %p240 = scmp.eq.s32.totalorder %s36, 0
      %p241 = por %p239, %p240
      %p242 = scmp.ne.s32.totalorder %s228, %s229
      %p243 = scmp.eq.s32.totalorder %s37, 3
      %p244 = por %p242, %p243
      %p246 = scmp.ne.s32.totalorder %s229, %s245
      %p247 = scmp.eq.s32.totalorder %s37, 0
      %p248 = por %p246, %p247
      %s249 = ssub.s32 %s39, %s46
      %p250 = scmp.eq.s32.totalorder %s249, 0
      %s252 = sadd.s32 %s251, 1
      %s253 = scalar_select %p250, %s251, %s252
      %p256 = pneg %p250
      %p257 = scmp.eq.s32.totalorder %s31, 3
      %p258 = por %p256, %p257
      %p259 = scmp.ne.s32.totalorder %s251, %s254
      %p260 = scmp.eq.s32.totalorder %s31, 0
      %p261 = por %p259, %p260
      %p262 = scmp.ne.s32.totalorder %s251, %s254
      %p263 = scmp.eq.s32.totalorder %s36, 3
      %p264 = por %p262, %p263
      %p265 = scmp.ne.s32.totalorder %s254, %s255
      %p266 = scmp.eq.s32.totalorder %s36, 0
      %p267 = por %p265, %p266
      %p268 = scmp.ne.s32.totalorder %s254, %s255
      %p269 = scmp.eq.s32.totalorder %s37, 3
      %p270 = por %p268, %p269
      %p272 = scmp.ne.s32.totalorder %s255, %s271
      %p273 = scmp.eq.s32.totalorder %s37, 0
      %p274 = por %p272, %p273
      %s275 = ssub.s32 %s39, %s46
      %p276 = scmp.eq.s32.totalorder %s275, 0
      %s278 = sadd.s32 %s277, 1
      %s279 = scalar_select %p276, %s277, %s278
      %p282 = pneg %p276
      %p283 = scmp.eq.s32.totalorder %s31, 3
      %p284 = por %p282, %p283
      %p285 = scmp.ne.s32.totalorder %s277, %s280
      %p286 = scmp.eq.s32.totalorder %s31, 0
      %p287 = por %p285, %p286
      %p288 = scmp.ne.s32.totalorder %s277, %s280
      %p289 = scmp.eq.s32.totalorder %s36, 3
      %p290 = por %p288, %p289
      %p291 = scmp.ne.s32.totalorder %s280, %s281
      %p292 = scmp.eq.s32.totalorder %s36, 0
      %p293 = por %p291, %p292
      %p294 = scmp.ne.s32.totalorder %s280, %s281
      %p295 = scmp.eq.s32.totalorder %s37, 3
      %p296 = por %p294, %p295
      %p298 = scmp.ne.s32.totalorder %s281, %s297
      %p299 = scmp.eq.s32.totalorder %s37, 0
      %p300 = por %p298, %p299
      %s301 = ssub.s32 %s39, %s46
      %p302 = scmp.eq.s32.totalorder %s301, 0
      %s304 = sadd.s32 %s303, 1
      %s305 = scalar_select %p302, %s303, %s304
      %p308 = pneg %p302
      %p309 = scmp.eq.s32.totalorder %s31, 3
      %p310 = por %p308, %p309
      %p311 = scmp.ne.s32.totalorder %s303, %s306
      %p312 = scmp.eq.s32.totalorder %s31, 0
      %p313 = por %p311, %p312
      %p314 = scmp.ne.s32.totalorder %s303, %s306
      %p315 = scmp.eq.s32.totalorder %s36, 3
      %p316 = por %p314, %p315
      %p317 = scmp.ne.s32.totalorder %s306, %s307
      %p318 = scmp.eq.s32.totalorder %s36, 0
      %p319 = por %p317, %p318
      %p320 = scmp.ne.s32.totalorder %s306, %s307
      %p321 = scmp.eq.s32.totalorder %s37, 3
      %p322 = por %p320, %p321
      %p324 = scmp.ne.s32.totalorder %s307, %s323
      %p325 = scmp.eq.s32.totalorder %s37, 0
      %p326 = por %p324, %p325
      %s327 = ssub.s32 %s39, %s46
      %p328 = scmp.eq.s32.totalorder %s327, 0
      %s330 = sadd.s32 %s329, 1
      %s331 = scalar_select %p328, %s329, %s330
      %p334 = pneg %p328
      %p335 = scmp.eq.s32.totalorder %s31, 3
      %p336 = por %p334, %p335
      %p337 = scmp.ne.s32.totalorder %s329, %s332
      %p338 = scmp.eq.s32.totalorder %s31, 0
      %p339 = por %p337, %p338
      %p340 = scmp.ne.s32.totalorder %s329, %s332
      %p341 = scmp.eq.s32.totalorder %s36, 3
      %p342 = por %p340, %p341
      %p343 = scmp.ne.s32.totalorder %s332, %s333
      %p344 = scmp.eq.s32.totalorder %s36, 0
      %p345 = por %p343, %p344
      %p346 = scmp.ne.s32.totalorder %s332, %s333
      %p347 = scmp.eq.s32.totalorder %s37, 3
      %p348 = por %p346, %p347
      %p350 = scmp.ne.s32.totalorder %s333, %s349
      %p351 = scmp.eq.s32.totalorder %s37, 0
      %p352 = por %p350, %p351
      %s353 = ssub.s32 %s39, %s46
      %p354 = scmp.eq.s32.totalorder %s353, 0
      %s356 = sadd.s32 %s355, 1
      %s357 = scalar_select %p354, %s355, %s356
      %p360 = pneg %p354
      %p361 = scmp.eq.s32.totalorder %s31, 3
      %p362 = por %p360, %p361
      %p363 = scmp.ne.s32.totalorder %s355, %s358
      %p364 = scmp.eq.s32.totalorder %s31, 0
      %p365 = por %p363, %p364
      %p366 = scmp.ne.s32.totalorder %s355, %s358
      %p367 = scmp.eq.s32.totalorder %s36, 3
      %p368 = por %p366, %p367
      %p369 = scmp.ne.s32.totalorder %s358, %s359
      %p370 = scmp.eq.s32.totalorder %s36, 0
      %p371 = por %p369, %p370
      %p372 = scmp.ne.s32.totalorder %s358, %s359
      %p373 = scmp.eq.s32.totalorder %s37, 3
      %p374 = por %p372, %p373
      %p376 = scmp.ne.s32.totalorder %s359, %s375
      %p377 = scmp.eq.s32.totalorder %s37, 0
      %p378 = por %p376, %p377
      %s379 = ssub.s32 %s39, %s46
      %p380 = scmp.eq.s32.totalorder %s379, 0
      %s382 = sadd.s32 %s381, 1
      %s383 = scalar_select %p380, %s381, %s382
      %p386 = pneg %p380
      %p387 = scmp.eq.s32.totalorder %s31, 3
      %p388 = por %p386, %p387
      %p389 = scmp.ne.s32.totalorder %s381, %s384
      %p390 = scmp.eq.s32.totalorder %s31, 0
      %p391 = por %p389, %p390
      %p392 = scmp.ne.s32.totalorder %s381, %s384
      %p393 = scmp.eq.s32.totalorder %s36, 3
      %p394 = por %p392, %p393
      %p395 = scmp.ne.s32.totalorder %s384, %s385
      %p396 = scmp.eq.s32.totalorder %s36, 0
      %p397 = por %p395, %p396
      %p398 = scmp.ne.s32.totalorder %s384, %s385
      %p399 = scmp.eq.s32.totalorder %s37, 3
      %p400 = por %p398, %p399
      %p402 = scmp.ne.s32.totalorder %s385, %s401
      %p403 = scmp.eq.s32.totalorder %s37, 0
      %p404 = por %p402, %p403
      %s405 = ssub.s32 %s39, %s46
      %p406 = scmp.eq.s32.totalorder %s405, 0
      %s408 = sadd.s32 %s407, 1
      %s409 = scalar_select %p406, %s407, %s408
      %p412 = pneg %p406
      %p413 = scmp.eq.s32.totalorder %s31, 3
      %p414 = por %p412, %p413
      %p415 = scmp.ne.s32.totalorder %s407, %s410
      %p416 = scmp.eq.s32.totalorder %s31, 0
      %p417 = por %p415, %p416
      %p418 = scmp.ne.s32.totalorder %s407, %s410
      %p419 = scmp.eq.s32.totalorder %s36, 3
      %p420 = por %p418, %p419
      %p421 = scmp.ne.s32.totalorder %s410, %s411
      %p422 = scmp.eq.s32.totalorder %s36, 0
      %p423 = por %p421, %p422
      %p424 = scmp.ne.s32.totalorder %s410, %s411
      %p425 = scmp.eq.s32.totalorder %s37, 3
      %p426 = por %p424, %p425
      %p428 = scmp.ne.s32.totalorder %s411, %s427
      %p429 = scmp.eq.s32.totalorder %s37, 0
      %p430 = por %p428, %p429
      %s431 = ssub.s32 %s39, %s46
      %p432 = scmp.eq.s32.totalorder %s431, 0
      %s434 = sadd.s32 %s433, 1
      %s435 = scalar_select %p432, %s433, %s434
      %p438 = pneg %p432
      %p439 = scmp.eq.s32.totalorder %s31, 3
      %p440 = por %p438, %p439
      %p441 = scmp.ne.s32.totalorder %s433, %s436
      %p442 = scmp.eq.s32.totalorder %s31, 0
      %p443 = por %p441, %p442
      %p444 = scmp.ne.s32.totalorder %s433, %s436
      %p445 = scmp.eq.s32.totalorder %s36, 3
      %p446 = por %p444, %p445
      %p447 = scmp.ne.s32.totalorder %s436, %s437
      %p448 = scmp.eq.s32.totalorder %s36, 0
      %p449 = por %p447, %p448
      %p450 = scmp.ne.s32.totalorder %s436, %s437
      %p451 = scmp.eq.s32.totalorder %s37, 3
      %p452 = por %p450, %p451
      %p454 = scmp.ne.s32.totalorder %s437, %s453
      %p455 = scmp.eq.s32.totalorder %s37, 0
      %p456 = por %p454, %p455
      %s457 = ssub.s32 %s39, %s46
      %p458 = scmp.eq.s32.totalorder %s457, 0
      %s460 = sadd.s32 %s459, 1
      %s461 = scalar_select %p458, %s459, %s460
      %p464 = pneg %p458
      %p465 = scmp.eq.s32.totalorder %s31, 3
      %p466 = por %p464, %p465
      %p467 = scmp.ne.s32.totalorder %s459, %s462
      %p468 = scmp.eq.s32.totalorder %s31, 0
      %p469 = por %p467, %p468
      %p470 = scmp.ne.s32.totalorder %s459, %s462
      %p471 = scmp.eq.s32.totalorder %s36, 3
      %p472 = por %p470, %p471
      %p473 = scmp.ne.s32.totalorder %s462, %s463
      %p474 = scmp.eq.s32.totalorder %s36, 0
      %p475 = por %p473, %p474
      %p476 = scmp.ne.s32.totalorder %s462, %s463
      %p477 = scmp.eq.s32.totalorder %s37, 3
      %p478 = por %p476, %p477
      %p480 = scmp.ne.s32.totalorder %s463, %s479
      %p481 = scmp.eq.s32.totalorder %s37, 0
      %p482 = por %p480, %p481
      %s483 = ssub.s32 %s39, %s46
      %p484 = scmp.eq.s32.totalorder %s483, 0
      %s486 = sadd.s32 %s485, 1
      %s487 = scalar_select %p484, %s485, %s486
      %p490 = pneg %p484
      %p491 = scmp.eq.s32.totalorder %s31, 3
      %p492 = por %p490, %p491
      %p493 = scmp.ne.s32.totalorder %s485, %s488
      %p494 = scmp.eq.s32.totalorder %s31, 0
      %p495 = por %p493, %p494
      %p496 = scmp.ne.s32.totalorder %s485, %s488
      %p497 = scmp.eq.s32.totalorder %s36, 3
      %p498 = por %p496, %p497
      %p499 = scmp.ne.s32.totalorder %s488, %s489
      %p500 = scmp.eq.s32.totalorder %s36, 0
      %p501 = por %p499, %p500
      %p502 = scmp.ne.s32.totalorder %s488, %s489
      %p503 = scmp.eq.s32.totalorder %s37, 3
      %p504 = por %p502, %p503
      %p506 = scmp.ne.s32.totalorder %s489, %s505
      %p507 = scmp.eq.s32.totalorder %s37, 0
      %p508 = por %p506, %p507
      %s509 = ssub.s32 %s39, %s46
      %p510 = scmp.eq.s32.totalorder %s509, 0
      %s512 = sadd.s32 %s511, 1
      %s513 = scalar_select %p510, %s511, %s512
      %p516 = pneg %p510
      %p517 = scmp.eq.s32.totalorder %s31, 3
      %p518 = por %p516, %p517
      %p519 = scmp.ne.s32.totalorder %s511, %s514
      %p520 = scmp.eq.s32.totalorder %s31, 0
      %p521 = por %p519, %p520
      %p522 = scmp.ne.s32.totalorder %s511, %s514
      %p523 = scmp.eq.s32.totalorder %s36, 3
      %p524 = por %p522, %p523
      %p525 = scmp.ne.s32.totalorder %s514, %s515
      %p526 = scmp.eq.s32.totalorder %s36, 0
      %p527 = por %p525, %p526
      %p528 = scmp.ne.s32.totalorder %s514, %s515
      %p529 = scmp.eq.s32.totalorder %s37, 3
      %p530 = por %p528, %p529
      %p532 = scmp.ne.s32.totalorder %s515, %s531
      %p533 = scmp.eq.s32.totalorder %s37, 0
      %p534 = por %p532, %p533
      %s535 = ssub.s32 %s39, %s46
      %p536 = scmp.eq.s32.totalorder %s535, 0
      %s538 = sadd.s32 %s537, 1
      %s539 = scalar_select %p536, %s537, %s538
      %p542 = pneg %p536
      %p543 = scmp.eq.s32.totalorder %s31, 3
      %p544 = por %p542, %p543
      %p545 = scmp.ne.s32.totalorder %s537, %s540
      %p546 = scmp.eq.s32.totalorder %s31, 0
      %p547 = por %p545, %p546
      %p548 = scmp.ne.s32.totalorder %s537, %s540
      %p549 = scmp.eq.s32.totalorder %s36, 3
      %p550 = por %p548, %p549
      %p551 = scmp.ne.s32.totalorder %s540, %s541
      %p552 = scmp.eq.s32.totalorder %s36, 0
      %p553 = por %p551, %p552
      %p554 = scmp.ne.s32.totalorder %s540, %s541
      %p555 = scmp.eq.s32.totalorder %s37, 3
      %p556 = por %p554, %p555
      %p558 = scmp.ne.s32.totalorder %s541, %s557
      %p559 = scmp.eq.s32.totalorder %s37, 0
      %p560 = por %p558, %p559
      %s562 = sadd.s32 %s561, 1
      %p565 = scmp.eq.s32.totalorder %s31, 3
      %p566 = scmp.ne.s32.totalorder %s561, %s563
      %p567 = scmp.eq.s32.totalorder %s31, 0
      %p568 = por %p566, %p567
      %p569 = scmp.ne.s32.totalorder %s561, %s563
      %p570 = scmp.eq.s32.totalorder %s36, 3
      %p571 = por %p569, %p570
      %p572 = scmp.ne.s32.totalorder %s563, %s564
      %p573 = scmp.eq.s32.totalorder %s36, 0
      %p574 = por %p572, %p573
      %p575 = scmp.ne.s32.totalorder %s563, %s564
      %p576 = scmp.eq.s32.totalorder %s37, 3
      %p577 = por %p575, %p576
      %p579 = scmp.ne.s32.totalorder %s564, %s578
      %p580 = scmp.eq.s32.totalorder %s37, 0
      %p581 = por %p579, %p580
      %s583 = sadd.s32 %s582, 1
      %p586 = scmp.eq.s32.totalorder %s31, 3
      %p587 = scmp.ne.s32.totalorder %s582, %s584
      %p588 = scmp.eq.s32.totalorder %s31, 0
      %p589 = por %p587, %p588
      %p590 = scmp.ne.s32.totalorder %s582, %s584
      %p591 = scmp.eq.s32.totalorder %s36, 3
      %p592 = por %p590, %p591
      %p593 = scmp.ne.s32.totalorder %s584, %s585
      %p594 = scmp.eq.s32.totalorder %s36, 0
      %p595 = por %p593, %p594
      %p596 = scmp.ne.s32.totalorder %s584, %s585
      %p597 = scmp.eq.s32.totalorder %s37, 3
      %p598 = por %p596, %p597
      %p600 = scmp.ne.s32.totalorder %s585, %s599
      %p601 = scmp.eq.s32.totalorder %s37, 0
      %p602 = por %p600, %p601
      %s603 = ssub.s32 %s38, %s50
      %p604 = scmp.eq.s32.totalorder %s603, 0
      %s606 = sadd.s32 %s605, 1
      %s607 = scalar_select %p604, %s605, %s606
      %p610 = pneg %p604
      %p611 = scmp.eq.s32.totalorder %s31, 3
      %p612 = por %p610, %p611
      %p613 = scmp.ne.s32.totalorder %s605, %s608
      %p614 = scmp.eq.s32.totalorder %s31, 0
      %p615 = por %p613, %p614
      %p616 = scmp.ne.s32.totalorder %s605, %s608
      %p617 = scmp.eq.s32.totalorder %s36, 3
      %p618 = por %p616, %p617
      %p619 = scmp.ne.s32.totalorder %s608, %s609
      %p620 = scmp.eq.s32.totalorder %s36, 0
      %p621 = por %p619, %p620
      %p622 = scmp.ne.s32.totalorder %s608, %s609
      %p623 = scmp.eq.s32.totalorder %s37, 3
      %p624 = por %p622, %p623
      %p626 = scmp.ne.s32.totalorder %s609, %s625
      %p627 = scmp.eq.s32.totalorder %s37, 0
      %p628 = por %p626, %p627
      %p629 = scmp.le.s32.totalorder 1, %s31
      %p630 = scmp.lt.s32.totalorder %s31, 5
      %p631 = pnand %p629, %p630
      %p632 = pneg %p631
      // Predicated region
      $region9: #{transformer_forward.1} parent=5 // pred_check
        _
      $region10: #{transformer_forward.1} parent=5 // pred_check_branch
        %634 = sbr.rel (%p631) target = $region12
      $region11: #{transformer_forward.1} parent=5 // pred_region
        %s635 = ssub.s32 %s31, 1
        // Predicated region
        $region13: #{transformer_forward.1} parent=11 // pred_check
          %p636 = pneg %p90
        $region14: #{transformer_forward.1} parent=11 // pred_check_branch
          %638 = sbr.rel (%p636) target = $region16
        $region15: #{transformer_forward.1} parent=11 // pred_region
          _
        $region16: #{transformer_forward.1} parent=11 // pred_fallthru
          _
        // Predicated region
        $region17: #{transformer_forward.1} parent=11 // pred_check
          %p639 = pneg %p111
        $region18: #{transformer_forward.1} parent=11 // pred_check_branch
          %641 = sbr.rel (%p639) target = $region20
        $region19: #{transformer_forward.1} parent=11 // pred_region
          _
        $region20: #{transformer_forward.1} parent=11 // pred_fallthru
          _
        // Predicated region
        $region21: #{transformer_forward.1} parent=11 // pred_check
          %p642 = pneg %p574
        $region22: #{transformer_forward.1} parent=11 // pred_check_branch
          %644 = sbr.rel (%p642) target = $region24
        $region23: #{transformer_forward.1} parent=11 // pred_region
          _
        $region24: #{transformer_forward.1} parent=11 // pred_fallthru
          _
        // Predicated region
        $region25: #{transformer_forward.1} parent=11 // pred_check
          %p645 = pneg %p595
        $region26: #{transformer_forward.1} parent=11 // pred_check_branch
          %647 = sbr.rel (%p645) target = $region28
        $region27: #{transformer_forward.1} parent=11 // pred_region
          _
        $region28: #{transformer_forward.1} parent=11 // pred_fallthru
          _
      $region12: #{transformer_forward.1} parent=5 // pred_fallthru
        _
      %p648 = scmp.lt.s32.totalorder %s31, 4
      // Predicated region
      $region29: #{transformer_forward.1} parent=5 // pred_check
        %p649 = pneg %p648
      $region30: #{transformer_forward.1} parent=5 // pred_check_branch
        %651 = sbr.rel (%p649) target = $region32
      $region31: #{transformer_forward.1} parent=5 // pred_region
        // Predicated region
        $region33: #{transformer_forward.1} parent=31 // pred_check
          %p652 = pneg %p63
        $region34: #{transformer_forward.1} parent=31 // pred_check_branch
          %654 = sbr.rel (%p652) target = $region36
        $region35: #{transformer_forward.1} parent=31 // pred_region
          %p655 = scmp.lt.s32.totalorder %s38, 1
          %s656 = scalar_select %p655, %s38, 1
          %s657 = smul.addr %s656, 2
          %s658 = smul.addr %s657, 8
          %s659 = scalar_lea.vmem %s0, %s658
        $region36: #{transformer_forward.1} parent=31 // pred_fallthru
          _
        // Predicated region
        $region37: #{transformer_forward.1} parent=31 // pred_check
          %p660 = pneg %p131
        $region38: #{transformer_forward.1} parent=31 // pred_check_branch
          %662 = sbr.rel (%p660) target = $region40
        $region39: #{transformer_forward.1} parent=31 // pred_region
          %p663 = scmp.lt.s32.totalorder %s38, 1
          %s664 = scalar_select %p663, %s38, 1
          %s665 = scalar_lea.vmem %s3, %s664
        $region40: #{transformer_forward.1} parent=31 // pred_fallthru
          _
        // Predicated region
        $region41: #{transformer_forward.1} parent=31 // pred_check
          %p666 = pneg %p157
        $region42: #{transformer_forward.1} parent=31 // pred_check_branch
          %668 = sbr.rel (%p666) target = $region44
        $region43: #{transformer_forward.1} parent=31 // pred_region
          %p669 = scmp.lt.s32.totalorder %s39, 1
          %s670 = scalar_select %p669, %s39, 1
          %s671 = smul.addr %s670, 4
          %s672 = smul.addr %s671, 4
          %s673 = scalar_lea.vmem %s4, %s672
        $region44: #{transformer_forward.1} parent=31 // pred_fallthru
          _
        // Predicated region
        $region45: #{transformer_forward.1} parent=31 // pred_check
          %p674 = pneg %p183
        $region46: #{transformer_forward.1} parent=31 // pred_check_branch
          %676 = sbr.rel (%p674) target = $region48
        $region47: #{transformer_forward.1} parent=31 // pred_region
          %p677 = scmp.lt.s32.totalorder %s39, 1
          %s678 = scalar_select %p677, %s39, 1
          %s679 = scalar_lea.vmem %s5, %s678
        $region48: #{transformer_forward.1} parent=31 // pred_fallthru
          _
        // Predicated region
        $region49: #{transformer_forward.1} parent=31 // pred_check
          %p680 = pneg %p209
        $region50: #{transformer_forward.1} parent=31 // pred_check_branch
          %682 = sbr.rel (%p680) target = $region52
        $region51: #{transformer_forward.1} parent=31 // pred_region
          %p683 = scmp.lt.s32.totalorder %s39, 1
          %s684 = scalar_select %p683, %s39, 1
          %s685 = smul.addr %s684, 4
          %s686 = smul.addr %s685, 4
          %s687 = scalar_lea.vmem %s6, %s686
        $region52: #{transformer_forward.1} parent=31 // pred_fallthru
          _
        // Predicated region
        $region53: #{transformer_forward.1} parent=31 // pred_check
          %p688 = pneg %p235
        $region54: #{transformer_forward.1} parent=31 // pred_check_branch
          %690 = sbr.rel (%p688) target = $region56
        $region55: #{transformer_forward.1} parent=31 // pred_region
          %p691 = scmp.lt.s32.totalorder %s39, 1
          %s692 = scalar_select %p691, %s39, 1
          %s693 = scalar_lea.vmem %s7, %s692
        $region56: #{transformer_forward.1} parent=31 // pred_fallthru
          _
        // Predicated region
        $region57: #{transformer_forward.1} parent=31 // pred_check
          %p694 = pneg %p261
        $region58: #{transformer_forward.1} parent=31 // pred_check_branch
          %696 = sbr.rel (%p694) target = $region60
        $region59: #{transformer_forward.1} parent=31 // pred_region
          %p697 = scmp.lt.s32.totalorder %s39, 1
          %s698 = scalar_select %p697, %s39, 1
          %s699 = smul.addr %s698, 4
          %s700 = smul.addr %s699, 4
          %s701 = scalar_lea.vmem %s8, %s700
        $region60: #{transformer_forward.1} parent=31 // pred_fallthru
          _
        // Predicated region
        $region61: #{transformer_forward.1} parent=31 // pred_check
          %p702 = pneg %p287
        $region62: #{transformer_forward.1} parent=31 // pred_check_branch
          %704 = sbr.rel (%p702) target = $region64
        $region63: #{transformer_forward.1} parent=31 // pred_region
          %p705 = scmp.lt.s32.totalorder %s39, 1
          %s706 = scalar_select %p705, %s39, 1
          %s707 = scalar_lea.vmem %s9, %s706
        $region64: #{transformer_forward.1} parent=31 // pred_fallthru
          _
        // Predicated region
        $region65: #{transformer_forward.1} parent=31 // pred_check
          %p708 = pneg %p313
        $region66: #{transformer_forward.1} parent=31 // pred_check_branch
          %710 = sbr.rel (%p708) target = $region68
        $region67: #{transformer_forward.1} parent=31 // pred_region
          %p711 = scmp.lt.s32.totalorder %s39, 1
          %s712 = scalar_select %p711, %s39, 1
          %s713 = smul.addr %s712, 4
          %s714 = smul.addr %s713, 4
          %s715 = scalar_lea.vmem %s10, %s714
        $region68: #{transformer_forward.1} parent=31 // pred_fallthru
          _
        // Predicated region
        $region69: #{transformer_forward.1} parent=31 // pred_check
          %p716 = pneg %p339
        $region70: #{transformer_forward.1} parent=31 // pred_check_branch
          %718 = sbr.rel (%p716) target = $region72
        $region71: #{transformer_forward.1} parent=31 // pred_region
          %p719 = scmp.lt.s32.totalorder %s39, 1
          %s720 = scalar_select %p719, %s39, 1
          %s721 = scalar_lea.vmem %s11, %s720
        $region72: #{transformer_forward.1} parent=31 // pred_fallthru
          _
        // Predicated region
        $region73: #{transformer_forward.1} parent=31 // pred_check
          %p722 = pneg %p365
        $region74: #{transformer_forward.1} parent=31 // pred_check_branch
          %724 = sbr.rel (%p722) target = $region76
        $region75: #{transformer_forward.1} parent=31 // pred_region
          %p725 = scmp.lt.s32.totalorder %s39, 1
          %s726 = scalar_select %p725, %s39, 1
          %s727 = scalar_lea.vmem %s12, %s726
        $region76: #{transformer_forward.1} parent=31 // pred_fallthru
          _
        // Predicated region
        $region77: #{transformer_forward.1} parent=31 // pred_check
          %p728 = pneg %p391
        $region78: #{transformer_forward.1} parent=31 // pred_check_branch
          %730 = sbr.rel (%p728) target = $region80
        $region79: #{transformer_forward.1} parent=31 // pred_region
          %p731 = scmp.lt.s32.totalorder %s39, 1
          %s732 = scalar_select %p731, %s39, 1
          %s733 = scalar_lea.vmem %s13, %s732
        $region80: #{transformer_forward.1} parent=31 // pred_fallthru
          _
        // Predicated region
        $region81: #{transformer_forward.1} parent=31 // pred_check
          %p734 = pneg %p417
        $region82: #{transformer_forward.1} parent=31 // pred_check_branch
          %736 = sbr.rel (%p734) target = $region84
        $region83: #{transformer_forward.1} parent=31 // pred_region
          %p737 = scmp.lt.s32.totalorder %s39, 1
          %s738 = scalar_select %p737, %s39, 1
          %s739 = smul.addr %s738, 4
          %s740 = smul.addr %s739, 4
          %s741 = scalar_lea.vmem %s14, %s740
        $region84: #{transformer_forward.1} parent=31 // pred_fallthru
          _
        // Predicated region
        $region85: #{transformer_forward.1} parent=31 // pred_check
          %p742 = pneg %p443
        $region86: #{transformer_forward.1} parent=31 // pred_check_branch
          %744 = sbr.rel (%p742) target = $region88
        $region87: #{transformer_forward.1} parent=31 // pred_region
          %p745 = scmp.lt.s32.totalorder %s39, 1
          %s746 = scalar_select %p745, %s39, 1
          %s747 = scalar_lea.vmem %s15, %s746
        $region88: #{transformer_forward.1} parent=31 // pred_fallthru
          _
        // Predicated region
        $region89: #{transformer_forward.1} parent=31 // pred_check
          %p748 = pneg %p469
        $region90: #{transformer_forward.1} parent=31 // pred_check_branch
          %750 = sbr.rel (%p748) target = $region92
        $region91: #{transformer_forward.1} parent=31 // pred_region
          %p751 = scmp.lt.s32.totalorder %s39, 1
          %s752 = scalar_select %p751, %s39, 1
          %s753 = smul.addr %s752, 8
          %s754 = smul.addr %s753, 4
          %s755 = scalar_lea.vmem %s16, %s754
        $region92: #{transformer_forward.1} parent=31 // pred_fallthru
          _
        // Predicated region
        $region93: #{transformer_forward.1} parent=31 // pred_check
          %p756 = pneg %p495
        $region94: #{transformer_forward.1} parent=31 // pred_check_branch
          %758 = sbr.rel (%p756) target = $region96
        $region95: #{transformer_forward.1} parent=31 // pred_region
          %p759 = scmp.lt.s32.totalorder %s39, 1
          %s760 = scalar_select %p759, %s39, 1
          %s761 = scalar_lea.vmem %s17, %s760
        $region96: #{transformer_forward.1} parent=31 // pred_fallthru
          _
        // Predicated region
        $region97: #{transformer_forward.1} parent=31 // pred_check
          %p762 = pneg %p521
        $region98: #{transformer_forward.1} parent=31 // pred_check_branch
          %764 = sbr.rel (%p762) target = $region100
        $region99: #{transformer_forward.1} parent=31 // pred_region
          %p765 = scmp.lt.s32.totalorder %s39, 1
          %s766 = scalar_select %p765, %s39, 1
          %s767 = scalar_lea.vmem %s18, %s766
        $region100: #{transformer_forward.1} parent=31 // pred_fallthru
          _
        // Predicated region
        $region101: #{transformer_forward.1} parent=31 // pred_check
          %p768 = pneg %p547
        $region102: #{transformer_forward.1} parent=31 // pred_check_branch
          %770 = sbr.rel (%p768) target = $region104
        $region103: #{transformer_forward.1} parent=31 // pred_region
          %p771 = scmp.lt.s32.totalorder %s39, 1
          %s772 = scalar_select %p771, %s39, 1
          %s773 = scalar_lea.vmem %s19, %s772
        $region104: #{transformer_forward.1} parent=31 // pred_fallthru
          _
      $region32: #{transformer_forward.1} parent=5 // pred_fallthru
        _
      %p774 = scmp.le.s32.totalorder 1, %s31
      %p775 = scmp.lt.s32.totalorder %s31, 5
      %p776 = pnand %p774, %p775
      %p777 = pneg %p776
      // Predicated region
      $region105: #{transformer_forward.1} parent=5 // pred_check
        _
      $region106: #{transformer_forward.1} parent=5 // pred_check_branch
        %779 = sbr.rel (%p776) target = $region108
      $region107: #{transformer_forward.1} parent=5 // pred_region
        %s780 = ssub.s32 %s31, 1
        %p781 = scmp.lt.s32.totalorder %s40, 1
        %s782 = scalar_select %p781, %s40, 1
        %s783 = smul.addr %s782, 2
        %s784 = smul.addr %s783, 8
        %s785 = scalar_lea.vmem %s0, %s784
        %p786 = pneg %p69
        %p787 = pneg %p66
        %p788 = pneg %p90
        %p789 = pneg %p87
        %p790 = pneg %p111
        %p791 = pneg %p108
        %p792 = scmp.lt.s32.totalorder %s40, 1
        %s793 = scalar_select %p792, %s40, 1
        %s794 = scalar_lea.vmem %s3, %s793
        %p795 = pneg %p137
        %p796 = pneg %p134
        %p797 = scmp.lt.s32.totalorder %s41, 1
        %s798 = scalar_select %p797, %s41, 1
        %s799 = smul.addr %s798, 4
        %s800 = smul.addr %s799, 4
        %s801 = scalar_lea.vmem %s4, %s800
        %p802 = pneg %p163
        %p803 = pneg %p160
        %p804 = scmp.lt.s32.totalorder %s41, 1
        %s805 = scalar_select %p804, %s41, 1
        %s806 = scalar_lea.vmem %s5, %s805
        %p807 = pneg %p189
        %p808 = pneg %p186
        %p809 = scmp.lt.s32.totalorder %s41, 1
        %s810 = scalar_select %p809, %s41, 1
        %s811 = smul.addr %s810, 4
        %s812 = smul.addr %s811, 4
        %s813 = scalar_lea.vmem %s6, %s812
        %p814 = pneg %p215
        %p815 = pneg %p212
        %p816 = scmp.lt.s32.totalorder %s41, 1
        %s817 = scalar_select %p816, %s41, 1
        %s818 = scalar_lea.vmem %s7, %s817
        %p819 = pneg %p241
        %p820 = pneg %p238
        %p821 = scmp.lt.s32.totalorder %s41, 1
        %s822 = scalar_select %p821, %s41, 1
        %s823 = smul.addr %s822, 4
        %s824 = smul.addr %s823, 4
        %s825 = scalar_lea.vmem %s8, %s824
        %p826 = pneg %p267
        %p827 = pneg %p264
        %p828 = scmp.lt.s32.totalorder %s41, 1
        %s829 = scalar_select %p828, %s41, 1
        %s830 = scalar_lea.vmem %s9, %s829
        %p831 = pneg %p293
        %p832 = pneg %p290
        %p833 = scmp.lt.s32.totalorder %s41, 1
        %s834 = scalar_select %p833, %s41, 1
        %s835 = smul.addr %s834, 4
        %s836 = smul.addr %s835, 4
        %s837 = scalar_lea.vmem %s10, %s836
        %p838 = pneg %p319
        %p839 = pneg %p316
        %p840 = scmp.lt.s32.totalorder %s41, 1
        %s841 = scalar_select %p840, %s41, 1
        %s842 = scalar_lea.vmem %s11, %s841
        %p843 = pneg %p345
        %p844 = pneg %p342
        %p845 = scmp.lt.s32.totalorder %s41, 1
        %s846 = scalar_select %p845, %s41, 1
        %s847 = scalar_lea.vmem %s12, %s846
        %p848 = pneg %p371
        %p849 = pneg %p368
        %p850 = scmp.lt.s32.totalorder %s41, 1
        %s851 = scalar_select %p850, %s41, 1
        %s852 = scalar_lea.vmem %s13, %s851
        %p853 = pneg %p397
        %p854 = pneg %p394
        %p855 = scmp.lt.s32.totalorder %s41, 1
        %s856 = scalar_select %p855, %s41, 1
        %s857 = smul.addr %s856, 4
        %s858 = smul.addr %s857, 4
        %s859 = scalar_lea.vmem %s14, %s858
        %p860 = pneg %p423
        %p861 = pneg %p420
        %p862 = scmp.lt.s32.totalorder %s41, 1
        %s863 = scalar_select %p862, %s41, 1
        %s864 = scalar_lea.vmem %s15, %s863
        %p865 = pneg %p449
        %p866 = pneg %p446
        %p867 = scmp.lt.s32.totalorder %s41, 1
        %s868 = scalar_select %p867, %s41, 1
        %s869 = smul.addr %s868, 8
        %s870 = smul.addr %s869, 4
        %s871 = scalar_lea.vmem %s16, %s870
        %p872 = pneg %p475
        %p873 = pneg %p472
        %p874 = scmp.lt.s32.totalorder %s41, 1
        %s875 = scalar_select %p874, %s41, 1
        %s876 = scalar_lea.vmem %s17, %s875
        %p877 = pneg %p501
        %p878 = pneg %p498
        %p879 = scmp.lt.s32.totalorder %s41, 1
        %s880 = scalar_select %p879, %s41, 1
        %s881 = scalar_lea.vmem %s18, %s880
        %p882 = pneg %p527
        %p883 = pneg %p524
        %p884 = scmp.lt.s32.totalorder %s41, 1
        %s885 = scalar_select %p884, %s41, 1
        %s886 = scalar_lea.vmem %s19, %s885
        %p887 = pneg %p553
        %p888 = pneg %p550
        %p889 = pneg %p574
        %p890 = pneg %p571
        %p891 = pneg %p595
        %p892 = pneg %p592
        %p893 = pneg %p621
        %p894 = pneg %p618
        %s895 = sand.u32 %s608, 1
        %s896 = scalar_lea.sflag [#allocation4], %s895
        %s897 = sand.u32 %s608, 1
        %s898 = scalar_lea.vmem [#allocation3], %s897
        %p899 = scmp.lt.s32.totalorder %s40, 1
        %s900 = scalar_select %p899, %s40, 1
        %s901 = smul.addr %s900, 2
        %s902 = smul.addr %s901, 8
        %s903 = scalar_lea.vmem %s0, %s902
        %p904 = scmp.lt.s32.totalorder %s40, 1
        %s905 = scalar_select %p904, %s40, 1
        %s906 = scalar_lea.vmem %s3, %s905
        %p907 = scmp.lt.s32.totalorder %s41, 1
        %s908 = scalar_select %p907, %s41, 1
        %s909 = smul.addr %s908, 4
        %s910 = smul.addr %s909, 4
        %s911 = scalar_lea.vmem %s4, %s910
        %p912 = scmp.lt.s32.totalorder %s41, 1
        %s913 = scalar_select %p912, %s41, 1
        %s914 = scalar_lea.vmem %s5, %s913
        %p915 = scmp.lt.s32.totalorder %s41, 1
        %s916 = scalar_select %p915, %s41, 1
        %s917 = smul.addr %s916, 4
        %s918 = smul.addr %s917, 4
        %s919 = scalar_lea.vmem %s6, %s918
        %p920 = scmp.lt.s32.totalorder %s41, 1
        %s921 = scalar_select %p920, %s41, 1
        %s922 = scalar_lea.vmem %s7, %s921
        %p923 = scmp.lt.s32.totalorder %s41, 1
        %s924 = scalar_select %p923, %s41, 1
        %s925 = smul.addr %s924, 4
        %s926 = smul.addr %s925, 4
        %s927 = scalar_lea.vmem %s8, %s926
        %p928 = scmp.lt.s32.totalorder %s41, 1
        %s929 = scalar_select %p928, %s41, 1
        %s930 = scalar_lea.vmem %s9, %s929
        %p931 = scmp.lt.s32.totalorder %s41, 1
        %s932 = scalar_select %p931, %s41, 1
        %s933 = smul.addr %s932, 4
        %s934 = smul.addr %s933, 4
        %s935 = scalar_lea.vmem %s10, %s934
        %p936 = scmp.lt.s32.totalorder %s41, 1
        %s937 = scalar_select %p936, %s41, 1
        %s938 = scalar_lea.vmem %s11, %s937
        %p939 = scmp.lt.s32.totalorder %s41, 1
        %s940 = scalar_select %p939, %s41, 1
        %s941 = scalar_lea.vmem %s12, %s940
        %p942 = scmp.lt.s32.totalorder %s41, 1
        %s943 = scalar_select %p942, %s41, 1
        %s944 = scalar_lea.vmem %s13, %s943
        %p945 = scmp.lt.s32.totalorder %s41, 1
        %s946 = scalar_select %p945, %s41, 1
        %s947 = smul.addr %s946, 4
        %s948 = smul.addr %s947, 4
        %s949 = scalar_lea.vmem %s14, %s948
        %p950 = scmp.lt.s32.totalorder %s41, 1
        %s951 = scalar_select %p950, %s41, 1
        %s952 = scalar_lea.vmem %s15, %s951
        %p953 = scmp.lt.s32.totalorder %s41, 1
        %s954 = scalar_select %p953, %s41, 1
        %s955 = smul.addr %s954, 8
        %s956 = smul.addr %s955, 4
        %s957 = scalar_lea.vmem %s16, %s956
        %p958 = scmp.lt.s32.totalorder %s41, 1
        %s959 = scalar_select %p958, %s41, 1
        %s960 = scalar_lea.vmem %s17, %s959
        %p961 = scmp.lt.s32.totalorder %s41, 1
        %s962 = scalar_select %p961, %s41, 1
        %s963 = scalar_lea.vmem %s18, %s962
        %p964 = scmp.lt.s32.totalorder %s41, 1
        %s965 = scalar_select %p964, %s41, 1
        %s966 = scalar_lea.vmem %s19, %s965
        %p968 = scmp.eq.s32.totalorder %s41, 0
        // Predicated region
        $region109: #{transformer_forward.1} parent=107 // pred_check
          %p969 = pneg %p968
        $region110: #{transformer_forward.1} parent=107 // pred_check_branch
          %971 = sbr.rel (%p969) target = $region112
        $region111: #{transformer_forward.1} parent=107 // pred_region
          %v972 = vld [vmem:[%s903] sm:$0xff]
          %v973 = vld [vmem:[%s903 + $0x8] sm:$0xff]
          %v974 = vld [vmem:[%s1] sm:$0x3]
          %v975 = vpack.c.bf16 %v973, %v972
          %v976 = vld [vmem:[%s2] sm:$0x1]
          %v978 = vlaneseq
          %v979 = vshrl.u32 %v978, 7
          %v980 = vsub.s32 0, %v979
          %v981 = vrot.slane %v976, %v980
          %vm983 = vcmask 31744
          %v985 = vsel %vm983, %v975, 0
          %vm987 = vcmask 1041408
          %v989 = vsel %vm987, %v974, 0
          %991 = vmatprep.subr.bf16.mxu0 0
          %992 = vmatpush1.bf16.msra.mxu0 %v989
          %993 = vmatprep.subr.bf16.mxu0 0
          %994 = vmatpush1.bf16.msra.mxu0 0
          %995 = vmatprep.subr.bf16.mxu0 0
          %996 = vmatpush1.bf16.msra.mxu0 0
          %997 = vmatprep.subr.bf16.mxu0 0
          %998 = vmatpush1.bf16.msra.mxu0 0
          %999 = vmatprep.subr.bf16.mxu0 0
          %1000 = vmatpush1.bf16.msra.mxu0 0
          %1001 = vmatprep.subr.bf16.mxu0 0
          %1002 = vmatpush1.bf16.msra.mxu0 0
          %1003 = vmatprep.subr.bf16.mxu0 0
          %1004 = vmatpush1.bf16.msra.mxu0 0
          %1005 = vmatprep.subr.bf16.mxu0 0
          %1006 = vmatpush1.bf16.msra.mxu0 0
          %1007 = vmatprep.subr.bf16.mxu0 0
          %1008 = vmatpush1.bf16.msra.mxu0 0
          %1009 = vmatprep.subr.bf16.mxu0 0
          %1010 = vmatpush1.bf16.msra.mxu0 0
          %1011 = vmatprep.subr.bf16.mxu0 0
          %1012 = vmatpush1.bf16.msra.mxu0 0
          %1013 = vmatprep.subr.bf16.mxu0 0
          %1014 = vmatpush1.bf16.msra.mxu0 0
          %1015 = vmatprep.subr.bf16.mxu0 0
          %1016 = vmatpush1.bf16.msra.mxu0 0
          %1017 = vmatprep.subr.bf16.mxu0 0
          %1018 = vmatpush1.bf16.msra.mxu0 0
          %1019 = vmatprep.subr.bf16.mxu0 0
          %1020 = vmatpush1.bf16.msra.mxu0 0
          %1021 = vmatprep.subr.bf16.mxu0 0
          %1022 = vmatpush1.bf16.msra.mxu0 0
          %1023 = vmatprep.mubr.bf16.mxu0 0
          %1024 = vmatmul.mubr.bf16.gmra.mrb[0].mxu0 %v985
          %v1025 = vpop.f32.mrb[0].mxu0
          %v1026 = vadd.f32 %v981, %v1025
          %v1027 = vpop.f32.mrb[0].mxu0
          %v1028 = vpop.f32.mrb[0].mxu0
          %v1029 = vadd.f32 %v981, %v1028
          %v1030 = vpop.f32.mrb[0].mxu0
          %1031 = vdwg.mxu0
          %v1032 = vld [vmem:[%s906] sm:$0x1]
          %v1034 = vlaneseq
          %v1035 = vshrl.u32 %v1034, 7
          %v1036 = vsub.s32 0, %v1035
          %v1037 = vrot.slane %v1032, %v1036
          %v1039 = vadd.f32 %v1026, %v1037
          %v1040 = vadd.f32 %v1029, %v1037
          %vm1041 = vcmask 261120
          %1042 = vst.msk [vmem:[#allocation2] sm:$0xff] %vm1041, %v1039
          %1043 = vst.msk [vmem:[#allocation2 + $0x8] sm:$0xff] %vm1041, %v1040
        $region112: #{transformer_forward.1} parent=107 // pred_fallthru
          _
        %v1044 = vld [vmem:[#allocation2] sm:$0xff]
        %v1045 = vld [vmem:[#allocation2 + $0x8] sm:$0xff]
        %v1046 = vld [vmem:[%s911] sm:$0xf]
        %v1047 = vld [vmem:[%s911 + $0x4] sm:$0xf]
        %v1048 = vld [vmem:[%s911 + $0x8] sm:$0xf]
        %v1049 = vld [vmem:[%s911 + $0xc] sm:$0xf]
        %v1050 = vpack.c.bf16 %v1045, %v1044
        %v1051 = vld [vmem:[%s914] sm:$0x1]
        %v1053 = vlaneseq
        %v1054 = vshrl.u32 %v1053, 7
        %v1055 = vsub.s32 0, %v1054
        %v1056 = vrot.slane %v1051, %v1055
        %v1062 = vunpack.c.l.b16 %v1046
        %v1063 = vunpack.c.l.b16 %v1047
        %v1064 = vunpack.c.l.b16 %v1048
        %v1065 = vunpack.c.l.b16 %v1049
        %v1066 = vpack.c.b16 %v1063, %v1062
        %v1067 = vpack.c.b16 %v1065, %v1064
        %vm1070 = vcmask 261120
        %v1072 = vsel %vm1070, %v1050, 0
        %1074 = vmatprep.subr.bf16.mxu0 0
        %1075 = vmatpush1.bf16.msra.mxu0 %v1066
        %1076 = vmatprep.subr.bf16.mxu0 0
        %1077 = vmatpush1.bf16.msra.mxu0 %v1067
        %1078 = vmatprep.subr.bf16.mxu0 0
        %1079 = vmatpush1.bf16.msra.mxu0 0
        %1080 = vmatprep.subr.bf16.mxu0 0
        %1081 = vmatpush1.bf16.msra.mxu0 0
        %1082 = vmatprep.subr.bf16.mxu0 0
        %1083 = vmatpush1.bf16.msra.mxu0 0
        %1084 = vmatprep.subr.bf16.mxu0 0
        %1085 = vmatpush1.bf16.msra.mxu0 0
        %1086 = vmatprep.subr.bf16.mxu0 0
        %1087 = vmatpush1.bf16.msra.mxu0 0
        %1088 = vmatprep.subr.bf16.mxu0 0
        %1089 = vmatpush1.bf16.msra.mxu0 0
        %1090 = vmatprep.subr.bf16.mxu0 0
        %1091 = vmatpush1.bf16.msra.mxu0 0
        %1092 = vmatprep.subr.bf16.mxu0 0
        %1093 = vmatpush1.bf16.msra.mxu0 0
        %1094 = vmatprep.subr.bf16.mxu0 0
        %1095 = vmatpush1.bf16.msra.mxu0 0
        %1096 = vmatprep.subr.bf16.mxu0 0
        %1097 = vmatpush1.bf16.msra.mxu0 0
        %1098 = vmatprep.subr.bf16.mxu0 0
        %1099 = vmatpush1.bf16.msra.mxu0 0
        %1100 = vmatprep.subr.bf16.mxu0 0
        %1101 = vmatpush1.bf16.msra.mxu0 0
        %1102 = vmatprep.subr.bf16.mxu0 0
        %1103 = vmatpush1.bf16.msra.mxu0 0
        %1104 = vmatprep.subr.bf16.mxu0 0
        %1105 = vmatpush1.bf16.msra.mxu0 0
        %1106 = vmatprep.mubr.bf16.mxu0 0
        %1107 = vmatmul.mubr.bf16.gmra.mrb[0].mxu0 %v1072
        %v1108 = vpop.f32.mrb[0].mxu0
        %v1109 = vadd.f32 %v1056, %v1108
        %v1110 = vpop.f32.mrb[0].mxu0
        %v1111 = vpop.f32.mrb[0].mxu0
        %v1112 = vadd.f32 %v1056, %v1111
        %v1113 = vpop.f32.mrb[0].mxu0
        %1114 = vdwg.mxu0
        %v1115 = vld [vmem:[%s919] sm:$0xf]
        %v1116 = vld [vmem:[%s919 + $0x4] sm:$0xf]
        %v1117 = vld [vmem:[%s919 + $0x8] sm:$0xf]
        %v1118 = vld [vmem:[%s919 + $0xc] sm:$0xf]
        %v1119 = vld [vmem:[%s922] sm:$0x1]
        %v1121 = vlaneseq
        %v1122 = vshrl.u32 %v1121, 7
        %v1123 = vsub.s32 0, %v1122
        %v1124 = vrot.slane %v1119, %v1123
        %v1130 = vunpack.c.l.b16 %v1115
        %v1131 = vunpack.c.l.b16 %v1116
        %v1132 = vunpack.c.l.b16 %v1117
        %v1133 = vunpack.c.l.b16 %v1118
        %v1134 = vpack.c.b16 %v1131, %v1130
        %v1135 = vpack.c.b16 %v1133, %v1132
        %1138 = vmatprep.subr.bf16.mxu0 0
        %1139 = vmatpush1.bf16.msra.mxu0 %v1134
        %1140 = vmatprep.subr.bf16.mxu0 0
        %1141 = vmatpush1.bf16.msra.mxu0 %v1135
        %1142 = vmatprep.subr.bf16.mxu0 0
        %1143 = vmatpush1.bf16.msra.mxu0 0
        %1144 = vmatprep.subr.bf16.mxu0 0
        %1145 = vmatpush1.bf16.msra.mxu0 0
        %1146 = vmatprep.subr.bf16.mxu0 0
        %1147 = vmatpush1.bf16.msra.mxu0 0
        %1148 = vmatprep.subr.bf16.mxu0 0
        %1149 = vmatpush1.bf16.msra.mxu0 0
        %1150 = vmatprep.subr.bf16.mxu0 0
        %1151 = vmatpush1.bf16.msra.mxu0 0
        %1152 = vmatprep.subr.bf16.mxu0 0
        %1153 = vmatpush1.bf16.msra.mxu0 0
        %1154 = vmatprep.subr.bf16.mxu0 0
        %1155 = vmatpush1.bf16.msra.mxu0 0
        %1156 = vmatprep.subr.bf16.mxu0 0
        %1157 = vmatpush1.bf16.msra.mxu0 0
        %1158 = vmatprep.subr.bf16.mxu0 0
        %1159 = vmatpush1.bf16.msra.mxu0 0
        %1160 = vmatprep.subr.bf16.mxu0 0
        %1161 = vmatpush1.bf16.msra.mxu0 0
        %1162 = vmatprep.subr.bf16.mxu0 0
        %1163 = vmatpush1.bf16.msra.mxu0 0
        %1164 = vmatprep.subr.bf16.mxu0 0
        %1165 = vmatpush1.bf16.msra.mxu0 0
        %1166 = vmatprep.subr.bf16.mxu0 0
        %1167 = vmatpush1.bf16.msra.mxu0 0
        %1168 = vmatprep.subr.bf16.mxu0 0
        %1169 = vmatpush1.bf16.msra.mxu0 0
        %1170 = vmatprep.mubr.bf16.mxu0 0
        %1171 = vmatmul.mubr.bf16.gmra.mrb[0].mxu0 %v1072
        %v1172 = vpop.f32.mrb[0].mxu0
        %v1173 = vadd.f32 %v1124, %v1172
        %v1174 = vpop.f32.mrb[0].mxu0
        %v1175 = vpop.f32.mrb[0].mxu0
        %v1176 = vadd.f32 %v1124, %v1175
        %v1177 = vpop.f32.mrb[0].mxu0
        %1178 = vdwg.mxu0
        %v1179 = vld [vmem:[%s927] sm:$0xf]
        %v1180 = vld [vmem:[%s927 + $0x4] sm:$0xf]
        %v1181 = vld [vmem:[%s927 + $0x8] sm:$0xf]
        %v1182 = vld [vmem:[%s927 + $0xc] sm:$0xf]
        %v1183 = vld [vmem:[%s930] sm:$0x1]
        %v1185 = vlaneseq
        %v1186 = vshrl.u32 %v1185, 7
        %v1187 = vsub.s32 0, %v1186
        %v1188 = vrot.slane %v1183, %v1187
        %v1194 = vunpack.c.l.b16 %v1179
        %v1195 = vunpack.c.l.b16 %v1180
        %v1196 = vunpack.c.l.b16 %v1181
        %v1197 = vunpack.c.l.b16 %v1182
        %v1198 = vpack.c.b16 %v1195, %v1194
        %v1199 = vpack.c.b16 %v1197, %v1196
        %1202 = vmatprep.subr.bf16.mxu0 0
        %1203 = vmatpush1.bf16.msra.mxu0 %v1198
        %1204 = vmatprep.subr.bf16.mxu0 0
        %1205 = vmatpush1.bf16.msra.mxu0 %v1199
        %1206 = vmatprep.subr.bf16.mxu0 0
        %1207 = vmatpush1.bf16.msra.mxu0 0
        %1208 = vmatprep.subr.bf16.mxu0 0
        %1209 = vmatpush1.bf16.msra.mxu0 0
        %1210 = vmatprep.subr.bf16.mxu0 0
        %1211 = vmatpush1.bf16.msra.mxu0 0
        %1212 = vmatprep.subr.bf16.mxu0 0
        %1213 = vmatpush1.bf16.msra.mxu0 0
        %1214 = vmatprep.subr.bf16.mxu0 0
        %1215 = vmatpush1.bf16.msra.mxu0 0
        %1216 = vmatprep.subr.bf16.mxu0 0
        %1217 = vmatpush1.bf16.msra.mxu0 0
        %1218 = vmatprep.subr.bf16.mxu0 0
        %1219 = vmatpush1.bf16.msra.mxu0 0
        %1220 = vmatprep.subr.bf16.mxu0 0
        %1221 = vmatpush1.bf16.msra.mxu0 0
        %1222 = vmatprep.subr.bf16.mxu0 0
        %1223 = vmatpush1.bf16.msra.mxu0 0
        %1224 = vmatprep.subr.bf16.mxu0 0
        %1225 = vmatpush1.bf16.msra.mxu0 0
        %1226 = vmatprep.subr.bf16.mxu0 0
        %1227 = vmatpush1.bf16.msra.mxu0 0
        %1228 = vmatprep.subr.bf16.mxu0 0
        %1229 = vmatpush1.bf16.msra.mxu0 0
        %1230 = vmatprep.subr.bf16.mxu0 0
        %1231 = vmatpush1.bf16.msra.mxu0 0
        %1232 = vmatprep.subr.bf16.mxu0 0
        %1233 = vmatpush1.bf16.msra.mxu0 0
        %1234 = vmatprep.mubr.bf16.mxu0 0
        %1235 = vmatmul.mubr.bf16.gmra.mrb[0].mxu0 %v1072
        %v1236 = vpop.f32.mrb[0].mxu0
        %v1237 = vadd.f32 %v1188, %v1236
        %v1238 = vpop.f32.mrb[0].mxu0
        %v1239 = vpop.f32.mrb[0].mxu0
        %v1240 = vadd.f32 %v1188, %v1239
        %v1241 = vpop.f32.mrb[0].mxu0
        %1242 = vdwg.mxu0
        %1245 = vrot.lane.b32.xlu0 %v1109, 120
        %v1246 = vpop.permute.xlu0 %1245
        %1247 = vrot.lane.b32.xlu0 %v1112, 120
        %v1248 = vpop.permute.xlu0 %1247
        %1251 = vrot.lane.b32.xlu0 %v1109, 112
        %v1252 = vpop.permute.xlu0 %1251
        %1253 = vrot.lane.b32.xlu0 %v1112, 112
        %v1254 = vpop.permute.xlu0 %1253
        %1257 = vrot.lane.b32.xlu0 %v1109, 104
        %v1258 = vpop.permute.xlu0 %1257
        %1259 = vrot.lane.b32.xlu0 %v1112, 104
        %v1260 = vpop.permute.xlu0 %1259
        %v1263 = vcombine.low %v1109, %v1252
        %v1264 = vcombine.high %v1109, %v1252
        %v1266 = vunpack.c.l.s4 1983009808
        %v1267 = vunpack.c.0.s8 %v1266
        %v1268 = vlaneseq
        %v1269 = vshrl.u32 %v1268, 7
        %v1270 = vsub.s32 %v1267, %v1269
        %v1271 = vrot.slane %v1263, %v1270
        %v1273 = vunpack.c.l.s4 1983009808
        %v1274 = vunpack.c.0.s8 %v1273
        %v1275 = vlaneseq
        %v1276 = vshrl.u32 %v1275, 7
        %v1277 = vsub.s32 %v1274, %v1276
        %v1278 = vrot.slane %v1264, %v1277
        %v1279 = vcombine.low %v1246, %v1258
        %v1280 = vcombine.high %v1246, %v1258
        %v1282 = vunpack.c.l.s4 1983009808
        %v1283 = vunpack.c.0.s8 %v1282
        %v1284 = vlaneseq
        %v1285 = vshrl.u32 %v1284, 7
        %v1286 = vsub.s32 %v1283, %v1285
        %v1287 = vrot.slane %v1279, %v1286
        %v1289 = vunpack.c.l.s4 1983009808
        %v1290 = vunpack.c.0.s8 %v1289
        %v1291 = vlaneseq
        %v1292 = vshrl.u32 %v1291, 7
        %v1293 = vsub.s32 %v1290, %v1292
        %v1294 = vrot.slane %v1280, %v1293
        %v1295 = vcombine.low %v1271, %v1287
        %v1296 = vcombine.high %v1271, %v1287
        %v1298 = vunpack.c.l.s4 1934713408
        %v1299 = vunpack.c.0.s8 %v1298
        %v1300 = vlaneseq
        %v1301 = vshrl.u32 %v1300, 7
        %v1302 = vsub.s32 %v1299, %v1301
        %v1303 = vrot.slane %v1295, %v1302
        %v1305 = vunpack.c.l.s4 1934713408
        %v1306 = vunpack.c.0.s8 %v1305
        %v1307 = vlaneseq
        %v1308 = vshrl.u32 %v1307, 7
        %v1309 = vsub.s32 %v1306, %v1308
        %v1310 = vrot.slane %v1296, %v1309
        %v1311 = vcombine.low %v1278, %v1294
        %v1312 = vcombine.high %v1278, %v1294
        %v1314 = vunpack.c.l.s4 1934713408
        %v1315 = vunpack.c.0.s8 %v1314
        %v1316 = vlaneseq
        %v1317 = vshrl.u32 %v1316, 7
        %v1318 = vsub.s32 %v1315, %v1317
        %v1319 = vrot.slane %v1311, %v1318
        %v1321 = vunpack.c.l.s4 1934713408
        %v1322 = vunpack.c.0.s8 %v1321
        %v1323 = vlaneseq
        %v1324 = vshrl.u32 %v1323, 7
        %v1325 = vsub.s32 %v1322, %v1324
        %v1326 = vrot.slane %v1312, %v1325
        %v1327 = vcombine.high %v1303, 0.0
        %v1328 = vcombine.high %v1310, 0.0
        %v1329 = vcombine.high %v1319, 0.0
        %v1330 = vcombine.high %v1326, 0.0
        %v1331 = vcombine.low %v1112, %v1254
        %v1332 = vcombine.high %v1112, %v1254
        %v1334 = vunpack.c.l.s4 1983009808
        %v1335 = vunpack.c.0.s8 %v1334
        %v1336 = vlaneseq
        %v1337 = vshrl.u32 %v1336, 7
        %v1338 = vsub.s32 %v1335, %v1337
        %v1339 = vrot.slane %v1331, %v1338
        %v1341 = vunpack.c.l.s4 1983009808
        %v1342 = vunpack.c.0.s8 %v1341
        %v1343 = vlaneseq
        %v1344 = vshrl.u32 %v1343, 7
        %v1345 = vsub.s32 %v1342, %v1344
        %v1346 = vrot.slane %v1332, %v1345
        %v1347 = vcombine.low %v1248, %v1260
        %v1348 = vcombine.high %v1248, %v1260
        %v1350 = vunpack.c.l.s4 1983009808
        %v1351 = vunpack.c.0.s8 %v1350
        %v1352 = vlaneseq
        %v1353 = vshrl.u32 %v1352, 7
        %v1354 = vsub.s32 %v1351, %v1353
        %v1355 = vrot.slane %v1347, %v1354
        %v1357 = vunpack.c.l.s4 1983009808
        %v1358 = vunpack.c.0.s8 %v1357
        %v1359 = vlaneseq
        %v1360 = vshrl.u32 %v1359, 7
        %v1361 = vsub.s32 %v1358, %v1360
        %v1362 = vrot.slane %v1348, %v1361
        %v1363 = vcombine.low %v1339, %v1355
        %v1364 = vcombine.high %v1339, %v1355
        %v1366 = vunpack.c.l.s4 1934713408
        %v1367 = vunpack.c.0.s8 %v1366
        %v1368 = vlaneseq
        %v1369 = vshrl.u32 %v1368, 7
        %v1370 = vsub.s32 %v1367, %v1369
        %v1371 = vrot.slane %v1363, %v1370
        %v1373 = vunpack.c.l.s4 1934713408
        %v1374 = vunpack.c.0.s8 %v1373
        %v1375 = vlaneseq
        %v1376 = vshrl.u32 %v1375, 7
        %v1377 = vsub.s32 %v1374, %v1376
        %v1378 = vrot.slane %v1364, %v1377
        %v1379 = vcombine.low %v1346, %v1362
        %v1380 = vcombine.high %v1346, %v1362
        %v1382 = vunpack.c.l.s4 1934713408
        %v1383 = vunpack.c.0.s8 %v1382
        %v1384 = vlaneseq
        %v1385 = vshrl.u32 %v1384, 7
        %v1386 = vsub.s32 %v1383, %v1385
        %v1387 = vrot.slane %v1379, %v1386
        %v1389 = vunpack.c.l.s4 1934713408
        %v1390 = vunpack.c.0.s8 %v1389
        %v1391 = vlaneseq
        %v1392 = vshrl.u32 %v1391, 7
        %v1393 = vsub.s32 %v1390, %v1392
        %v1394 = vrot.slane %v1380, %v1393
        %v1395 = vcombine.high %v1371, 0.0
        %v1396 = vcombine.high %v1378, 0.0
        %v1397 = vcombine.high %v1387, 0.0
        %v1398 = vcombine.high %v1394, 0.0
        %v1399 = vcombine.low %v1303, %v1310
        %v1401 = vunpack.c.l.s4 1983009808
        %v1402 = vunpack.c.0.s8 %v1401
        %v1403 = vlaneseq
        %v1404 = vshrl.u32 %v1403, 7
        %v1405 = vsub.s32 %v1402, %v1404
        %v1406 = vrot.slane %v1399, %v1405
        %v1407 = vcombine.low %v1327, %v1328
        %v1409 = vunpack.c.l.s4 1983009808
        %v1410 = vunpack.c.0.s8 %v1409
        %v1411 = vlaneseq
        %v1412 = vshrl.u32 %v1411, 7
        %v1413 = vsub.s32 %v1410, %v1412
        %v1414 = vrot.slane %v1407, %v1413
        %v1415 = vcombine.low %v1319, %v1326
        %v1417 = vunpack.c.l.s4 1983009808
        %v1418 = vunpack.c.0.s8 %v1417
        %v1419 = vlaneseq
        %v1420 = vshrl.u32 %v1419, 7
        %v1421 = vsub.s32 %v1418, %v1420
        %v1422 = vrot.slane %v1415, %v1421
        %v1423 = vcombine.low %v1329, %v1330
        %v1425 = vunpack.c.l.s4 1983009808
        %v1426 = vunpack.c.0.s8 %v1425
        %v1427 = vlaneseq
        %v1428 = vshrl.u32 %v1427, 7
        %v1429 = vsub.s32 %v1426, %v1428
        %v1430 = vrot.slane %v1423, %v1429
        %v1431 = vcombine.low %v1406, %v1414
        %v1432 = vcombine.high %v1406, %v1414
        %v1434 = vunpack.c.l.s4 1934713408
        %v1435 = vunpack.c.0.s8 %v1434
        %v1436 = vlaneseq
        %v1437 = vshrl.u32 %v1436, 7
        %v1438 = vsub.s32 %v1435, %v1437
        %v1439 = vrot.slane %v1431, %v1438
        %v1441 = vunpack.c.l.s4 1934713408
        %v1442 = vunpack.c.0.s8 %v1441
        %v1443 = vlaneseq
        %v1444 = vshrl.u32 %v1443, 7
        %v1445 = vsub.s32 %v1442, %v1444
        %v1446 = vrot.slane %v1432, %v1445
        %v1447 = vcombine.low %v1422, %v1430
        %v1448 = vcombine.high %v1422, %v1430
        %v1450 = vunpack.c.l.s4 1934713408
        %v1451 = vunpack.c.0.s8 %v1450
        %v1452 = vlaneseq
        %v1453 = vshrl.u32 %v1452, 7
        %v1454 = vsub.s32 %v1451, %v1453
        %v1455 = vrot.slane %v1447, %v1454
        %v1457 = vunpack.c.l.s4 1934713408
        %v1458 = vunpack.c.0.s8 %v1457
        %v1459 = vlaneseq
        %v1460 = vshrl.u32 %v1459, 7
        %v1461 = vsub.s32 %v1458, %v1460
        %v1462 = vrot.slane %v1448, %v1461
        %v1463 = vcombine.low %v1439, %v1455
        %v1464 = vcombine.high %v1439, %v1455
        %v1465 = vcombine.low %v1446, %v1462
        %v1466 = vcombine.high %v1446, %v1462
        %v1467 = vcombine.low %v1371, %v1378
        %v1469 = vunpack.c.l.s4 1983009808
        %v1470 = vunpack.c.0.s8 %v1469
        %v1471 = vlaneseq
        %v1472 = vshrl.u32 %v1471, 7
        %v1473 = vsub.s32 %v1470, %v1472
        %v1474 = vrot.slane %v1467, %v1473
        %v1475 = vcombine.low %v1395, %v1396
        %v1477 = vunpack.c.l.s4 1983009808
        %v1478 = vunpack.c.0.s8 %v1477
        %v1479 = vlaneseq
        %v1480 = vshrl.u32 %v1479, 7
        %v1481 = vsub.s32 %v1478, %v1480
        %v1482 = vrot.slane %v1475, %v1481
        %v1483 = vcombine.low %v1387, %v1394
        %v1485 = vunpack.c.l.s4 1983009808
        %v1486 = vunpack.c.0.s8 %v1485
        %v1487 = vlaneseq
        %v1488 = vshrl.u32 %v1487, 7
        %v1489 = vsub.s32 %v1486, %v1488
        %v1490 = vrot.slane %v1483, %v1489
        %v1491 = vcombine.low %v1397, %v1398
        %v1493 = vunpack.c.l.s4 1983009808
        %v1494 = vunpack.c.0.s8 %v1493
        %v1495 = vlaneseq
        %v1496 = vshrl.u32 %v1495, 7
        %v1497 = vsub.s32 %v1494, %v1496
        %v1498 = vrot.slane %v1491, %v1497
        %v1499 = vcombine.low %v1474, %v1482
        %v1500 = vcombine.high %v1474, %v1482
        %v1502 = vunpack.c.l.s4 1934713408
        %v1503 = vunpack.c.0.s8 %v1502
        %v1504 = vlaneseq
        %v1505 = vshrl.u32 %v1504, 7
        %v1506 = vsub.s32 %v1503, %v1505
        %v1507 = vrot.slane %v1499, %v1506
        %v1509 = vunpack.c.l.s4 1934713408
        %v1510 = vunpack.c.0.s8 %v1509
        %v1511 = vlaneseq
        %v1512 = vshrl.u32 %v1511, 7
        %v1513 = vsub.s32 %v1510, %v1512
        %v1514 = vrot.slane %v1500, %v1513
        %v1515 = vcombine.low %v1490, %v1498
        %v1516 = vcombine.high %v1490, %v1498
        %v1518 = vunpack.c.l.s4 1934713408
        %v1519 = vunpack.c.0.s8 %v1518
        %v1520 = vlaneseq
        %v1521 = vshrl.u32 %v1520, 7
        %v1522 = vsub.s32 %v1519, %v1521
        %v1523 = vrot.slane %v1515, %v1522
        %v1525 = vunpack.c.l.s4 1934713408
        %v1526 = vunpack.c.0.s8 %v1525
        %v1527 = vlaneseq
        %v1528 = vshrl.u32 %v1527, 7
        %v1529 = vsub.s32 %v1526, %v1528
        %v1530 = vrot.slane %v1516, %v1529
        %v1531 = vcombine.low %v1507, %v1523
        %v1532 = vcombine.high %v1507, %v1523
        %v1533 = vcombine.low %v1514, %v1530
        %v1534 = vcombine.high %v1514, %v1530
        %1537 = vrot.lane.b32.xlu0 %v1173, 120
        %v1538 = vpop.permute.xlu0 %1537
        %1539 = vrot.lane.b32.xlu0 %v1176, 120
        %v1540 = vpop.permute.xlu0 %1539
        %1543 = vrot.lane.b32.xlu0 %v1173, 112
        %v1544 = vpop.permute.xlu0 %1543
        %1545 = vrot.lane.b32.xlu0 %v1176, 112
        %v1546 = vpop.permute.xlu0 %1545
        %1549 = vrot.lane.b32.xlu0 %v1173, 104
        %v1550 = vpop.permute.xlu0 %1549
        %1551 = vrot.lane.b32.xlu0 %v1176, 104
        %v1552 = vpop.permute.xlu0 %1551
        %v1555 = vcombine.low %v1173, %v1544
        %v1556 = vcombine.high %v1173, %v1544
        %v1558 = vunpack.c.l.s4 1983009808
        %v1559 = vunpack.c.0.s8 %v1558
        %v1560 = vlaneseq
        %v1561 = vshrl.u32 %v1560, 7
        %v1562 = vsub.s32 %v1559, %v1561
        %v1563 = vrot.slane %v1555, %v1562
        %v1565 = vunpack.c.l.s4 1983009808
        %v1566 = vunpack.c.0.s8 %v1565
        %v1567 = vlaneseq
        %v1568 = vshrl.u32 %v1567, 7
        %v1569 = vsub.s32 %v1566, %v1568
        %v1570 = vrot.slane %v1556, %v1569
        %v1571 = vcombine.low %v1538, %v1550
        %v1572 = vcombine.high %v1538, %v1550
        %v1574 = vunpack.c.l.s4 1983009808
        %v1575 = vunpack.c.0.s8 %v1574
        %v1576 = vlaneseq
        %v1577 = vshrl.u32 %v1576, 7
        %v1578 = vsub.s32 %v1575, %v1577
        %v1579 = vrot.slane %v1571, %v1578
        %v1581 = vunpack.c.l.s4 1983009808
        %v1582 = vunpack.c.0.s8 %v1581
        %v1583 = vlaneseq
        %v1584 = vshrl.u32 %v1583, 7
        %v1585 = vsub.s32 %v1582, %v1584
        %v1586 = vrot.slane %v1572, %v1585
        %v1587 = vcombine.low %v1563, %v1579
        %v1588 = vcombine.high %v1563, %v1579
        %v1590 = vunpack.c.l.s4 1934713408
        %v1591 = vunpack.c.0.s8 %v1590
        %v1592 = vlaneseq
        %v1593 = vshrl.u32 %v1592, 7
        %v1594 = vsub.s32 %v1591, %v1593
        %v1595 = vrot.slane %v1587, %v1594
        %v1597 = vunpack.c.l.s4 1934713408
        %v1598 = vunpack.c.0.s8 %v1597
        %v1599 = vlaneseq
        %v1600 = vshrl.u32 %v1599, 7
        %v1601 = vsub.s32 %v1598, %v1600
        %v1602 = vrot.slane %v1588, %v1601
        %v1603 = vcombine.low %v1570, %v1586
        %v1604 = vcombine.high %v1570, %v1586
        %v1606 = vunpack.c.l.s4 1934713408
        %v1607 = vunpack.c.0.s8 %v1606
        %v1608 = vlaneseq
        %v1609 = vshrl.u32 %v1608, 7
        %v1610 = vsub.s32 %v1607, %v1609
        %v1611 = vrot.slane %v1603, %v1610
        %v1613 = vunpack.c.l.s4 1934713408
        %v1614 = vunpack.c.0.s8 %v1613
        %v1615 = vlaneseq
        %v1616 = vshrl.u32 %v1615, 7
        %v1617 = vsub.s32 %v1614, %v1616
        %v1618 = vrot.slane %v1604, %v1617
        %v1619 = vcombine.high %v1595, 0.0
        %v1620 = vcombine.high %v1602, 0.0
        %v1621 = vcombine.high %v1611, 0.0
        %v1622 = vcombine.high %v1618, 0.0
        %v1623 = vcombine.low %v1176, %v1546
        %v1624 = vcombine.high %v1176, %v1546
        %v1626 = vunpack.c.l.s4 1983009808
        %v1627 = vunpack.c.0.s8 %v1626
        %v1628 = vlaneseq
        %v1629 = vshrl.u32 %v1628, 7
        %v1630 = vsub.s32 %v1627, %v1629
        %v1631 = vrot.slane %v1623, %v1630
        %v1633 = vunpack.c.l.s4 1983009808
        %v1634 = vunpack.c.0.s8 %v1633
        %v1635 = vlaneseq
        %v1636 = vshrl.u32 %v1635, 7
        %v1637 = vsub.s32 %v1634, %v1636
        %v1638 = vrot.slane %v1624, %v1637
        %v1639 = vcombine.low %v1540, %v1552
        %v1640 = vcombine.high %v1540, %v1552
        %v1642 = vunpack.c.l.s4 1983009808
        %v1643 = vunpack.c.0.s8 %v1642
        %v1644 = vlaneseq
        %v1645 = vshrl.u32 %v1644, 7
        %v1646 = vsub.s32 %v1643, %v1645
        %v1647 = vrot.slane %v1639, %v1646
        %v1649 = vunpack.c.l.s4 1983009808
        %v1650 = vunpack.c.0.s8 %v1649
        %v1651 = vlaneseq
        %v1652 = vshrl.u32 %v1651, 7
        %v1653 = vsub.s32 %v1650, %v1652
        %v1654 = vrot.slane %v1640, %v1653
        %v1655 = vcombine.low %v1631, %v1647
        %v1656 = vcombine.high %v1631, %v1647
        %v1658 = vunpack.c.l.s4 1934713408
        %v1659 = vunpack.c.0.s8 %v1658
        %v1660 = vlaneseq
        %v1661 = vshrl.u32 %v1660, 7
        %v1662 = vsub.s32 %v1659, %v1661
        %v1663 = vrot.slane %v1655, %v1662
        %v1665 = vunpack.c.l.s4 1934713408
        %v1666 = vunpack.c.0.s8 %v1665
        %v1667 = vlaneseq
        %v1668 = vshrl.u32 %v1667, 7
        %v1669 = vsub.s32 %v1666, %v1668
        %v1670 = vrot.slane %v1656, %v1669
        %v1671 = vcombine.low %v1638, %v1654
        %v1672 = vcombine.high %v1638, %v1654
        %v1674 = vunpack.c.l.s4 1934713408
        %v1675 = vunpack.c.0.s8 %v1674
        %v1676 = vlaneseq
        %v1677 = vshrl.u32 %v1676, 7
        %v1678 = vsub.s32 %v1675, %v1677
        %v1679 = vrot.slane %v1671, %v1678
        %v1681 = vunpack.c.l.s4 1934713408
        %v1682 = vunpack.c.0.s8 %v1681
        %v1683 = vlaneseq
        %v1684 = vshrl.u32 %v1683, 7
        %v1685 = vsub.s32 %v1682, %v1684
        %v1686 = vrot.slane %v1672, %v1685
        %v1687 = vcombine.high %v1663, 0.0
        %v1688 = vcombine.high %v1670, 0.0
        %v1689 = vcombine.high %v1679, 0.0
        %v1690 = vcombine.high %v1686, 0.0
        %v1691 = vcombine.low %v1595, %v1602
        %v1693 = vunpack.c.l.s4 1983009808
        %v1694 = vunpack.c.0.s8 %v1693
        %v1695 = vlaneseq
        %v1696 = vshrl.u32 %v1695, 7
        %v1697 = vsub.s32 %v1694, %v1696
        %v1698 = vrot.slane %v1691, %v1697
        %v1699 = vcombine.low %v1619, %v1620
        %v1701 = vunpack.c.l.s4 1983009808
        %v1702 = vunpack.c.0.s8 %v1701
        %v1703 = vlaneseq
        %v1704 = vshrl.u32 %v1703, 7
        %v1705 = vsub.s32 %v1702, %v1704
        %v1706 = vrot.slane %v1699, %v1705
        %v1707 = vcombine.low %v1611, %v1618
        %v1709 = vunpack.c.l.s4 1983009808
        %v1710 = vunpack.c.0.s8 %v1709
        %v1711 = vlaneseq
        %v1712 = vshrl.u32 %v1711, 7
        %v1713 = vsub.s32 %v1710, %v1712
        %v1714 = vrot.slane %v1707, %v1713
        %v1715 = vcombine.low %v1621, %v1622
        %v1717 = vunpack.c.l.s4 1983009808
        %v1718 = vunpack.c.0.s8 %v1717
        %v1719 = vlaneseq
        %v1720 = vshrl.u32 %v1719, 7
        %v1721 = vsub.s32 %v1718, %v1720
        %v1722 = vrot.slane %v1715, %v1721
        %v1723 = vcombine.low %v1698, %v1706
        %v1724 = vcombine.high %v1698, %v1706
        %v1726 = vunpack.c.l.s4 1934713408
        %v1727 = vunpack.c.0.s8 %v1726
        %v1728 = vlaneseq
        %v1729 = vshrl.u32 %v1728, 7
        %v1730 = vsub.s32 %v1727, %v1729
        %v1731 = vrot.slane %v1723, %v1730
        %v1733 = vunpack.c.l.s4 1934713408
        %v1734 = vunpack.c.0.s8 %v1733
        %v1735 = vlaneseq
        %v1736 = vshrl.u32 %v1735, 7
        %v1737 = vsub.s32 %v1734, %v1736
        %v1738 = vrot.slane %v1724, %v1737
        %v1739 = vcombine.low %v1714, %v1722
        %v1740 = vcombine.high %v1714, %v1722
        %v1742 = vunpack.c.l.s4 1934713408
        %v1743 = vunpack.c.0.s8 %v1742
        %v1744 = vlaneseq
        %v1745 = vshrl.u32 %v1744, 7
        %v1746 = vsub.s32 %v1743, %v1745
        %v1747 = vrot.slane %v1739, %v1746
        %v1749 = vunpack.c.l.s4 1934713408
        %v1750 = vunpack.c.0.s8 %v1749
        %v1751 = vlaneseq
        %v1752 = vshrl.u32 %v1751, 7
        %v1753 = vsub.s32 %v1750, %v1752
        %v1754 = vrot.slane %v1740, %v1753
        %v1755 = vcombine.low %v1731, %v1747
        %v1756 = vcombine.high %v1731, %v1747
        %v1757 = vcombine.low %v1738, %v1754
        %v1758 = vcombine.high %v1738, %v1754
        %v1759 = vcombine.low %v1663, %v1670
        %v1761 = vunpack.c.l.s4 1983009808
        %v1762 = vunpack.c.0.s8 %v1761
        %v1763 = vlaneseq
        %v1764 = vshrl.u32 %v1763, 7
        %v1765 = vsub.s32 %v1762, %v1764
        %v1766 = vrot.slane %v1759, %v1765
        %v1767 = vcombine.low %v1687, %v1688
        %v1769 = vunpack.c.l.s4 1983009808
        %v1770 = vunpack.c.0.s8 %v1769
        %v1771 = vlaneseq
        %v1772 = vshrl.u32 %v1771, 7
        %v1773 = vsub.s32 %v1770, %v1772
        %v1774 = vrot.slane %v1767, %v1773
        %v1775 = vcombine.low %v1679, %v1686
        %v1777 = vunpack.c.l.s4 1983009808
        %v1778 = vunpack.c.0.s8 %v1777
        %v1779 = vlaneseq
        %v1780 = vshrl.u32 %v1779, 7
        %v1781 = vsub.s32 %v1778, %v1780
        %v1782 = vrot.slane %v1775, %v1781
        %v1783 = vcombine.low %v1689, %v1690
        %v1785 = vunpack.c.l.s4 1983009808
        %v1786 = vunpack.c.0.s8 %v1785
        %v1787 = vlaneseq
        %v1788 = vshrl.u32 %v1787, 7
        %v1789 = vsub.s32 %v1786, %v1788
        %v1790 = vrot.slane %v1783, %v1789
        %v1791 = vcombine.low %v1766, %v1774
        %v1792 = vcombine.high %v1766, %v1774
        %v1794 = vunpack.c.l.s4 1934713408
        %v1795 = vunpack.c.0.s8 %v1794
        %v1796 = vlaneseq
        %v1797 = vshrl.u32 %v1796, 7
        %v1798 = vsub.s32 %v1795, %v1797
        %v1799 = vrot.slane %v1791, %v1798
        %v1801 = vunpack.c.l.s4 1934713408
        %v1802 = vunpack.c.0.s8 %v1801
        %v1803 = vlaneseq
        %v1804 = vshrl.u32 %v1803, 7
        %v1805 = vsub.s32 %v1802, %v1804
        %v1806 = vrot.slane %v1792, %v1805
        %v1807 = vcombine.low %v1782, %v1790
        %v1808 = vcombine.high %v1782, %v1790
        %v1810 = vunpack.c.l.s4 1934713408
        %v1811 = vunpack.c.0.s8 %v1810
        %v1812 = vlaneseq
        %v1813 = vshrl.u32 %v1812, 7
        %v1814 = vsub.s32 %v1811, %v1813
        %v1815 = vrot.slane %v1807, %v1814
        %v1817 = vunpack.c.l.s4 1934713408
        %v1818 = vunpack.c.0.s8 %v1817
        %v1819 = vlaneseq
        %v1820 = vshrl.u32 %v1819, 7
        %v1821 = vsub.s32 %v1818, %v1820
        %v1822 = vrot.slane %v1808, %v1821
        %v1823 = vcombine.low %v1799, %v1815
        %v1824 = vcombine.high %v1799, %v1815
        %v1825 = vcombine.low %v1806, %v1822
        %v1826 = vcombine.high %v1806, %v1822
        %1829 = vrot.lane.b32.xlu0 %v1237, 120
        %v1830 = vpop.permute.xlu0 %1829
        %1831 = vrot.lane.b32.xlu0 %v1240, 120
        %v1832 = vpop.permute.xlu0 %1831
        %1835 = vrot.lane.b32.xlu0 %v1237, 112
        %v1836 = vpop.permute.xlu0 %1835
        %1837 = vrot.lane.b32.xlu0 %v1240, 112
        %v1838 = vpop.permute.xlu0 %1837
        %1841 = vrot.lane.b32.xlu0 %v1237, 104
        %v1842 = vpop.permute.xlu0 %1841
        %1843 = vrot.lane.b32.xlu0 %v1240, 104
        %v1844 = vpop.permute.xlu0 %1843
        %v1847 = vcombine.low %v1237, %v1836
        %v1848 = vcombine.high %v1237, %v1836
        %v1850 = vunpack.c.l.s4 1983009808
        %v1851 = vunpack.c.0.s8 %v1850
        %v1852 = vlaneseq
        %v1853 = vshrl.u32 %v1852, 7
        %v1854 = vsub.s32 %v1851, %v1853
        %v1855 = vrot.slane %v1847, %v1854
        %v1857 = vunpack.c.l.s4 1983009808
        %v1858 = vunpack.c.0.s8 %v1857
        %v1859 = vlaneseq
        %v1860 = vshrl.u32 %v1859, 7
        %v1861 = vsub.s32 %v1858, %v1860
        %v1862 = vrot.slane %v1848, %v1861
        %v1863 = vcombine.low %v1830, %v1842
        %v1864 = vcombine.high %v1830, %v1842
        %v1866 = vunpack.c.l.s4 1983009808
        %v1867 = vunpack.c.0.s8 %v1866
        %v1868 = vlaneseq
        %v1869 = vshrl.u32 %v1868, 7
        %v1870 = vsub.s32 %v1867, %v1869
        %v1871 = vrot.slane %v1863, %v1870
        %v1873 = vunpack.c.l.s4 1983009808
        %v1874 = vunpack.c.0.s8 %v1873
        %v1875 = vlaneseq
        %v1876 = vshrl.u32 %v1875, 7
        %v1877 = vsub.s32 %v1874, %v1876
        %v1878 = vrot.slane %v1864, %v1877
        %v1879 = vcombine.low %v1855, %v1871
        %v1880 = vcombine.high %v1855, %v1871
        %v1882 = vunpack.c.l.s4 1934713408
        %v1883 = vunpack.c.0.s8 %v1882
        %v1884 = vlaneseq
        %v1885 = vshrl.u32 %v1884, 7
        %v1886 = vsub.s32 %v1883, %v1885
        %v1887 = vrot.slane %v1879, %v1886
        %v1889 = vunpack.c.l.s4 1934713408
        %v1890 = vunpack.c.0.s8 %v1889
        %v1891 = vlaneseq
        %v1892 = vshrl.u32 %v1891, 7
        %v1893 = vsub.s32 %v1890, %v1892
        %v1894 = vrot.slane %v1880, %v1893
        %v1895 = vcombine.low %v1862, %v1878
        %v1896 = vcombine.high %v1862, %v1878
        %v1898 = vunpack.c.l.s4 1934713408
        %v1899 = vunpack.c.0.s8 %v1898
        %v1900 = vlaneseq
        %v1901 = vshrl.u32 %v1900, 7
        %v1902 = vsub.s32 %v1899, %v1901
        %v1903 = vrot.slane %v1895, %v1902
        %v1905 = vunpack.c.l.s4 1934713408
        %v1906 = vunpack.c.0.s8 %v1905
        %v1907 = vlaneseq
        %v1908 = vshrl.u32 %v1907, 7
        %v1909 = vsub.s32 %v1906, %v1908
        %v1910 = vrot.slane %v1896, %v1909
        %v1911 = vcombine.high %v1887, 0.0
        %v1912 = vcombine.high %v1894, 0.0
        %v1913 = vcombine.high %v1903, 0.0
        %v1914 = vcombine.high %v1910, 0.0
        %v1915 = vcombine.low %v1240, %v1838
        %v1916 = vcombine.high %v1240, %v1838
        %v1918 = vunpack.c.l.s4 1983009808
        %v1919 = vunpack.c.0.s8 %v1918
        %v1920 = vlaneseq
        %v1921 = vshrl.u32 %v1920, 7
        %v1922 = vsub.s32 %v1919, %v1921
        %v1923 = vrot.slane %v1915, %v1922
        %v1925 = vunpack.c.l.s4 1983009808
        %v1926 = vunpack.c.0.s8 %v1925
        %v1927 = vlaneseq
        %v1928 = vshrl.u32 %v1927, 7
        %v1929 = vsub.s32 %v1926, %v1928
        %v1930 = vrot.slane %v1916, %v1929
        %v1931 = vcombine.low %v1832, %v1844
        %v1932 = vcombine.high %v1832, %v1844
        %v1934 = vunpack.c.l.s4 1983009808
        %v1935 = vunpack.c.0.s8 %v1934
        %v1936 = vlaneseq
        %v1937 = vshrl.u32 %v1936, 7
        %v1938 = vsub.s32 %v1935, %v1937
        %v1939 = vrot.slane %v1931, %v1938
        %v1941 = vunpack.c.l.s4 1983009808
        %v1942 = vunpack.c.0.s8 %v1941
        %v1943 = vlaneseq
        %v1944 = vshrl.u32 %v1943, 7
        %v1945 = vsub.s32 %v1942, %v1944
        %v1946 = vrot.slane %v1932, %v1945
        %v1947 = vcombine.low %v1923, %v1939
        %v1948 = vcombine.high %v1923, %v1939
        %v1950 = vunpack.c.l.s4 1934713408
        %v1951 = vunpack.c.0.s8 %v1950
        %v1952 = vlaneseq
        %v1953 = vshrl.u32 %v1952, 7
        %v1954 = vsub.s32 %v1951, %v1953
        %v1955 = vrot.slane %v1947, %v1954
        %v1957 = vunpack.c.l.s4 1934713408
        %v1958 = vunpack.c.0.s8 %v1957
        %v1959 = vlaneseq
        %v1960 = vshrl.u32 %v1959, 7
        %v1961 = vsub.s32 %v1958, %v1960
        %v1962 = vrot.slane %v1948, %v1961
        %v1963 = vcombine.low %v1930, %v1946
        %v1964 = vcombine.high %v1930, %v1946
        %v1966 = vunpack.c.l.s4 1934713408
        %v1967 = vunpack.c.0.s8 %v1966
        %v1968 = vlaneseq
        %v1969 = vshrl.u32 %v1968, 7
        %v1970 = vsub.s32 %v1967, %v1969
        %v1971 = vrot.slane %v1963, %v1970
        %v1973 = vunpack.c.l.s4 1934713408
        %v1974 = vunpack.c.0.s8 %v1973
        %v1975 = vlaneseq
        %v1976 = vshrl.u32 %v1975, 7
        %v1977 = vsub.s32 %v1974, %v1976
        %v1978 = vrot.slane %v1964, %v1977
        %v1979 = vcombine.high %v1955, 0.0
        %v1980 = vcombine.high %v1962, 0.0
        %v1981 = vcombine.high %v1971, 0.0
        %v1982 = vcombine.high %v1978, 0.0
        %v1983 = vcombine.low %v1887, %v1894
        %v1985 = vunpack.c.l.s4 1983009808
        %v1986 = vunpack.c.0.s8 %v1985
        %v1987 = vlaneseq
        %v1988 = vshrl.u32 %v1987, 7
        %v1989 = vsub.s32 %v1986, %v1988
        %v1990 = vrot.slane %v1983, %v1989
        %v1991 = vcombine.low %v1911, %v1912
        %v1993 = vunpack.c.l.s4 1983009808
        %v1994 = vunpack.c.0.s8 %v1993
        %v1995 = vlaneseq
        %v1996 = vshrl.u32 %v1995, 7
        %v1997 = vsub.s32 %v1994, %v1996
        %v1998 = vrot.slane %v1991, %v1997
        %v1999 = vcombine.low %v1903, %v1910
        %v2001 = vunpack.c.l.s4 1983009808
        %v2002 = vunpack.c.0.s8 %v2001
        %v2003 = vlaneseq
        %v2004 = vshrl.u32 %v2003, 7
        %v2005 = vsub.s32 %v2002, %v2004
        %v2006 = vrot.slane %v1999, %v2005
        %v2007 = vcombine.low %v1913, %v1914
        %v2009 = vunpack.c.l.s4 1983009808
        %v2010 = vunpack.c.0.s8 %v2009
        %v2011 = vlaneseq
        %v2012 = vshrl.u32 %v2011, 7
        %v2013 = vsub.s32 %v2010, %v2012
        %v2014 = vrot.slane %v2007, %v2013
        %v2015 = vcombine.low %v1990, %v1998
        %v2016 = vcombine.high %v1990, %v1998
        %v2018 = vunpack.c.l.s4 1934713408
        %v2019 = vunpack.c.0.s8 %v2018
        %v2020 = vlaneseq
        %v2021 = vshrl.u32 %v2020, 7
        %v2022 = vsub.s32 %v2019, %v2021
        %v2023 = vrot.slane %v2015, %v2022
        %v2025 = vunpack.c.l.s4 1934713408
        %v2026 = vunpack.c.0.s8 %v2025
        %v2027 = vlaneseq
        %v2028 = vshrl.u32 %v2027, 7
        %v2029 = vsub.s32 %v2026, %v2028
        %v2030 = vrot.slane %v2016, %v2029
        %v2031 = vcombine.low %v2006, %v2014
        %v2032 = vcombine.high %v2006, %v2014
        %v2034 = vunpack.c.l.s4 1934713408
        %v2035 = vunpack.c.0.s8 %v2034
        %v2036 = vlaneseq
        %v2037 = vshrl.u32 %v2036, 7
        %v2038 = vsub.s32 %v2035, %v2037
        %v2039 = vrot.slane %v2031, %v2038
        %v2041 = vunpack.c.l.s4 1934713408
        %v2042 = vunpack.c.0.s8 %v2041
        %v2043 = vlaneseq
        %v2044 = vshrl.u32 %v2043, 7
        %v2045 = vsub.s32 %v2042, %v2044
        %v2046 = vrot.slane %v2032, %v2045
        %v2047 = vcombine.low %v2023, %v2039
        %v2048 = vcombine.high %v2023, %v2039
        %v2049 = vcombine.low %v2030, %v2046
        %v2050 = vcombine.high %v2030, %v2046
        %v2051 = vcombine.low %v1955, %v1962
        %v2053 = vunpack.c.l.s4 1983009808
        %v2054 = vunpack.c.0.s8 %v2053
        %v2055 = vlaneseq
        %v2056 = vshrl.u32 %v2055, 7
        %v2057 = vsub.s32 %v2054, %v2056
        %v2058 = vrot.slane %v2051, %v2057
        %v2059 = vcombine.low %v1979, %v1980
        %v2061 = vunpack.c.l.s4 1983009808
        %v2062 = vunpack.c.0.s8 %v2061
        %v2063 = vlaneseq
        %v2064 = vshrl.u32 %v2063, 7
        %v2065 = vsub.s32 %v2062, %v2064
        %v2066 = vrot.slane %v2059, %v2065
        %v2067 = vcombine.low %v1971, %v1978
        %v2069 = vunpack.c.l.s4 1983009808
        %v2070 = vunpack.c.0.s8 %v2069
        %v2071 = vlaneseq
        %v2072 = vshrl.u32 %v2071, 7
        %v2073 = vsub.s32 %v2070, %v2072
        %v2074 = vrot.slane %v2067, %v2073
        %v2075 = vcombine.low %v1981, %v1982
        %v2077 = vunpack.c.l.s4 1983009808
        %v2078 = vunpack.c.0.s8 %v2077
        %v2079 = vlaneseq
        %v2080 = vshrl.u32 %v2079, 7
        %v2081 = vsub.s32 %v2078, %v2080
        %v2082 = vrot.slane %v2075, %v2081
        %v2083 = vcombine.low %v2058, %v2066
        %v2084 = vcombine.high %v2058, %v2066
        %v2086 = vunpack.c.l.s4 1934713408
        %v2087 = vunpack.c.0.s8 %v2086
        %v2088 = vlaneseq
        %v2089 = vshrl.u32 %v2088, 7
        %v2090 = vsub.s32 %v2087, %v2089
        %v2091 = vrot.slane %v2083, %v2090
        %v2093 = vunpack.c.l.s4 1934713408
        %v2094 = vunpack.c.0.s8 %v2093
        %v2095 = vlaneseq
        %v2096 = vshrl.u32 %v2095, 7
        %v2097 = vsub.s32 %v2094, %v2096
        %v2098 = vrot.slane %v2084, %v2097
        %v2099 = vcombine.low %v2074, %v2082
        %v2100 = vcombine.high %v2074, %v2082
        %v2102 = vunpack.c.l.s4 1934713408
        %v2103 = vunpack.c.0.s8 %v2102
        %v2104 = vlaneseq
        %v2105 = vshrl.u32 %v2104, 7
        %v2106 = vsub.s32 %v2103, %v2105
        %v2107 = vrot.slane %v2099, %v2106
        %v2109 = vunpack.c.l.s4 1934713408
        %v2110 = vunpack.c.0.s8 %v2109
        %v2111 = vlaneseq
        %v2112 = vshrl.u32 %v2111, 7
        %v2113 = vsub.s32 %v2110, %v2112
        %v2114 = vrot.slane %v2100, %v2113
        %v2115 = vcombine.low %v2091, %v2107
        %v2116 = vcombine.high %v2091, %v2107
        %v2117 = vcombine.low %v2098, %v2114
        %v2118 = vcombine.high %v2098, %v2114
        %v2119 = vpack.c.bf16 %v1531, %v1463
        %v2120 = vpack.c.bf16 %v1532, %v1464
        %v2121 = vpack.c.bf16 %v1533, %v1465
        %v2122 = vpack.c.bf16 %v1534, %v1466
        %v2123 = vpack.c.bf16 %v1823, %v1755
        %v2124 = vpack.c.bf16 %v1824, %v1756
        %v2125 = vpack.c.bf16 %v1825, %v1757
        %v2126 = vpack.c.bf16 %v1826, %v1758
        %vm2127 = vcmask 64512
        %v2129 = vsel %vm2127, %v2119, 0
        %v2132 = vsel %vm2127, %v2123, 0
        %2134 = vmatprep.subr.bf16.mxu0 0
        %2135 = vmatpush1.bf16.xpose.msra.mxu0 %v2132
        %2136 = vmatprep.subr.bf16.mxu0 0
        %2137 = vmatpush1.bf16.xpose.msra.mxu0 0
        %2138 = vmatprep.subr.bf16.mxu0 0
        %2139 = vmatpush1.bf16.xpose.msra.mxu0 0
        %2140 = vmatprep.subr.bf16.mxu0 0
        %2141 = vmatpush1.bf16.xpose.msra.mxu0 0
        %2142 = vmatprep.subr.bf16.mxu0 0
        %2143 = vmatpush1.bf16.xpose.msra.mxu0 0
        %2144 = vmatprep.subr.bf16.mxu0 0
        %2145 = vmatpush1.bf16.xpose.msra.mxu0 0
        %2146 = vmatprep.subr.bf16.mxu0 0
        %2147 = vmatpush1.bf16.xpose.msra.mxu0 0
        %2148 = vmatprep.subr.bf16.mxu0 0
        %2149 = vmatpush1.bf16.xpose.msra.mxu0 0
        %2150 = vmatprep.subr.bf16.mxu0 0
        %2151 = vmatpush1.bf16.xpose.msra.mxu0 0
        %2152 = vmatprep.subr.bf16.mxu0 0
        %2153 = vmatpush1.bf16.xpose.msra.mxu0 0
        %2154 = vmatprep.subr.bf16.mxu0 0
        %2155 = vmatpush1.bf16.xpose.msra.mxu0 0
        %2156 = vmatprep.subr.bf16.mxu0 0
        %2157 = vmatpush1.bf16.xpose.msra.mxu0 0
        %2158 = vmatprep.subr.bf16.mxu0 0
        %2159 = vmatpush1.bf16.xpose.msra.mxu0 0
        %2160 = vmatprep.subr.bf16.mxu0 0
        %2161 = vmatpush1.bf16.xpose.msra.mxu0 0
        %2162 = vmatprep.subr.bf16.mxu0 0
        %2163 = vmatpush1.bf16.xpose.msra.mxu0 0
        %2164 = vmatprep.subr.bf16.mxu0 0
        %2165 = vmatpush1.bf16.xpose.msra.mxu0 0
        %2166 = vmatprep.mubr.bf16.mxu0 0
        %2167 = vmatmul.mubr.bf16.gmra.mrb[0].mxu0 %v2129
        %v2168 = vpop.f32.mrb[0].mxu0
        %v2169 = vadd.f32 0.0, %v2168
        %v2170 = vpop.f32.mrb[0].mxu0
        %v2171 = vpop.f32.mrb[0].mxu0
        %v2172 = vadd.f32 0.0, %v2171
        %v2173 = vpop.f32.mrb[0].mxu0
        %2174 = vdwg.mxu0
        %v2176 = vsel %vm2127, %v2120, 0
        %v2179 = vsel %vm2127, %v2124, 0
        %2181 = vmatprep.subr.bf16.mxu0 0
        %2182 = vmatpush1.bf16.xpose.msra.mxu0 %v2179
        %2183 = vmatprep.subr.bf16.mxu0 0
        %2184 = vmatpush1.bf16.xpose.msra.mxu0 0
        %2185 = vmatprep.subr.bf16.mxu0 0
        %2186 = vmatpush1.bf16.xpose.msra.mxu0 0
        %2187 = vmatprep.subr.bf16.mxu0 0
        %2188 = vmatpush1.bf16.xpose.msra.mxu0 0
        %2189 = vmatprep.subr.bf16.mxu0 0
        %2190 = vmatpush1.bf16.xpose.msra.mxu0 0
        %2191 = vmatprep.subr.bf16.mxu0 0
        %2192 = vmatpush1.bf16.xpose.msra.mxu0 0
        %2193 = vmatprep.subr.bf16.mxu0 0
        %2194 = vmatpush1.bf16.xpose.msra.mxu0 0
        %2195 = vmatprep.subr.bf16.mxu0 0
        %2196 = vmatpush1.bf16.xpose.msra.mxu0 0
        %2197 = vmatprep.subr.bf16.mxu0 0
        %2198 = vmatpush1.bf16.xpose.msra.mxu0 0
        %2199 = vmatprep.subr.bf16.mxu0 0
        %2200 = vmatpush1.bf16.xpose.msra.mxu0 0
        %2201 = vmatprep.subr.bf16.mxu0 0
        %2202 = vmatpush1.bf16.xpose.msra.mxu0 0
        %2203 = vmatprep.subr.bf16.mxu0 0
        %2204 = vmatpush1.bf16.xpose.msra.mxu0 0
        %2205 = vmatprep.subr.bf16.mxu0 0
        %2206 = vmatpush1.bf16.xpose.msra.mxu0 0
        %2207 = vmatprep.subr.bf16.mxu0 0
        %2208 = vmatpush1.bf16.xpose.msra.mxu0 0
        %2209 = vmatprep.subr.bf16.mxu0 0
        %2210 = vmatpush1.bf16.xpose.msra.mxu0 0
        %2211 = vmatprep.subr.bf16.mxu0 0
        %2212 = vmatpush1.bf16.xpose.msra.mxu0 0
        %2213 = vmatprep.mubr.bf16.mxu0 0
        %2214 = vmatmul.mubr.bf16.gmra.mrb[0].mxu0 %v2176
        %v2215 = vpop.f32.mrb[0].mxu0
        %v2216 = vadd.f32 0.0, %v2215
        %v2217 = vpop.f32.mrb[0].mxu0
        %v2218 = vpop.f32.mrb[0].mxu0
        %v2219 = vadd.f32 0.0, %v2218
        %v2220 = vpop.f32.mrb[0].mxu0
        %2221 = vdwg.mxu0
        %v2223 = vsel %vm2127, %v2121, 0
        %v2226 = vsel %vm2127, %v2125, 0
        %2228 = vmatprep.subr.bf16.mxu0 0
        %2229 = vmatpush1.bf16.xpose.msra.mxu0 %v2226
        %2230 = vmatprep.subr.bf16.mxu0 0
        %2231 = vmatpush1.bf16.xpose.msra.mxu0 0
        %2232 = vmatprep.subr.bf16.mxu0 0
        %2233 = vmatpush1.bf16.xpose.msra.mxu0 0
        %2234 = vmatprep.subr.bf16.mxu0 0
        %2235 = vmatpush1.bf16.xpose.msra.mxu0 0
        %2236 = vmatprep.subr.bf16.mxu0 0
        %2237 = vmatpush1.bf16.xpose.msra.mxu0 0
        %2238 = vmatprep.subr.bf16.mxu0 0
        %2239 = vmatpush1.bf16.xpose.msra.mxu0 0
        %2240 = vmatprep.subr.bf16.mxu0 0
        %2241 = vmatpush1.bf16.xpose.msra.mxu0 0
        %2242 = vmatprep.subr.bf16.mxu0 0
        %2243 = vmatpush1.bf16.xpose.msra.mxu0 0
        %2244 = vmatprep.subr.bf16.mxu0 0
        %2245 = vmatpush1.bf16.xpose.msra.mxu0 0
        %2246 = vmatprep.subr.bf16.mxu0 0
        %2247 = vmatpush1.bf16.xpose.msra.mxu0 0
        %2248 = vmatprep.subr.bf16.mxu0 0
        %2249 = vmatpush1.bf16.xpose.msra.mxu0 0
        %2250 = vmatprep.subr.bf16.mxu0 0
        %2251 = vmatpush1.bf16.xpose.msra.mxu0 0
        %2252 = vmatprep.subr.bf16.mxu0 0
        %2253 = vmatpush1.bf16.xpose.msra.mxu0 0
        %2254 = vmatprep.subr.bf16.mxu0 0
        %2255 = vmatpush1.bf16.xpose.msra.mxu0 0
        %2256 = vmatprep.subr.bf16.mxu0 0
        %2257 = vmatpush1.bf16.xpose.msra.mxu0 0
        %2258 = vmatprep.subr.bf16.mxu0 0
        %2259 = vmatpush1.bf16.xpose.msra.mxu0 0
        %2260 = vmatprep.mubr.bf16.mxu0 0
        %2261 = vmatmul.mubr.bf16.gmra.mrb[0].mxu0 %v2223
        %v2262 = vpop.f32.mrb[0].mxu0
        %v2263 = vadd.f32 0.0, %v2262
        %v2264 = vpop.f32.mrb[0].mxu0
        %v2265 = vpop.f32.mrb[0].mxu0
        %v2266 = vadd.f32 0.0, %v2265
        %v2267 = vpop.f32.mrb[0].mxu0
        %2268 = vdwg.mxu0
        %v2270 = vsel %vm2127, %v2122, 0
        %v2273 = vsel %vm2127, %v2126, 0
        %2275 = vmatprep.subr.bf16.mxu0 0
        %2276 = vmatpush1.bf16.xpose.msra.mxu0 %v2273
        %2277 = vmatprep.subr.bf16.mxu0 0
        %2278 = vmatpush1.bf16.xpose.msra.mxu0 0
        %2279 = vmatprep.subr.bf16.mxu0 0
        %2280 = vmatpush1.bf16.xpose.msra.mxu0 0
        %2281 = vmatprep.subr.bf16.mxu0 0
        %2282 = vmatpush1.bf16.xpose.msra.mxu0 0
        %2283 = vmatprep.subr.bf16.mxu0 0
        %2284 = vmatpush1.bf16.xpose.msra.mxu0 0
        %2285 = vmatprep.subr.bf16.mxu0 0
        %2286 = vmatpush1.bf16.xpose.msra.mxu0 0
        %2287 = vmatprep.subr.bf16.mxu0 0
        %2288 = vmatpush1.bf16.xpose.msra.mxu0 0
        %2289 = vmatprep.subr.bf16.mxu0 0
        %2290 = vmatpush1.bf16.xpose.msra.mxu0 0
        %2291 = vmatprep.subr.bf16.mxu0 0
        %2292 = vmatpush1.bf16.xpose.msra.mxu0 0
        %2293 = vmatprep.subr.bf16.mxu0 0
        %2294 = vmatpush1.bf16.xpose.msra.mxu0 0
        %2295 = vmatprep.subr.bf16.mxu0 0
        %2296 = vmatpush1.bf16.xpose.msra.mxu0 0
        %2297 = vmatprep.subr.bf16.mxu0 0
        %2298 = vmatpush1.bf16.xpose.msra.mxu0 0
        %2299 = vmatprep.subr.bf16.mxu0 0
        %2300 = vmatpush1.bf16.xpose.msra.mxu0 0
        %2301 = vmatprep.subr.bf16.mxu0 0
        %2302 = vmatpush1.bf16.xpose.msra.mxu0 0
        %2303 = vmatprep.subr.bf16.mxu0 0
        %2304 = vmatpush1.bf16.xpose.msra.mxu0 0
        %2305 = vmatprep.subr.bf16.mxu0 0
        %2306 = vmatpush1.bf16.xpose.msra.mxu0 0
        %2307 = vmatprep.mubr.bf16.mxu0 0
        %2308 = vmatmul.mubr.bf16.gmra.mrb[0].mxu0 %v2270
        %v2309 = vpop.f32.mrb[0].mxu0
        %v2310 = vadd.f32 0.0, %v2309
        %v2311 = vpop.f32.mrb[0].mxu0
        %v2312 = vpop.f32.mrb[0].mxu0
        %v2313 = vadd.f32 0.0, %v2312
        %v2314 = vpop.f32.mrb[0].mxu0
        %2315 = vdwg.mxu0
        %vm2316 = vcmask 130048
        %v2317 = vsel %vm2316, %v2169, -inf
        %2318 = vmax.xlane.f32.xlu0 %v2317
        %v2319 = vpop.xlane.xlu0 %2318
        %v2320 = vsel %vm2316, %v2172, -inf
        %2321 = vmax.xlane.f32.xlu0 %v2320
        %v2322 = vpop.xlane.xlu0 %2321
        %v2323 = vsel %vm2316, %v2216, -inf
        %2324 = vmax.xlane.f32.xlu0 %v2323
        %v2325 = vpop.xlane.xlu0 %2324
        %v2326 = vsel %vm2316, %v2219, -inf
        %2327 = vmax.xlane.f32.xlu0 %v2326
        %v2328 = vpop.xlane.xlu0 %2327
        %v2329 = vsel %vm2316, %v2263, -inf
        %2330 = vmax.xlane.f32.xlu0 %v2329
        %v2331 = vpop.xlane.xlu0 %2330
        %v2332 = vsel %vm2316, %v2266, -inf
        %2333 = vmax.xlane.f32.xlu0 %v2332
        %v2334 = vpop.xlane.xlu0 %2333
        %v2335 = vsel %vm2316, %v2310, -inf
        %2336 = vmax.xlane.f32.xlu0 %v2335
        %v2337 = vpop.xlane.xlu0 %2336
        %v2338 = vsel %vm2316, %v2313, -inf
        %2339 = vmax.xlane.f32.xlu0 %v2338
        %v2340 = vpop.xlane.xlu0 %2339
        %v2341 = vsub.f32 %v2169, %v2319
        %v2342 = vsub.f32 %v2172, %v2322
        %v2343 = vsub.f32 %v2216, %v2325
        %v2344 = vsub.f32 %v2219, %v2328
        %v2345 = vsub.f32 %v2263, %v2331
        %v2346 = vsub.f32 %v2266, %v2334
        %v2347 = vsub.f32 %v2310, %v2337
        %v2348 = vsub.f32 %v2313, %v2340
        %v2349 = vmul.f32 %v2341, 1.442695
        %v2350 = vpow.pop %v2349
        %v2351 = vmul.f32 %v2342, 1.442695
        %v2352 = vpow.pop %v2351
        %v2353 = vmul.f32 %v2343, 1.442695
        %v2354 = vpow.pop %v2353
        %v2355 = vmul.f32 %v2344, 1.442695
        %v2356 = vpow.pop %v2355
        %v2357 = vmul.f32 %v2345, 1.442695
        %v2358 = vpow.pop %v2357
        %v2359 = vmul.f32 %v2346, 1.442695
        %v2360 = vpow.pop %v2359
        %v2361 = vmul.f32 %v2347, 1.442695
        %v2362 = vpow.pop %v2361
        %v2363 = vmul.f32 %v2348, 1.442695
        %v2364 = vpow.pop %v2363
        %v2365 = vpack.c.bf16 %v2352, %v2350
        %v2366 = vpack.c.bf16 %v2356, %v2354
        %v2367 = vpack.c.bf16 %v2360, %v2358
        %v2368 = vpack.c.bf16 %v2364, %v2362
        %v2369 = vpack.c.bf16 %v2115, %v2047
        %v2370 = vpack.c.bf16 %v2116, %v2048
        %v2371 = vpack.c.bf16 %v2117, %v2049
        %v2372 = vpack.c.bf16 %v2118, %v2050
        %v2374 = vsel %vm2316, %v2365, 0
        %2376 = vmatprep.subr.bf16.mxu0 0
        %2377 = vmatpush1.bf16.msra.mxu0 %v2369
        %2378 = vmatprep.subr.bf16.mxu0 0
        %2379 = vmatpush1.bf16.msra.mxu0 0
        %2380 = vmatprep.subr.bf16.mxu0 0
        %2381 = vmatpush1.bf16.msra.mxu0 0
        %2382 = vmatprep.subr.bf16.mxu0 0
        %2383 = vmatpush1.bf16.msra.mxu0 0
        %2384 = vmatprep.subr.bf16.mxu0 0
        %2385 = vmatpush1.bf16.msra.mxu0 0
        %2386 = vmatprep.subr.bf16.mxu0 0
        %2387 = vmatpush1.bf16.msra.mxu0 0
        %2388 = vmatprep.subr.bf16.mxu0 0
        %2389 = vmatpush1.bf16.msra.mxu0 0
        %2390 = vmatprep.subr.bf16.mxu0 0
        %2391 = vmatpush1.bf16.msra.mxu0 0
        %2392 = vmatprep.subr.bf16.mxu0 0
        %2393 = vmatpush1.bf16.msra.mxu0 0
        %2394 = vmatprep.subr.bf16.mxu0 0
        %2395 = vmatpush1.bf16.msra.mxu0 0
        %2396 = vmatprep.subr.bf16.mxu0 0
        %2397 = vmatpush1.bf16.msra.mxu0 0
        %2398 = vmatprep.subr.bf16.mxu0 0
        %2399 = vmatpush1.bf16.msra.mxu0 0
        %2400 = vmatprep.subr.bf16.mxu0 0
        %2401 = vmatpush1.bf16.msra.mxu0 0
        %2402 = vmatprep.subr.bf16.mxu0 0
        %2403 = vmatpush1.bf16.msra.mxu0 0
        %2404 = vmatprep.subr.bf16.mxu0 0
        %2405 = vmatpush1.bf16.msra.mxu0 0
        %2406 = vmatprep.subr.bf16.mxu0 0
        %2407 = vmatpush1.bf16.msra.mxu0 0
        %2408 = vmatprep.mubr.bf16.mxu0 0
        %2409 = vmatmul.mubr.bf16.gmra.mrb[0].mxu0 %v2374
        %v2410 = vpop.f32.mrb[0].mxu0
        %v2411 = vadd.f32 0.0, %v2410
        %v2412 = vpop.f32.mrb[0].mxu0
        %v2413 = vpop.f32.mrb[0].mxu0
        %v2414 = vadd.f32 0.0, %v2413
        %v2415 = vpop.f32.mrb[0].mxu0
        %2416 = vdwg.mxu0
        %v2418 = vsel %vm2316, %v2366, 0
        %2420 = vmatprep.subr.bf16.mxu0 0
        %2421 = vmatpush1.bf16.msra.mxu0 %v2370
        %2422 = vmatprep.subr.bf16.mxu0 0
        %2423 = vmatpush1.bf16.msra.mxu0 0
        %2424 = vmatprep.subr.bf16.mxu0 0
        %2425 = vmatpush1.bf16.msra.mxu0 0
        %2426 = vmatprep.subr.bf16.mxu0 0
        %2427 = vmatpush1.bf16.msra.mxu0 0
        %2428 = vmatprep.subr.bf16.mxu0 0
        %2429 = vmatpush1.bf16.msra.mxu0 0
        %2430 = vmatprep.subr.bf16.mxu0 0
        %2431 = vmatpush1.bf16.msra.mxu0 0
        %2432 = vmatprep.subr.bf16.mxu0 0
        %2433 = vmatpush1.bf16.msra.mxu0 0
        %2434 = vmatprep.subr.bf16.mxu0 0
        %2435 = vmatpush1.bf16.msra.mxu0 0
        %2436 = vmatprep.subr.bf16.mxu0 0
        %2437 = vmatpush1.bf16.msra.mxu0 0
        %2438 = vmatprep.subr.bf16.mxu0 0
        %2439 = vmatpush1.bf16.msra.mxu0 0
        %2440 = vmatprep.subr.bf16.mxu0 0
        %2441 = vmatpush1.bf16.msra.mxu0 0
        %2442 = vmatprep.subr.bf16.mxu0 0
        %2443 = vmatpush1.bf16.msra.mxu0 0
        %2444 = vmatprep.subr.bf16.mxu0 0
        %2445 = vmatpush1.bf16.msra.mxu0 0
        %2446 = vmatprep.subr.bf16.mxu0 0
        %2447 = vmatpush1.bf16.msra.mxu0 0
        %2448 = vmatprep.subr.bf16.mxu0 0
        %2449 = vmatpush1.bf16.msra.mxu0 0
        %2450 = vmatprep.subr.bf16.mxu0 0
        %2451 = vmatpush1.bf16.msra.mxu0 0
        %2452 = vmatprep.mubr.bf16.mxu0 0
        %2453 = vmatmul.mubr.bf16.gmra.mrb[0].mxu0 %v2418
        %v2454 = vpop.f32.mrb[0].mxu0
        %v2455 = vadd.f32 0.0, %v2454
        %v2456 = vpop.f32.mrb[0].mxu0
        %v2457 = vpop.f32.mrb[0].mxu0
        %v2458 = vadd.f32 0.0, %v2457
        %v2459 = vpop.f32.mrb[0].mxu0
        %2460 = vdwg.mxu0
        %v2462 = vsel %vm2316, %v2367, 0
        %2464 = vmatprep.subr.bf16.mxu0 0
        %2465 = vmatpush1.bf16.msra.mxu0 %v2371
        %2466 = vmatprep.subr.bf16.mxu0 0
        %2467 = vmatpush1.bf16.msra.mxu0 0
        %2468 = vmatprep.subr.bf16.mxu0 0
        %2469 = vmatpush1.bf16.msra.mxu0 0
        %2470 = vmatprep.subr.bf16.mxu0 0
        %2471 = vmatpush1.bf16.msra.mxu0 0
        %2472 = vmatprep.subr.bf16.mxu0 0
        %2473 = vmatpush1.bf16.msra.mxu0 0
        %2474 = vmatprep.subr.bf16.mxu0 0
        %2475 = vmatpush1.bf16.msra.mxu0 0
        %2476 = vmatprep.subr.bf16.mxu0 0
        %2477 = vmatpush1.bf16.msra.mxu0 0
        %2478 = vmatprep.subr.bf16.mxu0 0
        %2479 = vmatpush1.bf16.msra.mxu0 0
        %2480 = vmatprep.subr.bf16.mxu0 0
        %2481 = vmatpush1.bf16.msra.mxu0 0
        %2482 = vmatprep.subr.bf16.mxu0 0
        %2483 = vmatpush1.bf16.msra.mxu0 0
        %2484 = vmatprep.subr.bf16.mxu0 0
        %2485 = vmatpush1.bf16.msra.mxu0 0
        %2486 = vmatprep.subr.bf16.mxu0 0
        %2487 = vmatpush1.bf16.msra.mxu0 0
        %2488 = vmatprep.subr.bf16.mxu0 0
        %2489 = vmatpush1.bf16.msra.mxu0 0
        %2490 = vmatprep.subr.bf16.mxu0 0
        %2491 = vmatpush1.bf16.msra.mxu0 0
        %2492 = vmatprep.subr.bf16.mxu0 0
        %2493 = vmatpush1.bf16.msra.mxu0 0
        %2494 = vmatprep.subr.bf16.mxu0 0
        %2495 = vmatpush1.bf16.msra.mxu0 0
        %2496 = vmatprep.mubr.bf16.mxu0 0
        %2497 = vmatmul.mubr.bf16.gmra.mrb[0].mxu0 %v2462
        %v2498 = vpop.f32.mrb[0].mxu0
        %v2499 = vadd.f32 0.0, %v2498
        %v2500 = vpop.f32.mrb[0].mxu0
        %v2501 = vpop.f32.mrb[0].mxu0
        %v2502 = vadd.f32 0.0, %v2501
        %v2503 = vpop.f32.mrb[0].mxu0
        %2504 = vdwg.mxu0
        %v2506 = vsel %vm2316, %v2368, 0
        %2508 = vmatprep.subr.bf16.mxu0 0
        %2509 = vmatpush1.bf16.msra.mxu0 %v2372
        %2510 = vmatprep.subr.bf16.mxu0 0
        %2511 = vmatpush1.bf16.msra.mxu0 0
        %2512 = vmatprep.subr.bf16.mxu0 0
        %2513 = vmatpush1.bf16.msra.mxu0 0
        %2514 = vmatprep.subr.bf16.mxu0 0
        %2515 = vmatpush1.bf16.msra.mxu0 0
        %2516 = vmatprep.subr.bf16.mxu0 0
        %2517 = vmatpush1.bf16.msra.mxu0 0
        %2518 = vmatprep.subr.bf16.mxu0 0
        %2519 = vmatpush1.bf16.msra.mxu0 0
        %2520 = vmatprep.subr.bf16.mxu0 0
        %2521 = vmatpush1.bf16.msra.mxu0 0
        %2522 = vmatprep.subr.bf16.mxu0 0
        %2523 = vmatpush1.bf16.msra.mxu0 0
        %2524 = vmatprep.subr.bf16.mxu0 0
        %2525 = vmatpush1.bf16.msra.mxu0 0
        %2526 = vmatprep.subr.bf16.mxu0 0
        %2527 = vmatpush1.bf16.msra.mxu0 0
        %2528 = vmatprep.subr.bf16.mxu0 0
        %2529 = vmatpush1.bf16.msra.mxu0 0
        %2530 = vmatprep.subr.bf16.mxu0 0
        %2531 = vmatpush1.bf16.msra.mxu0 0
        %2532 = vmatprep.subr.bf16.mxu0 0
        %2533 = vmatpush1.bf16.msra.mxu0 0
        %2534 = vmatprep.subr.bf16.mxu0 0
        %2535 = vmatpush1.bf16.msra.mxu0 0
        %2536 = vmatprep.subr.bf16.mxu0 0
        %2537 = vmatpush1.bf16.msra.mxu0 0
        %2538 = vmatprep.subr.bf16.mxu0 0
        %2539 = vmatpush1.bf16.msra.mxu0 0
        %2540 = vmatprep.mubr.bf16.mxu0 0
        %2541 = vmatmul.mubr.bf16.gmra.mrb[0].mxu0 %v2506
        %v2542 = vpop.f32.mrb[0].mxu0
        %v2543 = vadd.f32 0.0, %v2542
        %v2544 = vpop.f32.mrb[0].mxu0
        %v2545 = vpop.f32.mrb[0].mxu0
        %v2546 = vadd.f32 0.0, %v2545
        %v2547 = vpop.f32.mrb[0].mxu0
        %2548 = vdwg.mxu0
        %v2549 = vsel %vm2316, %v2350, 0.0
        %2550 = vadd.xlane.f32.xlu0 %v2549
        %v2551 = vpop.xlane.xlu0 %2550
        %v2552 = vsel %vm2316, %v2352, 0.0
        %2553 = vadd.xlane.f32.xlu0 %v2552
        %v2554 = vpop.xlane.xlu0 %2553
        %v2555 = vsel %vm2316, %v2354, 0.0
        %2556 = vadd.xlane.f32.xlu0 %v2555
        %v2557 = vpop.xlane.xlu0 %2556
        %v2558 = vsel %vm2316, %v2356, 0.0
        %2559 = vadd.xlane.f32.xlu0 %v2558
        %v2560 = vpop.xlane.xlu0 %2559
        %v2561 = vsel %vm2316, %v2358, 0.0
        %2562 = vadd.xlane.f32.xlu0 %v2561
        %v2563 = vpop.xlane.xlu0 %2562
        %v2564 = vsel %vm2316, %v2360, 0.0
        %2565 = vadd.xlane.f32.xlu0 %v2564
        %v2566 = vpop.xlane.xlu0 %2565
        %v2567 = vsel %vm2316, %v2362, 0.0
        %2568 = vadd.xlane.f32.xlu0 %v2567
        %v2569 = vpop.xlane.xlu0 %2568
        %v2570 = vsel %vm2316, %v2364, 0.0
        %2571 = vadd.xlane.f32.xlu0 %v2570
        %v2572 = vpop.xlane.xlu0 %2571
        %v2573 = vrcp.pop %v2551
        %v2574 = vrcp.pop %v2554
        %v2575 = vrcp.pop %v2557
        %v2576 = vrcp.pop %v2560
        %v2577 = vrcp.pop %v2563
        %v2578 = vrcp.pop %v2566
        %v2579 = vrcp.pop %v2569
        %v2580 = vrcp.pop %v2572
        %v2581 = vmul.f32 %v2411, %v2573
        %v2582 = vmul.f32 %v2414, %v2574
        %v2583 = vmul.f32 %v2455, %v2575
        %v2584 = vmul.f32 %v2458, %v2576
        %v2585 = vmul.f32 %v2499, %v2577
        %v2586 = vmul.f32 %v2502, %v2578
        %v2587 = vmul.f32 %v2543, %v2579
        %v2588 = vmul.f32 %v2546, %v2580
        %v2589 = vcombine.low %v2581, %v2585
        %v2590 = vcombine.high %v2581, %v2585
        %v2592 = vunpack.c.l.s4 1983009808
        %v2593 = vunpack.c.0.s8 %v2592
        %v2594 = vlaneseq
        %v2595 = vshrl.u32 %v2594, 7
        %v2596 = vsub.s32 %v2593, %v2595
        %v2597 = vrot.slane %v2589, %v2596
        %v2599 = vunpack.c.l.s4 1983009808
        %v2600 = vunpack.c.0.s8 %v2599
        %v2601 = vlaneseq
        %v2602 = vshrl.u32 %v2601, 7
        %v2603 = vsub.s32 %v2600, %v2602
        %v2604 = vrot.slane %v2590, %v2603
        %v2605 = vcombine.low %v2583, %v2587
        %v2606 = vcombine.high %v2583, %v2587
        %v2608 = vunpack.c.l.s4 1983009808
        %v2609 = vunpack.c.0.s8 %v2608
        %v2610 = vlaneseq
        %v2611 = vshrl.u32 %v2610, 7
        %v2612 = vsub.s32 %v2609, %v2611
        %v2613 = vrot.slane %v2605, %v2612
        %v2615 = vunpack.c.l.s4 1983009808
        %v2616 = vunpack.c.0.s8 %v2615
        %v2617 = vlaneseq
        %v2618 = vshrl.u32 %v2617, 7
        %v2619 = vsub.s32 %v2616, %v2618
        %v2620 = vrot.slane %v2606, %v2619
        %v2621 = vcombine.low %v2597, %v2613
        %v2622 = vcombine.high %v2597, %v2613
        %v2624 = vunpack.c.l.s4 1934713408
        %v2625 = vunpack.c.0.s8 %v2624
        %v2626 = vlaneseq
        %v2627 = vshrl.u32 %v2626, 7
        %v2628 = vsub.s32 %v2625, %v2627
        %v2629 = vrot.slane %v2621, %v2628
        %v2631 = vunpack.c.l.s4 1934713408
        %v2632 = vunpack.c.0.s8 %v2631
        %v2633 = vlaneseq
        %v2634 = vshrl.u32 %v2633, 7
        %v2635 = vsub.s32 %v2632, %v2634
        %v2636 = vrot.slane %v2622, %v2635
        %v2637 = vcombine.low %v2604, %v2620
        %v2638 = vcombine.high %v2604, %v2620
        %v2640 = vunpack.c.l.s4 1934713408
        %v2641 = vunpack.c.0.s8 %v2640
        %v2642 = vlaneseq
        %v2643 = vshrl.u32 %v2642, 7
        %v2644 = vsub.s32 %v2641, %v2643
        %v2645 = vrot.slane %v2637, %v2644
        %v2647 = vunpack.c.l.s4 1934713408
        %v2648 = vunpack.c.0.s8 %v2647
        %v2649 = vlaneseq
        %v2650 = vshrl.u32 %v2649, 7
        %v2651 = vsub.s32 %v2648, %v2650
        %v2652 = vrot.slane %v2638, %v2651
        %v2653 = vcombine.high %v2629, 0.0
        %v2654 = vcombine.high %v2636, 0.0
        %v2655 = vcombine.high %v2645, 0.0
        %v2656 = vcombine.high %v2652, 0.0
        %v2657 = vcombine.low %v2582, %v2586
        %v2658 = vcombine.high %v2582, %v2586
        %v2660 = vunpack.c.l.s4 1983009808
        %v2661 = vunpack.c.0.s8 %v2660
        %v2662 = vlaneseq
        %v2663 = vshrl.u32 %v2662, 7
        %v2664 = vsub.s32 %v2661, %v2663
        %v2665 = vrot.slane %v2657, %v2664
        %v2667 = vunpack.c.l.s4 1983009808
        %v2668 = vunpack.c.0.s8 %v2667
        %v2669 = vlaneseq
        %v2670 = vshrl.u32 %v2669, 7
        %v2671 = vsub.s32 %v2668, %v2670
        %v2672 = vrot.slane %v2658, %v2671
        %v2673 = vcombine.low %v2584, %v2588
        %v2674 = vcombine.high %v2584, %v2588
        %v2676 = vunpack.c.l.s4 1983009808
        %v2677 = vunpack.c.0.s8 %v2676
        %v2678 = vlaneseq
        %v2679 = vshrl.u32 %v2678, 7
        %v2680 = vsub.s32 %v2677, %v2679
        %v2681 = vrot.slane %v2673, %v2680
        %v2683 = vunpack.c.l.s4 1983009808
        %v2684 = vunpack.c.0.s8 %v2683
        %v2685 = vlaneseq
        %v2686 = vshrl.u32 %v2685, 7
        %v2687 = vsub.s32 %v2684, %v2686
        %v2688 = vrot.slane %v2674, %v2687
        %v2689 = vcombine.low %v2665, %v2681
        %v2690 = vcombine.high %v2665, %v2681
        %v2692 = vunpack.c.l.s4 1934713408
        %v2693 = vunpack.c.0.s8 %v2692
        %v2694 = vlaneseq
        %v2695 = vshrl.u32 %v2694, 7
        %v2696 = vsub.s32 %v2693, %v2695
        %v2697 = vrot.slane %v2689, %v2696
        %v2699 = vunpack.c.l.s4 1934713408
        %v2700 = vunpack.c.0.s8 %v2699
        %v2701 = vlaneseq
        %v2702 = vshrl.u32 %v2701, 7
        %v2703 = vsub.s32 %v2700, %v2702
        %v2704 = vrot.slane %v2690, %v2703
        %v2705 = vcombine.low %v2672, %v2688
        %v2706 = vcombine.high %v2672, %v2688
        %v2708 = vunpack.c.l.s4 1934713408
        %v2709 = vunpack.c.0.s8 %v2708
        %v2710 = vlaneseq
        %v2711 = vshrl.u32 %v2710, 7
        %v2712 = vsub.s32 %v2709, %v2711
        %v2713 = vrot.slane %v2705, %v2712
        %v2715 = vunpack.c.l.s4 1934713408
        %v2716 = vunpack.c.0.s8 %v2715
        %v2717 = vlaneseq
        %v2718 = vshrl.u32 %v2717, 7
        %v2719 = vsub.s32 %v2716, %v2718
        %v2720 = vrot.slane %v2706, %v2719
        %v2721 = vcombine.high %v2697, 0.0
        %v2722 = vcombine.high %v2704, 0.0
        %v2723 = vcombine.high %v2713, 0.0
        %v2724 = vcombine.high %v2720, 0.0
        %v2725 = vcombine.low %v2629, %v2636
        %v2727 = vunpack.c.l.s4 1983009808
        %v2728 = vunpack.c.0.s8 %v2727
        %v2729 = vlaneseq
        %v2730 = vshrl.u32 %v2729, 7
        %v2731 = vsub.s32 %v2728, %v2730
        %v2732 = vrot.slane %v2725, %v2731
        %v2733 = vcombine.low %v2653, %v2654
        %v2735 = vunpack.c.l.s4 1983009808
        %v2736 = vunpack.c.0.s8 %v2735
        %v2737 = vlaneseq
        %v2738 = vshrl.u32 %v2737, 7
        %v2739 = vsub.s32 %v2736, %v2738
        %v2740 = vrot.slane %v2733, %v2739
        %v2741 = vcombine.low %v2645, %v2652
        %v2743 = vunpack.c.l.s4 1983009808
        %v2744 = vunpack.c.0.s8 %v2743
        %v2745 = vlaneseq
        %v2746 = vshrl.u32 %v2745, 7
        %v2747 = vsub.s32 %v2744, %v2746
        %v2748 = vrot.slane %v2741, %v2747
        %v2749 = vcombine.low %v2655, %v2656
        %v2751 = vunpack.c.l.s4 1983009808
        %v2752 = vunpack.c.0.s8 %v2751
        %v2753 = vlaneseq
        %v2754 = vshrl.u32 %v2753, 7
        %v2755 = vsub.s32 %v2752, %v2754
        %v2756 = vrot.slane %v2749, %v2755
        %v2757 = vcombine.low %v2732, %v2740
        %v2758 = vcombine.high %v2732, %v2740
        %v2760 = vunpack.c.l.s4 1934713408
        %v2761 = vunpack.c.0.s8 %v2760
        %v2762 = vlaneseq
        %v2763 = vshrl.u32 %v2762, 7
        %v2764 = vsub.s32 %v2761, %v2763
        %v2765 = vrot.slane %v2757, %v2764
        %v2767 = vunpack.c.l.s4 1934713408
        %v2768 = vunpack.c.0.s8 %v2767
        %v2769 = vlaneseq
        %v2770 = vshrl.u32 %v2769, 7
        %v2771 = vsub.s32 %v2768, %v2770
        %v2772 = vrot.slane %v2758, %v2771
        %v2773 = vcombine.low %v2748, %v2756
        %v2774 = vcombine.high %v2748, %v2756
        %v2776 = vunpack.c.l.s4 1934713408
        %v2777 = vunpack.c.0.s8 %v2776
        %v2778 = vlaneseq
        %v2779 = vshrl.u32 %v2778, 7
        %v2780 = vsub.s32 %v2777, %v2779
        %v2781 = vrot.slane %v2773, %v2780
        %v2783 = vunpack.c.l.s4 1934713408
        %v2784 = vunpack.c.0.s8 %v2783
        %v2785 = vlaneseq
        %v2786 = vshrl.u32 %v2785, 7
        %v2787 = vsub.s32 %v2784, %v2786
        %v2788 = vrot.slane %v2774, %v2787
        %v2789 = vcombine.low %v2765, %v2781
        %v2790 = vcombine.high %v2765, %v2781
        %v2791 = vcombine.low %v2772, %v2788
        %v2792 = vcombine.high %v2772, %v2788
        %v2793 = vcombine.low %v2697, %v2704
        %v2795 = vunpack.c.l.s4 1983009808
        %v2796 = vunpack.c.0.s8 %v2795
        %v2797 = vlaneseq
        %v2798 = vshrl.u32 %v2797, 7
        %v2799 = vsub.s32 %v2796, %v2798
        %v2800 = vrot.slane %v2793, %v2799
        %v2801 = vcombine.low %v2721, %v2722
        %v2803 = vunpack.c.l.s4 1983009808
        %v2804 = vunpack.c.0.s8 %v2803
        %v2805 = vlaneseq
        %v2806 = vshrl.u32 %v2805, 7
        %v2807 = vsub.s32 %v2804, %v2806
        %v2808 = vrot.slane %v2801, %v2807
        %v2809 = vcombine.low %v2713, %v2720
        %v2811 = vunpack.c.l.s4 1983009808
        %v2812 = vunpack.c.0.s8 %v2811
        %v2813 = vlaneseq
        %v2814 = vshrl.u32 %v2813, 7
        %v2815 = vsub.s32 %v2812, %v2814
        %v2816 = vrot.slane %v2809, %v2815
        %v2817 = vcombine.low %v2723, %v2724
        %v2819 = vunpack.c.l.s4 1983009808
        %v2820 = vunpack.c.0.s8 %v2819
        %v2821 = vlaneseq
        %v2822 = vshrl.u32 %v2821, 7
        %v2823 = vsub.s32 %v2820, %v2822
        %v2824 = vrot.slane %v2817, %v2823
        %v2825 = vcombine.low %v2800, %v2808
        %v2826 = vcombine.high %v2800, %v2808
        %v2828 = vunpack.c.l.s4 1934713408
        %v2829 = vunpack.c.0.s8 %v2828
        %v2830 = vlaneseq
        %v2831 = vshrl.u32 %v2830, 7
        %v2832 = vsub.s32 %v2829, %v2831
        %v2833 = vrot.slane %v2825, %v2832
        %v2835 = vunpack.c.l.s4 1934713408
        %v2836 = vunpack.c.0.s8 %v2835
        %v2837 = vlaneseq
        %v2838 = vshrl.u32 %v2837, 7
        %v2839 = vsub.s32 %v2836, %v2838
        %v2840 = vrot.slane %v2826, %v2839
        %v2841 = vcombine.low %v2816, %v2824
        %v2842 = vcombine.high %v2816, %v2824
        %v2844 = vunpack.c.l.s4 1934713408
        %v2845 = vunpack.c.0.s8 %v2844
        %v2846 = vlaneseq
        %v2847 = vshrl.u32 %v2846, 7
        %v2848 = vsub.s32 %v2845, %v2847
        %v2849 = vrot.slane %v2841, %v2848
        %v2851 = vunpack.c.l.s4 1934713408
        %v2852 = vunpack.c.0.s8 %v2851
        %v2853 = vlaneseq
        %v2854 = vshrl.u32 %v2853, 7
        %v2855 = vsub.s32 %v2852, %v2854
        %v2856 = vrot.slane %v2842, %v2855
        %v2857 = vcombine.low %v2833, %v2849
        %v2858 = vcombine.high %v2833, %v2849
        %v2859 = vcombine.low %v2840, %v2856
        %v2860 = vcombine.high %v2840, %v2856
        %2863 = vrot.lane.b32.xlu0 %v2790, 8
        %v2864 = vpop.permute.xlu0 %2863
        %2865 = vrot.lane.b32.xlu0 %v2858, 8
        %v2866 = vpop.permute.xlu0 %2865
        %2871 = vrot.lane.b32.xlu0 %v2791, 16
        %v2872 = vpop.permute.xlu0 %2871
        %2873 = vrot.lane.b32.xlu0 %v2859, 16
        %v2874 = vpop.permute.xlu0 %2873
        %2879 = vrot.lane.b32.xlu0 %v2792, 24
        %v2880 = vpop.permute.xlu0 %2879
        %2881 = vrot.lane.b32.xlu0 %v2860, 24
        %v2882 = vpop.permute.xlu0 %2881
        %v2885 = vsel %vm2127, %v2789, %v2864
        %v2886 = vsel %vm2127, %v2857, %v2866
        %v2887 = vsel %vm2316, %v2885, %v2872
        %v2888 = vsel %vm2316, %v2886, %v2874
        %vm2889 = vcmask 195584
        %v2890 = vsel %vm2889, %v2887, %v2880
        %v2891 = vsel %vm2889, %v2888, %v2882
        %v2892 = vld [vmem:[%s935] sm:$0xf]
        %v2893 = vld [vmem:[%s935 + $0x4] sm:$0xf]
        %v2894 = vld [vmem:[%s935 + $0x8] sm:$0xf]
        %v2895 = vld [vmem:[%s935 + $0xc] sm:$0xf]
        %v2896 = vpack.c.bf16 %v2891, %v2890
        %v2897 = vld [vmem:[%s938] sm:$0x1]
        %v2899 = vlaneseq
        %v2900 = vshrl.u32 %v2899, 7
        %v2901 = vsub.s32 0, %v2900
        %v2902 = vrot.slane %v2897, %v2901
        %v2908 = vunpack.c.l.b16 %v2892
        %v2909 = vunpack.c.l.b16 %v2893
        %v2910 = vunpack.c.l.b16 %v2894
        %v2911 = vunpack.c.l.b16 %v2895
        %v2912 = vpack.c.b16 %v2909, %v2908
        %v2913 = vpack.c.b16 %v2911, %v2910
        %v2917 = vsel %vm1070, %v2896, 0
        %2919 = vmatprep.subr.bf16.mxu0 0
        %2920 = vmatpush1.bf16.msra.mxu0 %v2912
        %2921 = vmatprep.subr.bf16.mxu0 0
        %2922 = vmatpush1.bf16.msra.mxu0 %v2913
        %2923 = vmatprep.subr.bf16.mxu0 0
        %2924 = vmatpush1.bf16.msra.mxu0 0
        %2925 = vmatprep.subr.bf16.mxu0 0
        %2926 = vmatpush1.bf16.msra.mxu0 0
        %2927 = vmatprep.subr.bf16.mxu0 0
        %2928 = vmatpush1.bf16.msra.mxu0 0
        %2929 = vmatprep.subr.bf16.mxu0 0
        %2930 = vmatpush1.bf16.msra.mxu0 0
        %2931 = vmatprep.subr.bf16.mxu0 0
        %2932 = vmatpush1.bf16.msra.mxu0 0
        %2933 = vmatprep.subr.bf16.mxu0 0
        %2934 = vmatpush1.bf16.msra.mxu0 0
        %2935 = vmatprep.subr.bf16.mxu0 0
        %2936 = vmatpush1.bf16.msra.mxu0 0
        %2937 = vmatprep.subr.bf16.mxu0 0
        %2938 = vmatpush1.bf16.msra.mxu0 0
        %2939 = vmatprep.subr.bf16.mxu0 0
        %2940 = vmatpush1.bf16.msra.mxu0 0
        %2941 = vmatprep.subr.bf16.mxu0 0
        %2942 = vmatpush1.bf16.msra.mxu0 0
        %2943 = vmatprep.subr.bf16.mxu0 0
        %2944 = vmatpush1.bf16.msra.mxu0 0
        %2945 = vmatprep.subr.bf16.mxu0 0
        %2946 = vmatpush1.bf16.msra.mxu0 0
        %2947 = vmatprep.subr.bf16.mxu0 0
        %2948 = vmatpush1.bf16.msra.mxu0 0
        %2949 = vmatprep.subr.bf16.mxu0 0
        %2950 = vmatpush1.bf16.msra.mxu0 0
        %2951 = vmatprep.mubr.bf16.mxu0 0
        %2952 = vmatmul.mubr.bf16.gmra.mrb[0].mxu0 %v2917
        %v2953 = vpop.f32.mrb[0].mxu0
        %v2954 = vadd.f32 %v2902, %v2953
        %v2955 = vpop.f32.mrb[0].mxu0
        %v2956 = vpop.f32.mrb[0].mxu0
        %v2957 = vadd.f32 %v2902, %v2956
        %v2958 = vpop.f32.mrb[0].mxu0
        %2959 = vdwg.mxu0
        %v2960 = vadd.f32 %v1044, %v2954
        %v2961 = vadd.f32 %v1045, %v2957
        %v2962 = vld [vmem:[%s941] sm:$0x1]
        %v2963 = vld [vmem:[%s944] sm:$0x1]
        %v2964 = vsel %vm1070, %v2960, 0.0
        %2965 = vadd.xlane.f32.xlu0 %v2964
        %v2966 = vpop.xlane.xlu0 %2965
        %v2967 = vsel %vm1070, %v2961, 0.0
        %2968 = vadd.xlane.f32.xlu0 %v2967
        %v2969 = vpop.xlane.xlu0 %2968
        %v2970 = vrcp.pop 32.0
        %v2971 = vmul.f32 %v2966, %v2970
        %v2972 = vmul.f32 %v2969, %v2970
        %v2973 = vsub.f32 %v2960, %v2971
        %v2974 = vsub.f32 %v2961, %v2972
        %v2975 = vmul.f32 %v2973, %v2973
        %v2976 = vmul.f32 %v2974, %v2974
        %v2977 = vsel %vm1070, %v2975, 0.0
        %2978 = vadd.xlane.f32.xlu0 %v2977
        %v2979 = vpop.xlane.xlu0 %2978
        %v2980 = vsel %vm1070, %v2976, 0.0
        %2981 = vadd.xlane.f32.xlu0 %v2980
        %v2982 = vpop.xlane.xlu0 %2981
        %v2983 = vmul.f32 %v2979, %v2970
        %v2984 = vmul.f32 %v2982, %v2970
        %v2985 = vadd.f32 %v2983, 1e-05
        %v2986 = vadd.f32 %v2984, 1e-05
        %v2987 = vrsqrt.pop %v2985
        %v2988 = vrsqrt.pop %v2986
        %v2989 = vmul.f32 %v2973, %v2987
        %v2990 = vmul.f32 %v2974, %v2988
        %v2992 = vlaneseq
        %v2993 = vshrl.u32 %v2992, 7
        %v2994 = vsub.s32 0, %v2993
        %v2995 = vrot.slane %v2962, %v2994
        %v2997 = vmul.f32 %v2989, %v2995
        %v2998 = vmul.f32 %v2990, %v2995
        %v3000 = vlaneseq
        %v3001 = vshrl.u32 %v3000, 7
        %v3002 = vsub.s32 0, %v3001
        %v3003 = vrot.slane %v2963, %v3002
        %v3005 = vadd.f32 %v2997, %v3003
        %v3006 = vadd.f32 %v2998, %v3003
        %v3007 = vld [vmem:[%s949] sm:$0xf]
        %v3008 = vld [vmem:[%s949 + $0x4] sm:$0xf]
        %v3009 = vld [vmem:[%s949 + $0x8] sm:$0xf]
        %v3010 = vld [vmem:[%s949 + $0xc] sm:$0xf]
        %v3011 = vpack.c.bf16 %v3006, %v3005
        %v3012 = vld [vmem:[%s952] sm:$0x1]
        %v3014 = vlaneseq
        %v3015 = vshrl.u32 %v3014, 7
        %v3016 = vsub.s32 0, %v3015
        %v3017 = vrot.slane %v3012, %v3016
        %v3023 = vunpack.c.l.b16 %v3007
        %v3024 = vunpack.c.l.b16 %v3008
        %v3025 = vunpack.c.l.b16 %v3009
        %v3026 = vunpack.c.l.b16 %v3010
        %v3027 = vpack.c.b16 %v3024, %v3023
        %v3028 = vpack.c.b16 %v3026, %v3025
        %v3032 = vsel %vm1070, %v3011, 0
        %3034 = vmatprep.subr.bf16.mxu0 0
        %3035 = vmatpush1.bf16.msra.mxu0 %v3027
        %3036 = vmatprep.subr.bf16.mxu0 0
        %3037 = vmatpush1.bf16.msra.mxu0 %v3028
        %3038 = vmatprep.subr.bf16.mxu0 0
        %3039 = vmatpush1.bf16.msra.mxu0 0
        %3040 = vmatprep.subr.bf16.mxu0 0
        %3041 = vmatpush1.bf16.msra.mxu0 0
        %3042 = vmatprep.subr.bf16.mxu0 0
        %3043 = vmatpush1.bf16.msra.mxu0 0
        %3044 = vmatprep.subr.bf16.mxu0 0
        %3045 = vmatpush1.bf16.msra.mxu0 0
        %3046 = vmatprep.subr.bf16.mxu0 0
        %3047 = vmatpush1.bf16.msra.mxu0 0
        %3048 = vmatprep.subr.bf16.mxu0 0
        %3049 = vmatpush1.bf16.msra.mxu0 0
        %3050 = vmatprep.subr.bf16.mxu0 0
        %3051 = vmatpush1.bf16.msra.mxu0 0
        %3052 = vmatprep.subr.bf16.mxu0 0
        %3053 = vmatpush1.bf16.msra.mxu0 0
        %3054 = vmatprep.subr.bf16.mxu0 0
        %3055 = vmatpush1.bf16.msra.mxu0 0
        %3056 = vmatprep.subr.bf16.mxu0 0
        %3057 = vmatpush1.bf16.msra.mxu0 0
        %3058 = vmatprep.subr.bf16.mxu0 0
        %3059 = vmatpush1.bf16.msra.mxu0 0
        %3060 = vmatprep.subr.bf16.mxu0 0
        %3061 = vmatpush1.bf16.msra.mxu0 0
        %3062 = vmatprep.subr.bf16.mxu0 0
        %3063 = vmatpush1.bf16.msra.mxu0 0
        %3064 = vmatprep.subr.bf16.mxu0 0
        %3065 = vmatpush1.bf16.msra.mxu0 0
        %3066 = vmatprep.mubr.bf16.mxu0 0
        %3067 = vmatmul.mubr.bf16.gmra.mrb[0].mxu0 %v3032
        %v3068 = vpop.f32.mrb[0].mxu0
        %v3069 = vadd.f32 %v3017, %v3068
        %v3070 = vpop.f32.mrb[0].mxu0
        %v3071 = vpop.f32.mrb[0].mxu0
        %v3072 = vadd.f32 %v3017, %v3071
        %v3073 = vpop.f32.mrb[0].mxu0
        %3074 = vdwg.mxu0
        %v3075 = vmax.f32 %v3069, 0.0
        %v3076 = vmax.f32 %v3072, 0.0
        %v3077 = vld [vmem:[%s957] sm:$0xf]
        %v3078 = vld [vmem:[%s957 + $0x4] sm:$0xf]
        %v3079 = vld [vmem:[%s957 + $0x8] sm:$0xf]
        %v3080 = vld [vmem:[%s957 + $0xc] sm:$0xf]
        %v3081 = vld [vmem:[%s957 + $0x10] sm:$0xf]
        %v3082 = vld [vmem:[%s957 + $0x14] sm:$0xf]
        %v3083 = vld [vmem:[%s957 + $0x18] sm:$0xf]
        %v3084 = vld [vmem:[%s957 + $0x1c] sm:$0xf]
        %v3085 = vpack.c.bf16 %v3076, %v3075
        %v3086 = vld [vmem:[%s960] sm:$0x1]
        %v3088 = vlaneseq
        %v3089 = vshrl.u32 %v3088, 7
        %v3090 = vsub.s32 0, %v3089
        %v3091 = vrot.slane %v3086, %v3090
        %v3101 = vunpack.c.l.b16 %v3077
        %v3102 = vunpack.c.l.b16 %v3078
        %v3103 = vunpack.c.l.b16 %v3079
        %v3104 = vunpack.c.l.b16 %v3080
        %v3105 = vunpack.c.l.b16 %v3081
        %v3106 = vunpack.c.l.b16 %v3082
        %v3107 = vunpack.c.l.b16 %v3083
        %v3108 = vunpack.c.l.b16 %v3084
        %v3109 = vpack.c.b16 %v3102, %v3101
        %v3110 = vpack.c.b16 %v3104, %v3103
        %v3111 = vpack.c.b16 %v3106, %v3105
        %v3112 = vpack.c.b16 %v3108, %v3107
        %vm3117 = vcmask 523264
        %v3119 = vsel %vm3117, %v3085, 0
        %3121 = vmatprep.subr.bf16.mxu0 0
        %3122 = vmatpush1.bf16.msra.mxu0 %v3109
        %3123 = vmatprep.subr.bf16.mxu0 0
        %3124 = vmatpush1.bf16.msra.mxu0 %v3110
        %3125 = vmatprep.subr.bf16.mxu0 0
        %3126 = vmatpush1.bf16.msra.mxu0 %v3111
        %3127 = vmatprep.subr.bf16.mxu0 0
        %3128 = vmatpush1.bf16.msra.mxu0 %v3112
        %3129 = vmatprep.subr.bf16.mxu0 0
        %3130 = vmatpush1.bf16.msra.mxu0 0
        %3131 = vmatprep.subr.bf16.mxu0 0
        %3132 = vmatpush1.bf16.msra.mxu0 0
        %3133 = vmatprep.subr.bf16.mxu0 0
        %3134 = vmatpush1.bf16.msra.mxu0 0
        %3135 = vmatprep.subr.bf16.mxu0 0
        %3136 = vmatpush1.bf16.msra.mxu0 0
        %3137 = vmatprep.subr.bf16.mxu0 0
        %3138 = vmatpush1.bf16.msra.mxu0 0
        %3139 = vmatprep.subr.bf16.mxu0 0
        %3140 = vmatpush1.bf16.msra.mxu0 0
        %3141 = vmatprep.subr.bf16.mxu0 0
        %3142 = vmatpush1.bf16.msra.mxu0 0
        %3143 = vmatprep.subr.bf16.mxu0 0
        %3144 = vmatpush1.bf16.msra.mxu0 0
        %3145 = vmatprep.subr.bf16.mxu0 0
        %3146 = vmatpush1.bf16.msra.mxu0 0
        %3147 = vmatprep.subr.bf16.mxu0 0
        %3148 = vmatpush1.bf16.msra.mxu0 0
        %3149 = vmatprep.subr.bf16.mxu0 0
        %3150 = vmatpush1.bf16.msra.mxu0 0
        %3151 = vmatprep.subr.bf16.mxu0 0
        %3152 = vmatpush1.bf16.msra.mxu0 0
        %3153 = vmatprep.mubr.bf16.mxu0 0
        %3154 = vmatmul.mubr.bf16.gmra.mrb[0].mxu0 %v3119
        %v3155 = vpop.f32.mrb[0].mxu0
        %v3156 = vadd.f32 %v3091, %v3155
        %v3157 = vpop.f32.mrb[0].mxu0
        %v3158 = vpop.f32.mrb[0].mxu0
        %v3159 = vadd.f32 %v3091, %v3158
        %v3160 = vpop.f32.mrb[0].mxu0
        %3161 = vdwg.mxu0
        %v3162 = vadd.f32 %v3005, %v3156
        %v3163 = vadd.f32 %v3006, %v3159
        %v3164 = vld [vmem:[%s963] sm:$0x1]
        %v3165 = vld [vmem:[%s966] sm:$0x1]
        %v3166 = vsel %vm1070, %v3162, 0.0
        %3167 = vadd.xlane.f32.xlu0 %v3166
        %v3168 = vpop.xlane.xlu0 %3167
        %v3169 = vsel %vm1070, %v3163, 0.0
        %3170 = vadd.xlane.f32.xlu0 %v3169
        %v3171 = vpop.xlane.xlu0 %3170
        %v3172 = vmul.f32 %v3168, %v2970
        %v3173 = vmul.f32 %v3171, %v2970
        %v3174 = vsub.f32 %v3162, %v3172
        %v3175 = vsub.f32 %v3163, %v3173
        %v3176 = vmul.f32 %v3174, %v3174
        %v3177 = vmul.f32 %v3175, %v3175
        %v3178 = vsel %vm1070, %v3176, 0.0
        %3179 = vadd.xlane.f32.xlu0 %v3178
        %v3180 = vpop.xlane.xlu0 %3179
        %v3181 = vsel %vm1070, %v3177, 0.0
        %3182 = vadd.xlane.f32.xlu0 %v3181
        %v3183 = vpop.xlane.xlu0 %3182
        %v3184 = vmul.f32 %v3180, %v2970
        %v3185 = vmul.f32 %v3183, %v2970
        %v3186 = vadd.f32 %v3184, 1e-05
        %v3187 = vadd.f32 %v3185, 1e-05
        %v3188 = vrsqrt.pop %v3186
        %v3189 = vrsqrt.pop %v3187
        %v3190 = vmul.f32 %v3174, %v3188
        %v3191 = vmul.f32 %v3175, %v3189
        %v3193 = vlaneseq
        %v3194 = vshrl.u32 %v3193, 7
        %v3195 = vsub.s32 0, %v3194
        %v3196 = vrot.slane %v3164, %v3195
        %v3198 = vmul.f32 %v3190, %v3196
        %v3199 = vmul.f32 %v3191, %v3196
        %v3201 = vlaneseq
        %v3202 = vshrl.u32 %v3201, 7
        %v3203 = vsub.s32 0, %v3202
        %v3204 = vrot.slane %v3165, %v3203
        %v3206 = vadd.f32 %v3198, %v3204
        %v3207 = vadd.f32 %v3199, %v3204
        %3208 = vst.msk [vmem:[#allocation2] sm:$0xff] %vm1070, %v3206
        %3209 = vst.msk [vmem:[#allocation2 + $0x8] sm:$0xff] %vm1070, %v3207
        %p3210 = scmp.eq.s32.totalorder %s41, 1
        // Predicated region
        $region113: #{transformer_forward.1} parent=107 // pred_check
          %p3211 = pneg %p3210
        $region114: #{transformer_forward.1} parent=107 // pred_check_branch
          %3213 = sbr.rel (%p3211) target = $region116
        $region115: #{transformer_forward.1} parent=107 // pred_region
          %v3214 = vsel %vm1070, %v3206, 0.0
          %v3215 = vsel %vm1070, %v3207, 0.0
          %v3216 = vadd.f32 %v3214, %v3215
          %v3217 = vrot.slane %v3216, 4
          %v3218 = vadd.f32 %v3216, %v3217
          %v3219 = vrot.slane %v3218, 2
          %v3220 = vadd.f32 %v3218, %v3219
          %v3221 = vrot.slane %v3220, 1
          %v3222 = vadd.f32 %v3220, %v3221
          %v3223 = vrcp.pop 16.0
          %v3224 = vmul.f32 %v3222, %v3223
          %v3225 = vld [vmem:[%s20] sm:$0xf]
          %v3226 = vld [vmem:[%s20 + $0x4] sm:$0xf]
          %v3227 = vld [vmem:[%s20 + $0x8] sm:$0xf]
          %v3228 = vld [vmem:[%s20 + $0xc] sm:$0xf]
          %v3229 = vpack.c.bf16 %v3224, %v3224
          %v3230 = vld [vmem:[%s21] sm:$0x1]
          %v3235 = vunpack.c.l.b16 %v3225
          %v3236 = vunpack.c.l.b16 %v3226
          %v3237 = vunpack.c.l.b16 %v3227
          %v3238 = vunpack.c.l.b16 %v3228
          %v3239 = vpack.c.b16 %v3236, %v3235
          %v3240 = vpack.c.b16 %v3238, %v3237
          %v3244 = vsel %vm1070, %v3229, 0
          %3246 = vmatprep.subr.bf16.mxu0 0
          %3247 = vmatpush1.bf16.msra.mxu0 %v3239
          %3248 = vmatprep.subr.bf16.mxu0 0
          %3249 = vmatpush1.bf16.msra.mxu0 %v3240
          %3250 = vmatprep.subr.bf16.mxu0 0
          %3251 = vmatpush1.bf16.msra.mxu0 0
          %3252 = vmatprep.subr.bf16.mxu0 0
          %3253 = vmatpush1.bf16.msra.mxu0 0
          %3254 = vmatprep.subr.bf16.mxu0 0
          %3255 = vmatpush1.bf16.msra.mxu0 0
          %3256 = vmatprep.subr.bf16.mxu0 0
          %3257 = vmatpush1.bf16.msra.mxu0 0
          %3258 = vmatprep.subr.bf16.mxu0 0
          %3259 = vmatpush1.bf16.msra.mxu0 0
          %3260 = vmatprep.subr.bf16.mxu0 0
          %3261 = vmatpush1.bf16.msra.mxu0 0
          %3262 = vmatprep.subr.bf16.mxu0 0
          %3263 = vmatpush1.bf16.msra.mxu0 0
          %3264 = vmatprep.subr.bf16.mxu0 0
          %3265 = vmatpush1.bf16.msra.mxu0 0
          %3266 = vmatprep.subr.bf16.mxu0 0
          %3267 = vmatpush1.bf16.msra.mxu0 0
          %3268 = vmatprep.subr.bf16.mxu0 0
          %3269 = vmatpush1.bf16.msra.mxu0 0
          %3270 = vmatprep.subr.bf16.mxu0 0
          %3271 = vmatpush1.bf16.msra.mxu0 0
          %3272 = vmatprep.subr.bf16.mxu0 0
          %3273 = vmatpush1.bf16.msra.mxu0 0
          %3274 = vmatprep.subr.bf16.mxu0 0
          %3275 = vmatpush1.bf16.msra.mxu0 0
          %3276 = vmatprep.subr.bf16.mxu0 0
          %3277 = vmatpush1.bf16.msra.mxu0 0
          %3278 = vmatprep.mubr.bf16.mxu0 0
          %3279 = vmatmul.mubr.bf16.gmra.mrb[0].mxu0 %v3244
          %v3280 = vpop.f32.mrb[0].mxu0
          %v3281 = vadd.f32 %v3230, %v3280
          %v3282 = vpop.f32.mrb[0].mxu0
          %v3283 = vpop.f32.mrb[0].mxu0
          %v3284 = vpop.f32.mrb[0].mxu0
          %3285 = vdwg.mxu0
          %3286 = vst [vmem:[%s898] sm:$0x1] %v3281
        $region116: #{transformer_forward.1} parent=107 // pred_fallthru
          _
        %s3287 = sand.u32 %s608, 1
        %s3288 = scalar_lea.sflag [#allocation4], %s3287
        %s3289 = sand.u32 %s608, 1
        %s3290 = scalar_lea.vmem [#allocation3], %s3289
        // Predicated region
        $region117: #{transformer_forward.1} parent=107 // pred_check
          %p3291 = pneg %p618
        $region118: #{transformer_forward.1} parent=107 // pred_check_branch
          %3293 = sbr.rel (%p3291) target = $region120
        $region119: #{transformer_forward.1} parent=107 // pred_region
          %s3295 = ssub.s32 16, 16
          %3296 = vsyncadd %s3288, %s3295
          %s3297 = smul.addr %s40, 16
          %s3298 = scalar_lea.hbm %s22, %s3297
          %s3300 = sshll.u32 %s3290, 4
          %s3301 = int_to_ptr.vmem [resolvable:$true] %s3300
          %3303 = dma.vmem_to_hbm [thread:$0]  %s3301, 16, %s3298, %s3288
        $region120: #{transformer_forward.1} parent=107 // pred_fallthru
          _
      $region108: #{transformer_forward.1} parent=5 // pred_fallthru
        _
      %p3304 = scmp.le.s32.totalorder 2, %s31
      // Predicated region
      $region121: #{transformer_forward.1} parent=5 // pred_check
        %p3305 = pneg %p3304
      $region122: #{transformer_forward.1} parent=5 // pred_check_branch
        %3307 = sbr.rel (%p3305) target = $region124
      $region123: #{transformer_forward.1} parent=5 // pred_region
        %s3308 = ssub.s32 %s31, 2
        // Predicated region
        $region125: #{transformer_forward.1} parent=123 // pred_check
          %p3309 = pneg %p624
        $region126: #{transformer_forward.1} parent=123 // pred_check_branch
          %3311 = sbr.rel (%p3309) target = $region128
        $region127: #{transformer_forward.1} parent=123 // pred_region
          %s3312 = sand.u32 %s609, 1
          %s3313 = scalar_lea.sflag [#allocation4], %s3312
          %s3314 = sand.u32 %s609, 1
          %s3315 = scalar_lea.vmem [#allocation3], %s3314
          %3316 = dma.done %s3313, 16
        $region128: #{transformer_forward.1} parent=123 // pred_fallthru
          _
      $region124: #{transformer_forward.1} parent=5 // pred_fallthru
        _
    $region6: #{transformer_forward.1} parent=1 // loop_footer
      %s35 = sadd.s32 1, %s31
    $region7: #{transformer_forward.1} parent=1 // loop_footer_branch
      %30 = sbr.rel target = $region3
    $region8: #{transformer_forward.1} parent=1 // loop_exit
      _
    %3317 = vsyncpa [#allocation4], 1
    %s3318 = scalar_lea.sflag [#allocation4], 1
    %3319 = vsyncpa %s3318, 1

</llo_original>
